<compile_context>
chip_gen: v7x
topology: tpu7x:2x2x1
jax: 0.10.0
libtpu: 0.0.40
codegen_flags: <defaults>
</compile_context>

<pallas_src>
import jax
import jax.numpy as jnp
from jax.experimental import pallas as pl
from jax.experimental.pallas import tpu as pltpu

N_OUT = 2      # lat/lon
N_PAD = 128    # lane-dense padded output width


def geoloc_kernel(x_ref, we_ref, be_ref, w1_ref, b1_ref, w2_ref, b2_ref,
                  w3_ref, b3_ref, out_ref):
    # x_ref: [TB, in_dim] f32 (cast to bf16 here, on the VPU, instead of in a
    # separate wrapper-side XLA pass); weights bf16; biases f32.
    x = x_ref[...].astype(jnp.bfloat16)
    # synthetic base_model: linear feature extractor -> [TB, F_pad]
    feats = jnp.dot(x, we_ref[...],
                    preferred_element_type=jnp.float32) + be_ref[...]
    # regressor MLP (Dropout == identity at inference); elementwise kept in f32
    h1 = jnp.maximum(
        jnp.dot(feats.astype(jnp.bfloat16), w1_ref[...],
                preferred_element_type=jnp.float32) + b1_ref[...], 0.0)
    h2 = jnp.maximum(
        jnp.dot(h1.astype(jnp.bfloat16), w2_ref[...],
                preferred_element_type=jnp.float32) + b2_ref[...], 0.0)
    out = jnp.dot(h2.astype(jnp.bfloat16), w3_ref[...],
                  preferred_element_type=jnp.float32) + b3_ref[...]
    out_ref[...] = out.astype(out_ref.dtype)


def _round_up(v, m):
    return ((v + m - 1) // m) * m


def geolocation_forward(x_nchw, params):
    """x_nchw: [B, C, H, W] float32. Returns [B, 2] lat/lon regression."""
    B = x_nchw.shape[0]
    we, be, w1, b1, w2, b2, w3, b3 = params
    num_features = we.shape[1]
    h1_dim = w1.shape[1]
    h2_dim = w2.shape[1]

    # ---- glue: flatten only (NO wrapper-side bf16 cast of x) ------------
    x_flat = x_nchw.reshape(B, -1).astype(jnp.float32)        # [B, in_dim]
    in_dim = x_flat.shape[1]

    # pad num_features to a lane-dense multiple of 128; zero-padded columns of
    # we/be and zero-padded rows of w1 are numerically identical.
    F_pad = _round_up(max(num_features, N_PAD), N_PAD)
    we_p = jnp.zeros((in_dim, F_pad), jnp.float32).at[:, :num_features].set(we)
    be_p = jnp.zeros((1, F_pad), jnp.float32).at[:, :num_features].set(be)
    w1_p = jnp.zeros((F_pad, h1_dim), jnp.float32).at[:num_features, :].set(w1)

    # pad the last layer to a lane-dense N=128 output
    w3_p = jnp.zeros((h2_dim, N_PAD), jnp.float32).at[:, :N_OUT].set(w3)
    b3_p = jnp.zeros((1, N_PAD), jnp.float32).at[:, :N_OUT].set(b3)

    we_b = we_p.astype(jnp.bfloat16)
    w1_b = w1_p.astype(jnp.bfloat16)
    w2_b = w2.astype(jnp.bfloat16)
    w3_b = w3_p.astype(jnp.bfloat16)
    be_f = be_p.astype(jnp.float32)
    b1_f = b1.astype(jnp.float32)
    b2_f = b2.astype(jnp.float32)
    b3_f = b3_p.astype(jnp.float32)

    weights = (we_b, be_f, w1_b, b1_f, w2_b, b2_f, w3_b, b3_f)
    weight_bytes = sum(int(a.size) * a.dtype.itemsize for a in weights)

    # ---- chip-aware VMEM budget ------------------------------------------
    try:
        info = pltpu.get_tpu_info()
        vmem_phys = int(getattr(info, "vmem_capacity_bytes", 64 << 20))
    except Exception:  # pragma: no cover - conservative (v7x-sized) fallback
        vmem_phys = 64 << 20
    # ~48 MiB on v7x (64 MiB phys), ~96 MiB on v5e/v6e (128 MiB phys)
    vmem_target = max(min(int(vmem_phys * 0.75), 96 << 20), 24 << 20)

    # per-sample VMEM cost: double-buffered f32 x tile + f32 out tile, f32
    # intermediates (feats/h1/h2/out) and their bf16 casts.
    per_sample = (2 * in_dim * 4 + 2 * N_PAD * 4
                  + (F_pad + h1_dim + h2_dim + N_PAD) * 4
                  + (in_dim + F_pad + h1_dim + h2_dim) * 2)
    budget = max(vmem_target - weight_bytes - (8 << 20), 4 << 20)
    tb_cap = max(16, (budget // per_sample) // 16 * 16)

    # ---- batch tiling ------------------------------------------------------
    if B <= 128:
        TB = min(_round_up(max(B, 8), 16), tb_cap)
    else:
        TB = min(512, tb_cap)
        # keep >= 2 grid steps so both v7x TensorCores get work
        if B <= 2 * TB:
            TB = _round_up(pl.cdiv(B, 2), 16)
        TB = max(TB, 16)

    B_pad = _round_up(B, TB)
    if B_pad != B:
        x_flat = jnp.pad(x_flat, ((0, B_pad - B), (0, 0)))
    num_tiles = B_pad // TB

    # deeper buffering on the streamed x tile only, for big-batch runs where
    # per-step x DMA is comparable to per-step MXU time
    x_buffers = 3 if (num_tiles >= 3 and TB >= 256) else 2

    # ---- specs -------------------------------------------------------------
    def resident(arr):
        nd = arr.ndim
        return pl.BlockSpec(arr.shape, lambda i, nd=nd: (0,) * nd)

    if x_buffers == 3:
        x_spec = pl.BlockSpec((TB, in_dim), lambda i: (i, 0),
                              pipeline_mode=pl.Buffered(3))
    else:
        x_spec = pl.BlockSpec((TB, in_dim), lambda i: (i, 0))

    in_specs = [
        x_spec,                                              # streamed x tile
        resident(we_b), resident(be_f),
        resident(w1_b), resident(b1_f),
        resident(w2_b), resident(b2_f),
        resident(w3_b), resident(b3_f),
    ]
    out_specs = pl.BlockSpec((TB, N_PAD), lambda i: (i, 0))

    # ---- VMEM limit: weights + buffered tiles + intermediates + margin -----
    footprint = (weight_bytes
                 + x_buffers * TB * in_dim * 4                       # f32 x bufs
                 + 2 * TB * N_PAD * 4                                # f32 out bufs
                 + TB * (F_pad + h1_dim + h2_dim + N_PAD) * 4        # f32 inter.
                 + TB * (in_dim + F_pad + h1_dim + h2_dim) * 2       # bf16 casts
                 + (4 << 20))                                        # margin
    vmem_limit = int(min(max(footprint, 16 << 20), vmem_target))

    # advisory cost: counts the padded MXU work actually executed in-kernel
    flops = 2 * B_pad * (in_dim * F_pad + F_pad * h1_dim
                         + h1_dim * h2_dim + h2_dim * N_PAD)
    bytes_accessed = int(x_flat.size) * 4 + weight_bytes + B_pad * N_PAD * 4
    cost = pl.CostEstimate(flops=int(flops), transcendentals=0,
                           bytes_accessed=int(bytes_accessed))

    out_padded = pl.pallas_call(
        geoloc_kernel,
        out_shape=jax.ShapeDtypeStruct((B_pad, N_PAD), jnp.float32),
        grid_spec=pltpu.PrefetchScalarGridSpec(
            num_scalar_prefetch=0,
            grid=(num_tiles,),
            in_specs=in_specs,
            out_specs=out_specs,
        ),
        compiler_params=pltpu.CompilerParams(
            dimension_semantics=("parallel",),
            vmem_limit_bytes=vmem_limit,
        ),
        cost_estimate=cost,
    )(x_flat, *weights)

    return out_padded[:B, :N_OUT]


def init_params(key, in_dim, num_features=32):
    ks = jax.random.split(key, 8)
    scale = 0.02
    we = scale * jax.random.normal(ks[0], (in_dim, num_features), jnp.float32)
    be = scale * jax.random.normal(ks[1], (1, num_features), jnp.float32)
    w1 = scale * jax.random.normal(ks[2], (num_features, 1024), jnp.float32)
    b1 = scale * jax.random.normal(ks[3], (1, 1024), jnp.float32)
    w2 = scale * jax.random.normal(ks[4], (1024, 512), jnp.float32)
    b2 = scale * jax.random.normal(ks[5], (1, 512), jnp.float32)
    w3 = scale * jax.random.normal(ks[6], (512, 2), jnp.float32)
    b3 = scale * jax.random.normal(ks[7], (1, 2), jnp.float32)
    return (we, be, w1, b1, w2, b2, w3, b3)


def reference_forward(x_nchw, params):
    # Same precision policy as the kernel: bf16 matmul inputs, f32 accumulation.
    we, be, w1, b1, w2, b2, w3, b3 = params
    x = x_nchw.reshape(x_nchw.shape[0], -1).astype(jnp.bfloat16)
    feats = jnp.dot(x, we.astype(jnp.bfloat16),
                    preferred_element_type=jnp.float32) + be
    h1 = jnp.maximum(jnp.dot(feats.astype(jnp.bfloat16), w1.astype(jnp.bfloat16),
                             preferred_element_type=jnp.float32) + b1, 0.0)
    h2 = jnp.maximum(jnp.dot(h1.astype(jnp.bfloat16), w2.astype(jnp.bfloat16),
                             preferred_element_type=jnp.float32) + b2, 0.0)
    return jnp.dot(h2.astype(jnp.bfloat16), w3.astype(jnp.bfloat16),
                   preferred_element_type=jnp.float32) + b3


if __name__ == "__main__":
    key = jax.random.PRNGKey(0)
    k_x, k_p = jax.random.split(key)

    B, C, H, W = 2, 4, 16, 16
    x = jax.random.normal(k_x, (B, C, H, W), jnp.float32)
    params = init_params(k_p, in_dim=C * H * W, num_features=32)

    out = geolocation_forward(x, params)
    out = jax.block_until_ready(out)

    ref = reference_forward(x, params)
    assert out.shape == (B, 2)
    assert jnp.allclose(out, ref, atol=1e-2, rtol=1e-2), (
        f"mismatch: max abs err = {jnp.max(jnp.abs(out - ref))}")

    print("KERNEL_OK")
</pallas_src>

<mosaic_0001>
module attributes {stable_mosaic.version = 11 : i64} {
  func.func @geoloc_kernel(%arg0: i32, %arg1: memref<16x1024xf32, #tpu.memory_space<vmem>>, %arg2: memref<1024x128xbf16, #tpu.memory_space<vmem>>, %arg3: memref<1x128xf32, #tpu.memory_space<vmem>>, %arg4: memref<128x1024xbf16, #tpu.memory_space<vmem>>, %arg5: memref<1x1024xf32, #tpu.memory_space<vmem>>, %arg6: memref<1024x512xbf16, #tpu.memory_space<vmem>>, %arg7: memref<1x512xf32, #tpu.memory_space<vmem>>, %arg8: memref<512x128xbf16, #tpu.memory_space<vmem>>, %arg9: memref<1x128xf32, #tpu.memory_space<vmem>>, %arg10: memref<16x128xf32, #tpu.memory_space<vmem>>) attributes {dimension_semantics = [#tpu.dimension_semantics<parallel>], iteration_bounds = array<i64: 1>, scalar_prefetch = 0 : i64, scratch_operands = 0 : i64, tpu.core_type = #tpu.core_type<tc>, window_params = [{transform_indices = @transform_0, window_bounds = array<i64: 16, 1024>}, {pipeline_mode = #tpu.pipeline_mode<synchronous>, transform_indices = @transform_1, window_bounds = array<i64: 1024, 128>}, {pipeline_mode = #tpu.pipeline_mode<synchronous>, transform_indices = @transform_2, window_bounds = array<i64: 1, 128>}, {pipeline_mode = #tpu.pipeline_mode<synchronous>, transform_indices = @transform_3, window_bounds = array<i64: 128, 1024>}, {pipeline_mode = #tpu.pipeline_mode<synchronous>, transform_indices = @transform_4, window_bounds = array<i64: 1, 1024>}, {pipeline_mode = #tpu.pipeline_mode<synchronous>, transform_indices = @transform_5, window_bounds = array<i64: 1024, 512>}, {pipeline_mode = #tpu.pipeline_mode<synchronous>, transform_indices = @transform_6, window_bounds = array<i64: 1, 512>}, {pipeline_mode = #tpu.pipeline_mode<synchronous>, transform_indices = @transform_7, window_bounds = array<i64: 512, 128>}, {pipeline_mode = #tpu.pipeline_mode<synchronous>, transform_indices = @transform_8, window_bounds = array<i64: 1, 128>}, {transform_indices = @transform_9, window_bounds = array<i64: 16, 128>}]} {
    %c0 = arith.constant 0 : index
    %c0_0 = arith.constant 0 : index
    %0 = vector.load %arg1[%c0, %c0_0] : memref<16x1024xf32, #tpu.memory_space<vmem>>, vector<16x1024xf32>
    %1 = arith.truncf %0 : vector<16x1024xf32> to vector<16x1024xbf16>
    %c0_1 = arith.constant 0 : index
    %c0_2 = arith.constant 0 : index
    %2 = vector.load %arg2[%c0_1, %c0_2] : memref<1024x128xbf16, #tpu.memory_space<vmem>>, vector<1024x128xbf16>
    %cst = arith.constant dense<0.000000e+00> : vector<16x128xf32>
    %3 = tpu.matmul %1, %2, %cst {dimension_numbers = #tpu.dot_dimension_numbers<[1], [0], [0], [1], [0, 0, 1, 1], [], []>} : vector<16x1024xbf16>, vector<1024x128xbf16>, vector<16x128xf32> -> vector<16x128xf32>
    %c0_3 = arith.constant 0 : index
    %c0_4 = arith.constant 0 : index
    %4 = vector.load %arg3[%c0_3, %c0_4] : memref<1x128xf32, #tpu.memory_space<vmem>>, vector<1x128xf32>
    %5 = vector.broadcast %4 : vector<1x128xf32> to vector<16x128xf32>
    %6 = arith.addf %3, %5 : vector<16x128xf32>
    %7 = arith.truncf %6 : vector<16x128xf32> to vector<16x128xbf16>
    %c0_5 = arith.constant 0 : index
    %c0_6 = arith.constant 0 : index
    %8 = vector.load %arg4[%c0_5, %c0_6] : memref<128x1024xbf16, #tpu.memory_space<vmem>>, vector<128x1024xbf16>
    %cst_7 = arith.constant dense<0.000000e+00> : vector<16x1024xf32>
    %9 = tpu.matmul %7, %8, %cst_7 {dimension_numbers = #tpu.dot_dimension_numbers<[1], [0], [0], [1], [0, 0, 1, 1], [], []>} : vector<16x128xbf16>, vector<128x1024xbf16>, vector<16x1024xf32> -> vector<16x1024xf32>
    %c0_8 = arith.constant 0 : index
    %c0_9 = arith.constant 0 : index
    %10 = vector.load %arg5[%c0_8, %c0_9] : memref<1x1024xf32, #tpu.memory_space<vmem>>, vector<1x1024xf32>
    %11 = vector.broadcast %10 : vector<1x1024xf32> to vector<16x1024xf32>
    %12 = arith.addf %9, %11 : vector<16x1024xf32>
    %cst_10 = arith.constant 0.000000e+00 : f32
    %13 = vector.broadcast %cst_10 : f32 to vector<16x1024xf32>
    %14 = arith.maximumf %12, %13 : vector<16x1024xf32>
    %15 = arith.truncf %14 : vector<16x1024xf32> to vector<16x1024xbf16>
    %c0_11 = arith.constant 0 : index
    %c0_12 = arith.constant 0 : index
    %16 = vector.load %arg6[%c0_11, %c0_12] : memref<1024x512xbf16, #tpu.memory_space<vmem>>, vector<1024x512xbf16>
    %cst_13 = arith.constant dense<0.000000e+00> : vector<16x512xf32>
    %17 = tpu.matmul %15, %16, %cst_13 {dimension_numbers = #tpu.dot_dimension_numbers<[1], [0], [0], [1], [0, 0, 1, 1], [], []>} : vector<16x1024xbf16>, vector<1024x512xbf16>, vector<16x512xf32> -> vector<16x512xf32>
    %c0_14 = arith.constant 0 : index
    %c0_15 = arith.constant 0 : index
    %18 = vector.load %arg7[%c0_14, %c0_15] : memref<1x512xf32, #tpu.memory_space<vmem>>, vector<1x512xf32>
    %19 = vector.broadcast %18 : vector<1x512xf32> to vector<16x512xf32>
    %20 = arith.addf %17, %19 : vector<16x512xf32>
    %cst_16 = arith.constant 0.000000e+00 : f32
    %21 = vector.broadcast %cst_16 : f32 to vector<16x512xf32>
    %22 = arith.maximumf %20, %21 : vector<16x512xf32>
    %23 = arith.truncf %22 : vector<16x512xf32> to vector<16x512xbf16>
    %c0_17 = arith.constant 0 : index
    %c0_18 = arith.constant 0 : index
    %24 = vector.load %arg8[%c0_17, %c0_18] : memref<512x128xbf16, #tpu.memory_space<vmem>>, vector<512x128xbf16>
    %cst_19 = arith.constant dense<0.000000e+00> : vector<16x128xf32>
    %25 = tpu.matmul %23, %24, %cst_19 {dimension_numbers = #tpu.dot_dimension_numbers<[1], [0], [0], [1], [0, 0, 1, 1], [], []>} : vector<16x512xbf16>, vector<512x128xbf16>, vector<16x128xf32> -> vector<16x128xf32>
    %c0_20 = arith.constant 0 : index
    %c0_21 = arith.constant 0 : index
    %26 = vector.load %arg9[%c0_20, %c0_21] : memref<1x128xf32, #tpu.memory_space<vmem>>, vector<1x128xf32>
    %27 = vector.broadcast %26 : vector<1x128xf32> to vector<16x128xf32>
    %28 = arith.addf %25, %27 : vector<16x128xf32>
    %c0_22 = arith.constant 0 : index
    %c0_23 = arith.constant 0 : index
    %29 = vector.load %arg10[%c0_22, %c0_23] : memref<16x128xf32, #tpu.memory_space<vmem>>, vector<16x128xf32>
    tpu.vector_store %arg10[%c0_22, %c0_23], %28 {strides = array<i32>} : memref<16x128xf32, #tpu.memory_space<vmem>>, vector<16x128xf32>,
    return
  }
  func.func @transform_0(%arg0: i32) -> (i32, i32) {
    %c0_i32 = arith.constant 0 : i32
    %c0_i32_0 = arith.constant 0 : i32
    return %arg0, %c0_i32 : i32, i32
  }
  func.func @transform_1(%arg0: i32) -> (i32, i32) {
    %c0_i32 = arith.constant 0 : i32
    %c0_i32_0 = arith.constant 0 : i32
    %c0_i32_1 = arith.constant 0 : i32
    return %c0_i32, %c0_i32_0 : i32, i32
  }
  func.func @transform_2(%arg0: i32) -> (i32, i32) {
    %c0_i32 = arith.constant 0 : i32
    %c0_i32_0 = arith.constant 0 : i32
    %c0_i32_1 = arith.constant 0 : i32
    return %c0_i32, %c0_i32_0 : i32, i32
  }
  func.func @transform_3(%arg0: i32) -> (i32, i32) {
    %c0_i32 = arith.constant 0 : i32
    %c0_i32_0 = arith.constant 0 : i32
    %c0_i32_1 = arith.constant 0 : i32
    return %c0_i32, %c0_i32_0 : i32, i32
  }
  func.func @transform_4(%arg0: i32) -> (i32, i32) {
    %c0_i32 = arith.constant 0 : i32
    %c0_i32_0 = arith.constant 0 : i32
    %c0_i32_1 = arith.constant 0 : i32
    return %c0_i32, %c0_i32_0 : i32, i32
  }
  func.func @transform_5(%arg0: i32) -> (i32, i32) {
    %c0_i32 = arith.constant 0 : i32
    %c0_i32_0 = arith.constant 0 : i32
    %c0_i32_1 = arith.constant 0 : i32
    return %c0_i32, %c0_i32_0 : i32, i32
  }
  func.func @transform_6(%arg0: i32) -> (i32, i32) {
    %c0_i32 = arith.constant 0 : i32
    %c0_i32_0 = arith.constant 0 : i32
    %c0_i32_1 = arith.constant 0 : i32
    return %c0_i32, %c0_i32_0 : i32, i32
  }
  func.func @transform_7(%arg0: i32) -> (i32, i32) {
    %c0_i32 = arith.constant 0 : i32
    %c0_i32_0 = arith.constant 0 : i32
    %c0_i32_1 = arith.constant 0 : i32
    return %c0_i32, %c0_i32_0 : i32, i32
  }
  func.func @transform_8(%arg0: i32) -> (i32, i32) {
    %c0_i32 = arith.constant 0 : i32
    %c0_i32_0 = arith.constant 0 : i32
    %c0_i32_1 = arith.constant 0 : i32
    return %c0_i32, %c0_i32_0 : i32, i32
  }
  func.func @transform_9(%arg0: i32) -> (i32, i32) {
    %c0_i32 = arith.constant 0 : i32
    %c0_i32_0 = arith.constant 0 : i32
    return %arg0, %c0_i32 : i32, i32
  }
}

</mosaic_0001>

<llo_original>
// kernel: tpu_custom_call.1
$region0: #{tpu_custom_call.1}
  #allocation0 [shape = 'u32[]', space=smem, size = 0x4, offset = 0x4, fixed_abs, tag = 'smem constant byte address 0x4 - core index']
  #allocation1 [shape = 'u32[144,128]{1,0:T(1,128)}', space=vmem, size = 0x12000, scoped, tag = 'internal scratch']
  %s0 = inlined_call_operand.hbm [shape: f32[16,1024], index: 0, kind: input, shape index: {}]
  %s1 = inlined_call_operand.hbm [shape: bf16[1024,128], index: 1, kind: input, shape index: {}]
  %s2 = inlined_call_operand.vmem [shape: f32[1,128], index: 2, kind: input, shape index: {}]
  %s3 = inlined_call_operand.hbm [shape: bf16[128,1024], index: 3, kind: input, shape index: {}]
  %s4 = inlined_call_operand.vmem [shape: f32[1,1024], index: 4, kind: input, shape index: {}]
  %s5 = inlined_call_operand.hbm [shape: bf16[1024,512], index: 5, kind: input, shape index: {}]
  %s6 = inlined_call_operand.vmem [shape: f32[1,512], index: 6, kind: input, shape index: {}]
  %s7 = inlined_call_operand.hbm [shape: bf16[512,128], index: 7, kind: input, shape index: {}]
  %s8 = inlined_call_operand.vmem [shape: f32[1,128], index: 8, kind: input, shape index: {}]
  %s9 = inlined_call_operand.hbm [shape: f32[16,128], index: 9, kind: output, shape index: {}]
  %s10 = sld [smem:[#allocation0]]
  $region66: #{tpu_custom_call.1} parent=0
    _
  %s12 = ssub.s32 1, %s10
  %s13 = scalar_select 0, %s12, %s10
  $region1: #{tpu_custom_call.1} parent=0
    #allocation2 [shape = 'u8[65536]{0}', space=vmem, size = 0x10000, scoped, tag = 'input window, operand 0, single buffered']
    #allocation3 [shape = 's32[1]{0}', space=sflag, size = 0x4, scoped, tag = 'scoped memory for tpu_custom_call.1']
    #allocation4 [shape = 's32[1]{0}', space=sflag, size = 0x4, scoped, tag = 'scoped memory for tpu_custom_call.1']
    #allocation5 [shape = 'u8[262144]{0}', space=vmem, size = 0x40000, scoped, tag = 'input window, operand 1, single buffered']
    #allocation6 [shape = 's32[1]{0}', space=sflag, size = 0x4, scoped, tag = 'scoped memory for tpu_custom_call.1']
    #allocation7 [shape = 'u8[262144]{0}', space=vmem, size = 0x40000, scoped, tag = 'input window, operand 3, single buffered']
    #allocation8 [shape = 'u8[1048576]{0}', space=vmem, size = 0x100000, scoped, tag = 'input window, operand 5, single buffered']
    #allocation9 [shape = 's32[1]{0}', space=sflag, size = 0x4, scoped, tag = 'scoped memory for tpu_custom_call.1']
    #allocation10 [shape = 'u8[131072]{0}', space=vmem, size = 0x20000, scoped, tag = 'input window, operand 7, single buffered']
    #allocation11 [shape = 'u8[8192]{0}', space=vmem, size = 0x2000, scoped, tag = 'output window, operand 0, single buffered']
    %14 = vsyncpa [#allocation3], 0
    %15 = vsyncpa [#allocation6], 0
    %16 = vsyncpa [#allocation9], 0
    %17 = vsyncpa [#allocation4], 0
    // Predicated region
    $region2: #{tpu_custom_call.1} parent=1 // pred_check
      _
    $region3: #{tpu_custom_call.1} parent=1 // pred_check_branch
      %19 = sbr.rel (0) target = $region5
    $region4: #{tpu_custom_call.1} parent=1 // pred_region
      %s21 = ssub.s32 2048, 2048
      %22 = vsyncadd [#allocation3], %s21
      %s23 = sshll.u32 [#allocation2], 4
      %s24 = int_to_ptr.vmem [resolvable:$true] %s23
      %29 = dma.hbm_to_vmem [thread:$0]  %s0, 2048, %s24, [#allocation3], 1024, 1024, 64
    $region5: #{tpu_custom_call.1} parent=1 // pred_fallthru
      _
    // Predicated region
    $region6: #{tpu_custom_call.1} parent=1 // pred_check
      _
    $region7: #{tpu_custom_call.1} parent=1 // pred_check_branch
      %31 = sbr.rel (0) target = $region9
    $region8: #{tpu_custom_call.1} parent=1 // pred_region
      %s33 = ssub.s32 8192, 8192
      %34 = vsyncadd [#allocation6], %s33
      %s35 = sshll.u32 [#allocation5], 4
      %s36 = int_to_ptr.vmem [resolvable:$true] %s35
      %41 = dma.hbm_to_vmem [thread:$0]  %s1, 8192, %s36, [#allocation6], 64, 64, 4
    $region9: #{tpu_custom_call.1} parent=1 // pred_fallthru
      _
    // Predicated region
    $region10: #{tpu_custom_call.1} parent=1 // pred_check
      _
    $region11: #{tpu_custom_call.1} parent=1 // pred_check_branch
      %43 = sbr.rel (0) target = $region13
    $region12: #{tpu_custom_call.1} parent=1 // pred_region
      _
    $region13: #{tpu_custom_call.1} parent=1 // pred_fallthru
      _
    // Predicated region
    $region14: #{tpu_custom_call.1} parent=1 // pred_check
      _
    $region15: #{tpu_custom_call.1} parent=1 // pred_check_branch
      %45 = sbr.rel (0) target = $region17
    $region16: #{tpu_custom_call.1} parent=1 // pred_region
      %s47 = ssub.s32 8192, 8192
      %48 = vsyncadd [#allocation6], %s47
      %s49 = sshll.u32 [#allocation7], 4
      %s50 = int_to_ptr.vmem [resolvable:$true] %s49
      %55 = dma.hbm_to_vmem [thread:$0]  %s3, 8192, %s50, [#allocation6], 512, 512, 32
    $region17: #{tpu_custom_call.1} parent=1 // pred_fallthru
      _
    // Predicated region
    $region18: #{tpu_custom_call.1} parent=1 // pred_check
      _
    $region19: #{tpu_custom_call.1} parent=1 // pred_check_branch
      %57 = sbr.rel (0) target = $region21
    $region20: #{tpu_custom_call.1} parent=1 // pred_region
      _
    $region21: #{tpu_custom_call.1} parent=1 // pred_fallthru
      _
    // Predicated region
    $region22: #{tpu_custom_call.1} parent=1 // pred_check
      _
    $region23: #{tpu_custom_call.1} parent=1 // pred_check_branch
      %59 = sbr.rel (0) target = $region25
    $region24: #{tpu_custom_call.1} parent=1 // pred_region
      %s61 = ssub.s32 32768, 32768
      %62 = vsyncadd [#allocation9], %s61
      %s63 = sshll.u32 [#allocation8], 4
      %s64 = int_to_ptr.vmem [resolvable:$true] %s63
      %69 = dma.hbm_to_vmem [thread:$0]  %s5, 32768, %s64, [#allocation9], 256, 256, 16
    $region25: #{tpu_custom_call.1} parent=1 // pred_fallthru
      _
    // Predicated region
    $region26: #{tpu_custom_call.1} parent=1 // pred_check
      _
    $region27: #{tpu_custom_call.1} parent=1 // pred_check_branch
      %71 = sbr.rel (0) target = $region29
    $region28: #{tpu_custom_call.1} parent=1 // pred_region
      _
    $region29: #{tpu_custom_call.1} parent=1 // pred_fallthru
      _
    // Predicated region
    $region30: #{tpu_custom_call.1} parent=1 // pred_check
      _
    $region31: #{tpu_custom_call.1} parent=1 // pred_check_branch
      %73 = sbr.rel (0) target = $region33
    $region32: #{tpu_custom_call.1} parent=1 // pred_region
      %s75 = ssub.s32 4096, 4096
      %76 = vsyncadd [#allocation9], %s75
      %s77 = sshll.u32 [#allocation10], 4
      %s78 = int_to_ptr.vmem [resolvable:$true] %s77
      %83 = dma.hbm_to_vmem [thread:$0]  %s7, 4096, %s78, [#allocation9], 64, 64, 4
    $region33: #{tpu_custom_call.1} parent=1 // pred_fallthru
      _
    // Predicated region
    $region34: #{tpu_custom_call.1} parent=1 // pred_check
      _
    $region35: #{tpu_custom_call.1} parent=1 // pred_check_branch
      %85 = sbr.rel (0) target = $region37
    $region36: #{tpu_custom_call.1} parent=1 // pred_region
      _
    $region37: #{tpu_custom_call.1} parent=1 // pred_fallthru
      _
    // Predicated region
    $region38: #{tpu_custom_call.1} parent=1 // pred_check
      _
    $region39: #{tpu_custom_call.1} parent=1 // pred_check_branch
      %87 = sbr.rel (0) target = $region41
    $region40: #{tpu_custom_call.1} parent=1 // pred_region
      %88 = dma.done [#allocation3], 2048
    $region41: #{tpu_custom_call.1} parent=1 // pred_fallthru
      _
    // Predicated region
    $region42: #{tpu_custom_call.1} parent=1 // pred_check
      _
    $region43: #{tpu_custom_call.1} parent=1 // pred_check_branch
      %90 = sbr.rel (0) target = $region45
    $region44: #{tpu_custom_call.1} parent=1 // pred_region
      %91 = dma.done [#allocation6], 8192
    $region45: #{tpu_custom_call.1} parent=1 // pred_fallthru
      _
    // Predicated region
    $region46: #{tpu_custom_call.1} parent=1 // pred_check
      _
    $region47: #{tpu_custom_call.1} parent=1 // pred_check_branch
      %93 = sbr.rel (0) target = $region49
    $region48: #{tpu_custom_call.1} parent=1 // pred_region
      %94 = dma.done [#allocation6], 8192
    $region49: #{tpu_custom_call.1} parent=1 // pred_fallthru
      _
    // Predicated region
    $region50: #{tpu_custom_call.1} parent=1 // pred_check
      _
    $region51: #{tpu_custom_call.1} parent=1 // pred_check_branch
      %96 = sbr.rel (0) target = $region53
    $region52: #{tpu_custom_call.1} parent=1 // pred_region
      %97 = dma.done [#allocation9], 32768
    $region53: #{tpu_custom_call.1} parent=1 // pred_fallthru
      _
    // Predicated region
    $region54: #{tpu_custom_call.1} parent=1 // pred_check
      _
    $region55: #{tpu_custom_call.1} parent=1 // pred_check_branch
      %99 = sbr.rel (0) target = $region57
    $region56: #{tpu_custom_call.1} parent=1 // pred_region
      %100 = dma.done [#allocation9], 4096
    $region57: #{tpu_custom_call.1} parent=1 // pred_fallthru
      _
    %v102 = vld [vmem:[#allocation2] sm:$0xff]
    %v103 = vld [vmem:[#allocation2 + $0x8] sm:$0xff]
    %v104 = vld [vmem:[#allocation2 + $0x10] sm:$0xff]
    %v105 = vld [vmem:[#allocation2 + $0x18] sm:$0xff]
    %v106 = vld [vmem:[#allocation2 + $0x20] sm:$0xff]
    %v107 = vld [vmem:[#allocation2 + $0x28] sm:$0xff]
    %v108 = vld [vmem:[#allocation2 + $0x30] sm:$0xff]
    %v109 = vld [vmem:[#allocation2 + $0x38] sm:$0xff]
    %v110 = vld [vmem:[#allocation2 + $0x40] sm:$0xff]
    %v111 = vld [vmem:[#allocation2 + $0x48] sm:$0xff]
    %v112 = vld [vmem:[#allocation2 + $0x50] sm:$0xff]
    %v113 = vld [vmem:[#allocation2 + $0x58] sm:$0xff]
    %v114 = vld [vmem:[#allocation2 + $0x60] sm:$0xff]
    %v115 = vld [vmem:[#allocation2 + $0x68] sm:$0xff]
    %v116 = vld [vmem:[#allocation2 + $0x70] sm:$0xff]
    %v117 = vld [vmem:[#allocation2 + $0x78] sm:$0xff]
    %v118 = vpack.c.bf16 %v110, %v102
    %v119 = vpack.c.bf16 %v111, %v103
    %v120 = vpack.c.bf16 %v112, %v104
    %v121 = vpack.c.bf16 %v113, %v105
    %v122 = vpack.c.bf16 %v114, %v106
    %v123 = vpack.c.bf16 %v115, %v107
    %v124 = vpack.c.bf16 %v116, %v108
    %v125 = vpack.c.bf16 %v117, %v109
    %v126 = vld [vmem:[#allocation5] sm:$0xf]
    %v127 = vld [vmem:[#allocation5 + $0x4] sm:$0xf]
    %v128 = vld [vmem:[#allocation5 + $0x8] sm:$0xf]
    %v129 = vld [vmem:[#allocation5 + $0xc] sm:$0xf]
    %v130 = vld [vmem:[#allocation5 + $0x10] sm:$0xf]
    %v131 = vld [vmem:[#allocation5 + $0x14] sm:$0xf]
    %v132 = vld [vmem:[#allocation5 + $0x18] sm:$0xf]
    %v133 = vld [vmem:[#allocation5 + $0x1c] sm:$0xf]
    %v134 = vld [vmem:[#allocation5 + $0x20] sm:$0xf]
    %v135 = vld [vmem:[#allocation5 + $0x24] sm:$0xf]
    %v136 = vld [vmem:[#allocation5 + $0x28] sm:$0xf]
    %v137 = vld [vmem:[#allocation5 + $0x2c] sm:$0xf]
    %v138 = vld [vmem:[#allocation5 + $0x30] sm:$0xf]
    %v139 = vld [vmem:[#allocation5 + $0x34] sm:$0xf]
    %v140 = vld [vmem:[#allocation5 + $0x38] sm:$0xf]
    %v141 = vld [vmem:[#allocation5 + $0x3c] sm:$0xf]
    %v142 = vld [vmem:[#allocation5 + $0x40] sm:$0xf]
    %v143 = vld [vmem:[#allocation5 + $0x44] sm:$0xf]
    %v144 = vld [vmem:[#allocation5 + $0x48] sm:$0xf]
    %v145 = vld [vmem:[#allocation5 + $0x4c] sm:$0xf]
    %v146 = vld [vmem:[#allocation5 + $0x50] sm:$0xf]
    %v147 = vld [vmem:[#allocation5 + $0x54] sm:$0xf]
    %v148 = vld [vmem:[#allocation5 + $0x58] sm:$0xf]
    %v149 = vld [vmem:[#allocation5 + $0x5c] sm:$0xf]
    %v150 = vld [vmem:[#allocation5 + $0x60] sm:$0xf]
    %v151 = vld [vmem:[#allocation5 + $0x64] sm:$0xf]
    %v152 = vld [vmem:[#allocation5 + $0x68] sm:$0xf]
    %v153 = vld [vmem:[#allocation5 + $0x6c] sm:$0xf]
    %v154 = vld [vmem:[#allocation5 + $0x70] sm:$0xf]
    %v155 = vld [vmem:[#allocation5 + $0x74] sm:$0xf]
    %v156 = vld [vmem:[#allocation5 + $0x78] sm:$0xf]
    %v157 = vld [vmem:[#allocation5 + $0x7c] sm:$0xf]
    %v158 = vld [vmem:[#allocation5 + $0x80] sm:$0xf]
    %v159 = vld [vmem:[#allocation5 + $0x84] sm:$0xf]
    %v160 = vld [vmem:[#allocation5 + $0x88] sm:$0xf]
    %v161 = vld [vmem:[#allocation5 + $0x8c] sm:$0xf]
    %v162 = vld [vmem:[#allocation5 + $0x90] sm:$0xf]
    %v163 = vld [vmem:[#allocation5 + $0x94] sm:$0xf]
    %v164 = vld [vmem:[#allocation5 + $0x98] sm:$0xf]
    %v165 = vld [vmem:[#allocation5 + $0x9c] sm:$0xf]
    %v166 = vld [vmem:[#allocation5 + $0xa0] sm:$0xf]
    %v167 = vld [vmem:[#allocation5 + $0xa4] sm:$0xf]
    %v168 = vld [vmem:[#allocation5 + $0xa8] sm:$0xf]
    %v169 = vld [vmem:[#allocation5 + $0xac] sm:$0xf]
    %v170 = vld [vmem:[#allocation5 + $0xb0] sm:$0xf]
    %v171 = vld [vmem:[#allocation5 + $0xb4] sm:$0xf]
    %v172 = vld [vmem:[#allocation5 + $0xb8] sm:$0xf]
    %v173 = vld [vmem:[#allocation5 + $0xbc] sm:$0xf]
    %v174 = vld [vmem:[#allocation5 + $0xc0] sm:$0xf]
    %v175 = vld [vmem:[#allocation5 + $0xc4] sm:$0xf]
    %v176 = vld [vmem:[#allocation5 + $0xc8] sm:$0xf]
    %v177 = vld [vmem:[#allocation5 + $0xcc] sm:$0xf]
    %v178 = vld [vmem:[#allocation5 + $0xd0] sm:$0xf]
    %v179 = vld [vmem:[#allocation5 + $0xd4] sm:$0xf]
    %v180 = vld [vmem:[#allocation5 + $0xd8] sm:$0xf]
    %v181 = vld [vmem:[#allocation5 + $0xdc] sm:$0xf]
    %v182 = vld [vmem:[#allocation5 + $0xe0] sm:$0xf]
    %v183 = vld [vmem:[#allocation5 + $0xe4] sm:$0xf]
    %v184 = vld [vmem:[#allocation5 + $0xe8] sm:$0xf]
    %v185 = vld [vmem:[#allocation5 + $0xec] sm:$0xf]
    %v186 = vld [vmem:[#allocation5 + $0xf0] sm:$0xf]
    %v187 = vld [vmem:[#allocation5 + $0xf4] sm:$0xf]
    %v188 = vld [vmem:[#allocation5 + $0xf8] sm:$0xf]
    %v189 = vld [vmem:[#allocation5 + $0xfc] sm:$0xf]
    %v190 = vld [vmem:[#allocation5 + $0x100] sm:$0xf]
    %v191 = vld [vmem:[#allocation5 + $0x104] sm:$0xf]
    %v192 = vld [vmem:[#allocation5 + $0x108] sm:$0xf]
    %v193 = vld [vmem:[#allocation5 + $0x10c] sm:$0xf]
    %v194 = vld [vmem:[#allocation5 + $0x110] sm:$0xf]
    %v195 = vld [vmem:[#allocation5 + $0x114] sm:$0xf]
    %v196 = vld [vmem:[#allocation5 + $0x118] sm:$0xf]
    %v197 = vld [vmem:[#allocation5 + $0x11c] sm:$0xf]
    %v198 = vld [vmem:[#allocation5 + $0x120] sm:$0xf]
    %v199 = vld [vmem:[#allocation5 + $0x124] sm:$0xf]
    %v200 = vld [vmem:[#allocation5 + $0x128] sm:$0xf]
    %v201 = vld [vmem:[#allocation5 + $0x12c] sm:$0xf]
    %v202 = vld [vmem:[#allocation5 + $0x130] sm:$0xf]
    %v203 = vld [vmem:[#allocation5 + $0x134] sm:$0xf]
    %v204 = vld [vmem:[#allocation5 + $0x138] sm:$0xf]
    %v205 = vld [vmem:[#allocation5 + $0x13c] sm:$0xf]
    %v206 = vld [vmem:[#allocation5 + $0x140] sm:$0xf]
    %v207 = vld [vmem:[#allocation5 + $0x144] sm:$0xf]
    %v208 = vld [vmem:[#allocation5 + $0x148] sm:$0xf]
    %v209 = vld [vmem:[#allocation5 + $0x14c] sm:$0xf]
    %v210 = vld [vmem:[#allocation5 + $0x150] sm:$0xf]
    %v211 = vld [vmem:[#allocation5 + $0x154] sm:$0xf]
    %v212 = vld [vmem:[#allocation5 + $0x158] sm:$0xf]
    %v213 = vld [vmem:[#allocation5 + $0x15c] sm:$0xf]
    %v214 = vld [vmem:[#allocation5 + $0x160] sm:$0xf]
    %v215 = vld [vmem:[#allocation5 + $0x164] sm:$0xf]
    %v216 = vld [vmem:[#allocation5 + $0x168] sm:$0xf]
    %v217 = vld [vmem:[#allocation5 + $0x16c] sm:$0xf]
    %v218 = vld [vmem:[#allocation5 + $0x170] sm:$0xf]
    %v219 = vld [vmem:[#allocation5 + $0x174] sm:$0xf]
    %v220 = vld [vmem:[#allocation5 + $0x178] sm:$0xf]
    %v221 = vld [vmem:[#allocation5 + $0x17c] sm:$0xf]
    %v222 = vld [vmem:[#allocation5 + $0x180] sm:$0xf]
    %v223 = vld [vmem:[#allocation5 + $0x184] sm:$0xf]
    %v224 = vld [vmem:[#allocation5 + $0x188] sm:$0xf]
    %v225 = vld [vmem:[#allocation5 + $0x18c] sm:$0xf]
    %v226 = vld [vmem:[#allocation5 + $0x190] sm:$0xf]
    %v227 = vld [vmem:[#allocation5 + $0x194] sm:$0xf]
    %v228 = vld [vmem:[#allocation5 + $0x198] sm:$0xf]
    %v229 = vld [vmem:[#allocation5 + $0x19c] sm:$0xf]
    %v230 = vld [vmem:[#allocation5 + $0x1a0] sm:$0xf]
    %v231 = vld [vmem:[#allocation5 + $0x1a4] sm:$0xf]
    %v232 = vld [vmem:[#allocation5 + $0x1a8] sm:$0xf]
    %v233 = vld [vmem:[#allocation5 + $0x1ac] sm:$0xf]
    %v234 = vld [vmem:[#allocation5 + $0x1b0] sm:$0xf]
    %v235 = vld [vmem:[#allocation5 + $0x1b4] sm:$0xf]
    %v236 = vld [vmem:[#allocation5 + $0x1b8] sm:$0xf]
    %v237 = vld [vmem:[#allocation5 + $0x1bc] sm:$0xf]
    %v238 = vld [vmem:[#allocation5 + $0x1c0] sm:$0xf]
    %v239 = vld [vmem:[#allocation5 + $0x1c4] sm:$0xf]
    %v240 = vld [vmem:[#allocation5 + $0x1c8] sm:$0xf]
    %v241 = vld [vmem:[#allocation5 + $0x1cc] sm:$0xf]
    %v242 = vld [vmem:[#allocation5 + $0x1d0] sm:$0xf]
    %v243 = vld [vmem:[#allocation5 + $0x1d4] sm:$0xf]
    %v244 = vld [vmem:[#allocation5 + $0x1d8] sm:$0xf]
    %v245 = vld [vmem:[#allocation5 + $0x1dc] sm:$0xf]
    %v246 = vld [vmem:[#allocation5 + $0x1e0] sm:$0xf]
    %v247 = vld [vmem:[#allocation5 + $0x1e4] sm:$0xf]
    %v248 = vld [vmem:[#allocation5 + $0x1e8] sm:$0xf]
    %v249 = vld [vmem:[#allocation5 + $0x1ec] sm:$0xf]
    %v250 = vld [vmem:[#allocation5 + $0x1f0] sm:$0xf]
    %v251 = vld [vmem:[#allocation5 + $0x1f4] sm:$0xf]
    %v252 = vld [vmem:[#allocation5 + $0x1f8] sm:$0xf]
    %v253 = vld [vmem:[#allocation5 + $0x1fc] sm:$0xf]
    %v254 = vld [vmem:[%s2] sm:$0x1]
    %v256 = vlaneseq
    %v257 = vshrl.u32 %v256, 7
    %v258 = vsub.s32 0, %v257
    %v259 = vrot.slane %v254, %v258
    %v389 = vunpack.c.l.b16 %v126
    %v390 = vunpack.c.l.b16 %v127
    %v391 = vunpack.c.l.b16 %v128
    %v392 = vunpack.c.l.b16 %v129
    %v393 = vunpack.c.l.b16 %v130
    %v394 = vunpack.c.l.b16 %v131
    %v395 = vunpack.c.l.b16 %v132
    %v396 = vunpack.c.l.b16 %v133
    %v397 = vunpack.c.l.b16 %v134
    %v398 = vunpack.c.l.b16 %v135
    %v399 = vunpack.c.l.b16 %v136
    %v400 = vunpack.c.l.b16 %v137
    %v401 = vunpack.c.l.b16 %v138
    %v402 = vunpack.c.l.b16 %v139
    %v403 = vunpack.c.l.b16 %v140
    %v404 = vunpack.c.l.b16 %v141
    %v405 = vunpack.c.l.b16 %v142
    %v406 = vunpack.c.l.b16 %v143
    %v407 = vunpack.c.l.b16 %v144
    %v408 = vunpack.c.l.b16 %v145
    %v409 = vunpack.c.l.b16 %v146
    %v410 = vunpack.c.l.b16 %v147
    %v411 = vunpack.c.l.b16 %v148
    %v412 = vunpack.c.l.b16 %v149
    %v413 = vunpack.c.l.b16 %v150
    %v414 = vunpack.c.l.b16 %v151
    %v415 = vunpack.c.l.b16 %v152
    %v416 = vunpack.c.l.b16 %v153
    %v417 = vunpack.c.l.b16 %v154
    %v418 = vunpack.c.l.b16 %v155
    %v419 = vunpack.c.l.b16 %v156
    %v420 = vunpack.c.l.b16 %v157
    %v421 = vunpack.c.l.b16 %v158
    %v422 = vunpack.c.l.b16 %v159
    %v423 = vunpack.c.l.b16 %v160
    %v424 = vunpack.c.l.b16 %v161
    %v425 = vunpack.c.l.b16 %v162
    %v426 = vunpack.c.l.b16 %v163
    %v427 = vunpack.c.l.b16 %v164
    %v428 = vunpack.c.l.b16 %v165
    %v429 = vunpack.c.l.b16 %v166
    %v430 = vunpack.c.l.b16 %v167
    %v431 = vunpack.c.l.b16 %v168
    %v432 = vunpack.c.l.b16 %v169
    %v433 = vunpack.c.l.b16 %v170
    %v434 = vunpack.c.l.b16 %v171
    %v435 = vunpack.c.l.b16 %v172
    %v436 = vunpack.c.l.b16 %v173
    %v437 = vunpack.c.l.b16 %v174
    %v438 = vunpack.c.l.b16 %v175
    %v439 = vunpack.c.l.b16 %v176
    %v440 = vunpack.c.l.b16 %v177
    %v441 = vunpack.c.l.b16 %v178
    %v442 = vunpack.c.l.b16 %v179
    %v443 = vunpack.c.l.b16 %v180
    %v444 = vunpack.c.l.b16 %v181
    %v445 = vunpack.c.l.b16 %v182
    %v446 = vunpack.c.l.b16 %v183
    %v447 = vunpack.c.l.b16 %v184
    %v448 = vunpack.c.l.b16 %v185
    %v449 = vunpack.c.l.b16 %v186
    %v450 = vunpack.c.l.b16 %v187
    %v451 = vunpack.c.l.b16 %v188
    %v452 = vunpack.c.l.b16 %v189
    %v453 = vunpack.c.l.b16 %v190
    %v454 = vunpack.c.l.b16 %v191
    %v455 = vunpack.c.l.b16 %v192
    %v456 = vunpack.c.l.b16 %v193
    %v457 = vunpack.c.l.b16 %v194
    %v458 = vunpack.c.l.b16 %v195
    %v459 = vunpack.c.l.b16 %v196
    %v460 = vunpack.c.l.b16 %v197
    %v461 = vunpack.c.l.b16 %v198
    %v462 = vunpack.c.l.b16 %v199
    %v463 = vunpack.c.l.b16 %v200
    %v464 = vunpack.c.l.b16 %v201
    %v465 = vunpack.c.l.b16 %v202
    %v466 = vunpack.c.l.b16 %v203
    %v467 = vunpack.c.l.b16 %v204
    %v468 = vunpack.c.l.b16 %v205
    %v469 = vunpack.c.l.b16 %v206
    %v470 = vunpack.c.l.b16 %v207
    %v471 = vunpack.c.l.b16 %v208
    %v472 = vunpack.c.l.b16 %v209
    %v473 = vunpack.c.l.b16 %v210
    %v474 = vunpack.c.l.b16 %v211
    %v475 = vunpack.c.l.b16 %v212
    %v476 = vunpack.c.l.b16 %v213
    %v477 = vunpack.c.l.b16 %v214
    %v478 = vunpack.c.l.b16 %v215
    %v479 = vunpack.c.l.b16 %v216
    %v480 = vunpack.c.l.b16 %v217
    %v481 = vunpack.c.l.b16 %v218
    %v482 = vunpack.c.l.b16 %v219
    %v483 = vunpack.c.l.b16 %v220
    %v484 = vunpack.c.l.b16 %v221
    %v485 = vunpack.c.l.b16 %v222
    %v486 = vunpack.c.l.b16 %v223
    %v487 = vunpack.c.l.b16 %v224
    %v488 = vunpack.c.l.b16 %v225
    %v489 = vunpack.c.l.b16 %v226
    %v490 = vunpack.c.l.b16 %v227
    %v491 = vunpack.c.l.b16 %v228
    %v492 = vunpack.c.l.b16 %v229
    %v493 = vunpack.c.l.b16 %v230
    %v494 = vunpack.c.l.b16 %v231
    %v495 = vunpack.c.l.b16 %v232
    %v496 = vunpack.c.l.b16 %v233
    %v497 = vunpack.c.l.b16 %v234
    %v498 = vunpack.c.l.b16 %v235
    %v499 = vunpack.c.l.b16 %v236
    %v500 = vunpack.c.l.b16 %v237
    %v501 = vunpack.c.l.b16 %v238
    %v502 = vunpack.c.l.b16 %v239
    %v503 = vunpack.c.l.b16 %v240
    %v504 = vunpack.c.l.b16 %v241
    %v505 = vunpack.c.l.b16 %v242
    %v506 = vunpack.c.l.b16 %v243
    %v507 = vunpack.c.l.b16 %v244
    %v508 = vunpack.c.l.b16 %v245
    %v509 = vunpack.c.l.b16 %v246
    %v510 = vunpack.c.l.b16 %v247
    %v511 = vunpack.c.l.b16 %v248
    %v512 = vunpack.c.l.b16 %v249
    %v513 = vunpack.c.l.b16 %v250
    %v514 = vunpack.c.l.b16 %v251
    %v515 = vunpack.c.l.b16 %v252
    %v516 = vunpack.c.l.b16 %v253
    %v517 = vpack.c.b16 %v390, %v389
    %v518 = vpack.c.b16 %v392, %v391
    %v519 = vpack.c.b16 %v394, %v393
    %v520 = vpack.c.b16 %v396, %v395
    %v521 = vpack.c.b16 %v398, %v397
    %v522 = vpack.c.b16 %v400, %v399
    %v523 = vpack.c.b16 %v402, %v401
    %v524 = vpack.c.b16 %v404, %v403
    %v525 = vpack.c.b16 %v406, %v405
    %v526 = vpack.c.b16 %v408, %v407
    %v527 = vpack.c.b16 %v410, %v409
    %v528 = vpack.c.b16 %v412, %v411
    %v529 = vpack.c.b16 %v414, %v413
    %v530 = vpack.c.b16 %v416, %v415
    %v531 = vpack.c.b16 %v418, %v417
    %v532 = vpack.c.b16 %v420, %v419
    %v533 = vpack.c.b16 %v422, %v421
    %v534 = vpack.c.b16 %v424, %v423
    %v535 = vpack.c.b16 %v426, %v425
    %v536 = vpack.c.b16 %v428, %v427
    %v537 = vpack.c.b16 %v430, %v429
    %v538 = vpack.c.b16 %v432, %v431
    %v539 = vpack.c.b16 %v434, %v433
    %v540 = vpack.c.b16 %v436, %v435
    %v541 = vpack.c.b16 %v438, %v437
    %v542 = vpack.c.b16 %v440, %v439
    %v543 = vpack.c.b16 %v442, %v441
    %v544 = vpack.c.b16 %v444, %v443
    %v545 = vpack.c.b16 %v446, %v445
    %v546 = vpack.c.b16 %v448, %v447
    %v547 = vpack.c.b16 %v450, %v449
    %v548 = vpack.c.b16 %v452, %v451
    %v549 = vpack.c.b16 %v454, %v453
    %v550 = vpack.c.b16 %v456, %v455
    %v551 = vpack.c.b16 %v458, %v457
    %v552 = vpack.c.b16 %v460, %v459
    %v553 = vpack.c.b16 %v462, %v461
    %v554 = vpack.c.b16 %v464, %v463
    %v555 = vpack.c.b16 %v466, %v465
    %v556 = vpack.c.b16 %v468, %v467
    %v557 = vpack.c.b16 %v470, %v469
    %v558 = vpack.c.b16 %v472, %v471
    %v559 = vpack.c.b16 %v474, %v473
    %v560 = vpack.c.b16 %v476, %v475
    %v561 = vpack.c.b16 %v478, %v477
    %v562 = vpack.c.b16 %v480, %v479
    %v563 = vpack.c.b16 %v482, %v481
    %v564 = vpack.c.b16 %v484, %v483
    %v565 = vpack.c.b16 %v486, %v485
    %v566 = vpack.c.b16 %v488, %v487
    %v567 = vpack.c.b16 %v490, %v489
    %v568 = vpack.c.b16 %v492, %v491
    %v569 = vpack.c.b16 %v494, %v493
    %v570 = vpack.c.b16 %v496, %v495
    %v571 = vpack.c.b16 %v498, %v497
    %v572 = vpack.c.b16 %v500, %v499
    %v573 = vpack.c.b16 %v502, %v501
    %v574 = vpack.c.b16 %v504, %v503
    %v575 = vpack.c.b16 %v506, %v505
    %v576 = vpack.c.b16 %v508, %v507
    %v577 = vpack.c.b16 %v510, %v509
    %v578 = vpack.c.b16 %v512, %v511
    %v579 = vpack.c.b16 %v514, %v513
    %v580 = vpack.c.b16 %v516, %v515
    %645 = vmatprep.subr.bf16.mxu0 0
    %646 = vmatpush1.bf16.msra.mxu0 %v517
    %647 = vmatprep.subr.bf16.mxu0 0
    %648 = vmatpush1.bf16.msra.mxu0 %v518
    %649 = vmatprep.subr.bf16.mxu0 0
    %650 = vmatpush1.bf16.msra.mxu0 %v519
    %651 = vmatprep.subr.bf16.mxu0 0
    %652 = vmatpush1.bf16.msra.mxu0 %v520
    %653 = vmatprep.subr.bf16.mxu0 0
    %654 = vmatpush1.bf16.msra.mxu0 %v521
    %655 = vmatprep.subr.bf16.mxu0 0
    %656 = vmatpush1.bf16.msra.mxu0 %v522
    %657 = vmatprep.subr.bf16.mxu0 0
    %658 = vmatpush1.bf16.msra.mxu0 %v523
    %659 = vmatprep.subr.bf16.mxu0 0
    %660 = vmatpush1.bf16.msra.mxu0 %v524
    %661 = vmatprep.subr.bf16.mxu0 0
    %662 = vmatpush1.bf16.msra.mxu0 %v525
    %663 = vmatprep.subr.bf16.mxu0 0
    %664 = vmatpush1.bf16.msra.mxu0 %v526
    %665 = vmatprep.subr.bf16.mxu0 0
    %666 = vmatpush1.bf16.msra.mxu0 %v527
    %667 = vmatprep.subr.bf16.mxu0 0
    %668 = vmatpush1.bf16.msra.mxu0 %v528
    %669 = vmatprep.subr.bf16.mxu0 0
    %670 = vmatpush1.bf16.msra.mxu0 %v529
    %671 = vmatprep.subr.bf16.mxu0 0
    %672 = vmatpush1.bf16.msra.mxu0 %v530
    %673 = vmatprep.subr.bf16.mxu0 0
    %674 = vmatpush1.bf16.msra.mxu0 %v531
    %675 = vmatprep.subr.bf16.mxu0 0
    %676 = vmatpush1.bf16.msra.mxu0 %v532
    %677 = vmatprep.mubr.bf16.mxu0 %v119
    %678 = vmatmul.mubr.bf16.gmra.mrb[0].mxu0 %v118
    %v679 = vpop.f32.mrb[0].mxu0
    %v680 = vadd.f32 %v259, %v679
    %v681 = vpop.f32.mrb[0].mxu0
    %v682 = vpop.f32.mrb[0].mxu0
    %v683 = vadd.f32 %v259, %v682
    %v684 = vpop.f32.mrb[0].mxu0
    %685 = vdwg.mxu0
    %686 = vmatprep.subr.bf16.mxu0 0
    %687 = vmatpush1.bf16.msra.mxu0 %v533
    %688 = vmatprep.subr.bf16.mxu0 0
    %689 = vmatpush1.bf16.msra.mxu0 %v534
    %690 = vmatprep.subr.bf16.mxu0 0
    %691 = vmatpush1.bf16.msra.mxu0 %v535
    %692 = vmatprep.subr.bf16.mxu0 0
    %693 = vmatpush1.bf16.msra.mxu0 %v536
    %694 = vmatprep.subr.bf16.mxu0 0
    %695 = vmatpush1.bf16.msra.mxu0 %v537
    %696 = vmatprep.subr.bf16.mxu0 0
    %697 = vmatpush1.bf16.msra.mxu0 %v538
    %698 = vmatprep.subr.bf16.mxu0 0
    %699 = vmatpush1.bf16.msra.mxu0 %v539
    %700 = vmatprep.subr.bf16.mxu0 0
    %701 = vmatpush1.bf16.msra.mxu0 %v540
    %702 = vmatprep.subr.bf16.mxu0 0
    %703 = vmatpush1.bf16.msra.mxu0 %v541
    %704 = vmatprep.subr.bf16.mxu0 0
    %705 = vmatpush1.bf16.msra.mxu0 %v542
    %706 = vmatprep.subr.bf16.mxu0 0
    %707 = vmatpush1.bf16.msra.mxu0 %v543
    %708 = vmatprep.subr.bf16.mxu0 0
    %709 = vmatpush1.bf16.msra.mxu0 %v544
    %710 = vmatprep.subr.bf16.mxu0 0
    %711 = vmatpush1.bf16.msra.mxu0 %v545
    %712 = vmatprep.subr.bf16.mxu0 0
    %713 = vmatpush1.bf16.msra.mxu0 %v546
    %714 = vmatprep.subr.bf16.mxu0 0
    %715 = vmatpush1.bf16.msra.mxu0 %v547
    %716 = vmatprep.subr.bf16.mxu0 0
    %717 = vmatpush1.bf16.msra.mxu0 %v548
    %718 = vmatprep.mubr.bf16.mxu0 %v121
    %719 = vmatmul.mubr.bf16.gmra.mrb[0].mxu0 %v120
    %v720 = vpop.f32.mrb[0].mxu0
    %v721 = vadd.f32 %v680, %v720
    %v722 = vpop.f32.mrb[0].mxu0
    %v723 = vpop.f32.mrb[0].mxu0
    %v724 = vadd.f32 %v683, %v723
    %v725 = vpop.f32.mrb[0].mxu0
    %726 = vdwg.mxu0
    %727 = vmatprep.subr.bf16.mxu0 0
    %728 = vmatpush1.bf16.msra.mxu0 %v549
    %729 = vmatprep.subr.bf16.mxu0 0
    %730 = vmatpush1.bf16.msra.mxu0 %v550
    %731 = vmatprep.subr.bf16.mxu0 0
    %732 = vmatpush1.bf16.msra.mxu0 %v551
    %733 = vmatprep.subr.bf16.mxu0 0
    %734 = vmatpush1.bf16.msra.mxu0 %v552
    %735 = vmatprep.subr.bf16.mxu0 0
    %736 = vmatpush1.bf16.msra.mxu0 %v553
    %737 = vmatprep.subr.bf16.mxu0 0
    %738 = vmatpush1.bf16.msra.mxu0 %v554
    %739 = vmatprep.subr.bf16.mxu0 0
    %740 = vmatpush1.bf16.msra.mxu0 %v555
    %741 = vmatprep.subr.bf16.mxu0 0
    %742 = vmatpush1.bf16.msra.mxu0 %v556
    %743 = vmatprep.subr.bf16.mxu0 0
    %744 = vmatpush1.bf16.msra.mxu0 %v557
    %745 = vmatprep.subr.bf16.mxu0 0
    %746 = vmatpush1.bf16.msra.mxu0 %v558
    %747 = vmatprep.subr.bf16.mxu0 0
    %748 = vmatpush1.bf16.msra.mxu0 %v559
    %749 = vmatprep.subr.bf16.mxu0 0
    %750 = vmatpush1.bf16.msra.mxu0 %v560
    %751 = vmatprep.subr.bf16.mxu0 0
    %752 = vmatpush1.bf16.msra.mxu0 %v561
    %753 = vmatprep.subr.bf16.mxu0 0
    %754 = vmatpush1.bf16.msra.mxu0 %v562
    %755 = vmatprep.subr.bf16.mxu0 0
    %756 = vmatpush1.bf16.msra.mxu0 %v563
    %757 = vmatprep.subr.bf16.mxu0 0
    %758 = vmatpush1.bf16.msra.mxu0 %v564
    %759 = vmatprep.mubr.bf16.mxu0 %v123
    %760 = vmatmul.mubr.bf16.gmra.mrb[0].mxu0 %v122
    %v761 = vpop.f32.mrb[0].mxu0
    %v762 = vadd.f32 %v721, %v761
    %v763 = vpop.f32.mrb[0].mxu0
    %v764 = vpop.f32.mrb[0].mxu0
    %v765 = vadd.f32 %v724, %v764
    %v766 = vpop.f32.mrb[0].mxu0
    %767 = vdwg.mxu0
    %768 = vmatprep.subr.bf16.mxu0 0
    %769 = vmatpush1.bf16.msra.mxu0 %v565
    %770 = vmatprep.subr.bf16.mxu0 0
    %771 = vmatpush1.bf16.msra.mxu0 %v566
    %772 = vmatprep.subr.bf16.mxu0 0
    %773 = vmatpush1.bf16.msra.mxu0 %v567
    %774 = vmatprep.subr.bf16.mxu0 0
    %775 = vmatpush1.bf16.msra.mxu0 %v568
    %776 = vmatprep.subr.bf16.mxu0 0
    %777 = vmatpush1.bf16.msra.mxu0 %v569
    %778 = vmatprep.subr.bf16.mxu0 0
    %779 = vmatpush1.bf16.msra.mxu0 %v570
    %780 = vmatprep.subr.bf16.mxu0 0
    %781 = vmatpush1.bf16.msra.mxu0 %v571
    %782 = vmatprep.subr.bf16.mxu0 0
    %783 = vmatpush1.bf16.msra.mxu0 %v572
    %784 = vmatprep.subr.bf16.mxu0 0
    %785 = vmatpush1.bf16.msra.mxu0 %v573
    %786 = vmatprep.subr.bf16.mxu0 0
    %787 = vmatpush1.bf16.msra.mxu0 %v574
    %788 = vmatprep.subr.bf16.mxu0 0
    %789 = vmatpush1.bf16.msra.mxu0 %v575
    %790 = vmatprep.subr.bf16.mxu0 0
    %791 = vmatpush1.bf16.msra.mxu0 %v576
    %792 = vmatprep.subr.bf16.mxu0 0
    %793 = vmatpush1.bf16.msra.mxu0 %v577
    %794 = vmatprep.subr.bf16.mxu0 0
    %795 = vmatpush1.bf16.msra.mxu0 %v578
    %796 = vmatprep.subr.bf16.mxu0 0
    %797 = vmatpush1.bf16.msra.mxu0 %v579
    %798 = vmatprep.subr.bf16.mxu0 0
    %799 = vmatpush1.bf16.msra.mxu0 %v580
    %800 = vmatprep.mubr.bf16.mxu0 %v125
    %801 = vmatmul.mubr.bf16.gmra.mrb[0].mxu0 %v124
    %v802 = vpop.f32.mrb[0].mxu0
    %v803 = vadd.f32 %v762, %v802
    %v804 = vpop.f32.mrb[0].mxu0
    %v805 = vpop.f32.mrb[0].mxu0
    %v806 = vadd.f32 %v765, %v805
    %v807 = vpop.f32.mrb[0].mxu0
    %808 = vdwg.mxu0
    %v809 = vpack.c.bf16 %v806, %v803
    %v810 = vld [vmem:[#allocation7] sm:$0xff]
    %v811 = vld [vmem:[#allocation7 + $0x8] sm:$0xff]
    %v812 = vld [vmem:[#allocation7 + $0x10] sm:$0xff]
    %v813 = vld [vmem:[#allocation7 + $0x18] sm:$0xff]
    %v814 = vld [vmem:[#allocation7 + $0x20] sm:$0xff]
    %v815 = vld [vmem:[#allocation7 + $0x28] sm:$0xff]
    %v816 = vld [vmem:[#allocation7 + $0x30] sm:$0xff]
    %v817 = vld [vmem:[#allocation7 + $0x38] sm:$0xff]
    %v818 = vld [vmem:[#allocation7 + $0x40] sm:$0xff]
    %v819 = vld [vmem:[#allocation7 + $0x48] sm:$0xff]
    %v820 = vld [vmem:[#allocation7 + $0x50] sm:$0xff]
    %v821 = vld [vmem:[#allocation7 + $0x58] sm:$0xff]
    %v822 = vld [vmem:[#allocation7 + $0x60] sm:$0xff]
    %v823 = vld [vmem:[#allocation7 + $0x68] sm:$0xff]
    %v824 = vld [vmem:[#allocation7 + $0x70] sm:$0xff]
    %v825 = vld [vmem:[#allocation7 + $0x78] sm:$0xff]
    %v826 = vld [vmem:[#allocation7 + $0x80] sm:$0xff]
    %v827 = vld [vmem:[#allocation7 + $0x88] sm:$0xff]
    %v828 = vld [vmem:[#allocation7 + $0x90] sm:$0xff]
    %v829 = vld [vmem:[#allocation7 + $0x98] sm:$0xff]
    %v830 = vld [vmem:[#allocation7 + $0xa0] sm:$0xff]
    %v831 = vld [vmem:[#allocation7 + $0xa8] sm:$0xff]
    %v832 = vld [vmem:[#allocation7 + $0xb0] sm:$0xff]
    %v833 = vld [vmem:[#allocation7 + $0xb8] sm:$0xff]
    %v834 = vld [vmem:[#allocation7 + $0xc0] sm:$0xff]
    %v835 = vld [vmem:[#allocation7 + $0xc8] sm:$0xff]
    %v836 = vld [vmem:[#allocation7 + $0xd0] sm:$0xff]
    %v837 = vld [vmem:[#allocation7 + $0xd8] sm:$0xff]
    %v838 = vld [vmem:[#allocation7 + $0xe0] sm:$0xff]
    %v839 = vld [vmem:[#allocation7 + $0xe8] sm:$0xff]
    %v840 = vld [vmem:[#allocation7 + $0xf0] sm:$0xff]
    %v841 = vld [vmem:[#allocation7 + $0xf8] sm:$0xff]
    %v842 = vld [vmem:[#allocation7 + $0x100] sm:$0xff]
    %v843 = vld [vmem:[#allocation7 + $0x108] sm:$0xff]
    %v844 = vld [vmem:[#allocation7 + $0x110] sm:$0xff]
    %v845 = vld [vmem:[#allocation7 + $0x118] sm:$0xff]
    %v846 = vld [vmem:[#allocation7 + $0x120] sm:$0xff]
    %v847 = vld [vmem:[#allocation7 + $0x128] sm:$0xff]
    %v848 = vld [vmem:[#allocation7 + $0x130] sm:$0xff]
    %v849 = vld [vmem:[#allocation7 + $0x138] sm:$0xff]
    %v850 = vld [vmem:[#allocation7 + $0x140] sm:$0xff]
    %v851 = vld [vmem:[#allocation7 + $0x148] sm:$0xff]
    %v852 = vld [vmem:[#allocation7 + $0x150] sm:$0xff]
    %v853 = vld [vmem:[#allocation7 + $0x158] sm:$0xff]
    %v854 = vld [vmem:[#allocation7 + $0x160] sm:$0xff]
    %v855 = vld [vmem:[#allocation7 + $0x168] sm:$0xff]
    %v856 = vld [vmem:[#allocation7 + $0x170] sm:$0xff]
    %v857 = vld [vmem:[#allocation7 + $0x178] sm:$0xff]
    %v858 = vld [vmem:[#allocation7 + $0x180] sm:$0xff]
    %v859 = vld [vmem:[#allocation7 + $0x188] sm:$0xff]
    %v860 = vld [vmem:[#allocation7 + $0x190] sm:$0xff]
    %v861 = vld [vmem:[#allocation7 + $0x198] sm:$0xff]
    %v862 = vld [vmem:[#allocation7 + $0x1a0] sm:$0xff]
    %v863 = vld [vmem:[#allocation7 + $0x1a8] sm:$0xff]
    %v864 = vld [vmem:[#allocation7 + $0x1b0] sm:$0xff]
    %v865 = vld [vmem:[#allocation7 + $0x1b8] sm:$0xff]
    %v866 = vld [vmem:[#allocation7 + $0x1c0] sm:$0xff]
    %v867 = vld [vmem:[#allocation7 + $0x1c8] sm:$0xff]
    %v868 = vld [vmem:[#allocation7 + $0x1d0] sm:$0xff]
    %v869 = vld [vmem:[#allocation7 + $0x1d8] sm:$0xff]
    %v870 = vld [vmem:[#allocation7 + $0x1e0] sm:$0xff]
    %v871 = vld [vmem:[#allocation7 + $0x1e8] sm:$0xff]
    %v872 = vld [vmem:[#allocation7 + $0x1f0] sm:$0xff]
    %v873 = vld [vmem:[#allocation7 + $0x1f8] sm:$0xff]
    %v874 = vld [vmem:[%s4] sm:$0xff]
    %v876 = vlaneseq
    %v877 = vshrl.u32 %v876, 7
    %v878 = vsub.s32 0, %v877
    %v879 = vrot.slane %v874, %v878
    %v880 = vlaneseq
    %v881 = vshrl.u32 %v880, 7
    %v882 = vsub.s32 1, %v881
    %v883 = vrot.slane %v874, %v882
    %v884 = vlaneseq
    %v885 = vshrl.u32 %v884, 7
    %v886 = vsub.s32 2, %v885
    %v887 = vrot.slane %v874, %v886
    %v888 = vlaneseq
    %v889 = vshrl.u32 %v888, 7
    %v890 = vsub.s32 3, %v889
    %v891 = vrot.slane %v874, %v890
    %v892 = vlaneseq
    %v893 = vshrl.u32 %v892, 7
    %v894 = vsub.s32 4, %v893
    %v895 = vrot.slane %v874, %v894
    %v896 = vlaneseq
    %v897 = vshrl.u32 %v896, 7
    %v898 = vsub.s32 5, %v897
    %v899 = vrot.slane %v874, %v898
    %v900 = vlaneseq
    %v901 = vshrl.u32 %v900, 7
    %v902 = vsub.s32 6, %v901
    %v903 = vrot.slane %v874, %v902
    %v904 = vlaneseq
    %v905 = vshrl.u32 %v904, 7
    %v906 = vsub.s32 7, %v905
    %v907 = vrot.slane %v874, %v906
    %v980 = vunpack.c.l.b16 %v810
    %v981 = vunpack.c.h.b16 %v810
    %v982 = vunpack.c.l.b16 %v811
    %v983 = vunpack.c.h.b16 %v811
    %v984 = vunpack.c.l.b16 %v812
    %v985 = vunpack.c.h.b16 %v812
    %v986 = vunpack.c.l.b16 %v813
    %v987 = vunpack.c.h.b16 %v813
    %v988 = vunpack.c.l.b16 %v814
    %v989 = vunpack.c.h.b16 %v814
    %v990 = vunpack.c.l.b16 %v815
    %v991 = vunpack.c.h.b16 %v815
    %v992 = vunpack.c.l.b16 %v816
    %v993 = vunpack.c.h.b16 %v816
    %v994 = vunpack.c.l.b16 %v817
    %v995 = vunpack.c.h.b16 %v817
    %v996 = vunpack.c.l.b16 %v818
    %v997 = vunpack.c.h.b16 %v818
    %v998 = vunpack.c.l.b16 %v819
    %v999 = vunpack.c.h.b16 %v819
    %v1000 = vunpack.c.l.b16 %v820
    %v1001 = vunpack.c.h.b16 %v820
    %v1002 = vunpack.c.l.b16 %v821
    %v1003 = vunpack.c.h.b16 %v821
    %v1004 = vunpack.c.l.b16 %v822
    %v1005 = vunpack.c.h.b16 %v822
    %v1006 = vunpack.c.l.b16 %v823
    %v1007 = vunpack.c.h.b16 %v823
    %v1008 = vunpack.c.l.b16 %v824
    %v1009 = vunpack.c.h.b16 %v824
    %v1010 = vunpack.c.l.b16 %v825
    %v1011 = vunpack.c.h.b16 %v825
    %v1012 = vunpack.c.l.b16 %v826
    %v1013 = vunpack.c.h.b16 %v826
    %v1014 = vunpack.c.l.b16 %v827
    %v1015 = vunpack.c.h.b16 %v827
    %v1016 = vunpack.c.l.b16 %v828
    %v1017 = vunpack.c.h.b16 %v828
    %v1018 = vunpack.c.l.b16 %v829
    %v1019 = vunpack.c.h.b16 %v829
    %v1020 = vunpack.c.l.b16 %v830
    %v1021 = vunpack.c.h.b16 %v830
    %v1022 = vunpack.c.l.b16 %v831
    %v1023 = vunpack.c.h.b16 %v831
    %v1024 = vunpack.c.l.b16 %v832
    %v1025 = vunpack.c.h.b16 %v832
    %v1026 = vunpack.c.l.b16 %v833
    %v1027 = vunpack.c.h.b16 %v833
    %v1028 = vunpack.c.l.b16 %v834
    %v1029 = vunpack.c.h.b16 %v834
    %v1030 = vunpack.c.l.b16 %v835
    %v1031 = vunpack.c.h.b16 %v835
    %v1032 = vunpack.c.l.b16 %v836
    %v1033 = vunpack.c.h.b16 %v836
    %v1034 = vunpack.c.l.b16 %v837
    %v1035 = vunpack.c.h.b16 %v837
    %v1036 = vunpack.c.l.b16 %v838
    %v1037 = vunpack.c.h.b16 %v838
    %v1038 = vunpack.c.l.b16 %v839
    %v1039 = vunpack.c.h.b16 %v839
    %v1040 = vunpack.c.l.b16 %v840
    %v1041 = vunpack.c.h.b16 %v840
    %v1042 = vunpack.c.l.b16 %v841
    %v1043 = vunpack.c.h.b16 %v841
    %v1044 = vunpack.c.l.b16 %v842
    %v1045 = vunpack.c.h.b16 %v842
    %v1046 = vunpack.c.l.b16 %v843
    %v1047 = vunpack.c.h.b16 %v843
    %v1048 = vunpack.c.l.b16 %v844
    %v1049 = vunpack.c.h.b16 %v844
    %v1050 = vunpack.c.l.b16 %v845
    %v1051 = vunpack.c.h.b16 %v845
    %v1052 = vunpack.c.l.b16 %v846
    %v1053 = vunpack.c.h.b16 %v846
    %v1054 = vunpack.c.l.b16 %v847
    %v1055 = vunpack.c.h.b16 %v847
    %v1056 = vunpack.c.l.b16 %v848
    %v1057 = vunpack.c.h.b16 %v848
    %v1058 = vunpack.c.l.b16 %v849
    %v1059 = vunpack.c.h.b16 %v849
    %v1060 = vunpack.c.l.b16 %v850
    %v1061 = vunpack.c.h.b16 %v850
    %v1062 = vunpack.c.l.b16 %v851
    %v1063 = vunpack.c.h.b16 %v851
    %v1064 = vunpack.c.l.b16 %v852
    %v1065 = vunpack.c.h.b16 %v852
    %v1066 = vunpack.c.l.b16 %v853
    %v1067 = vunpack.c.h.b16 %v853
    %v1068 = vunpack.c.l.b16 %v854
    %v1069 = vunpack.c.h.b16 %v854
    %v1070 = vunpack.c.l.b16 %v855
    %v1071 = vunpack.c.h.b16 %v855
    %v1072 = vunpack.c.l.b16 %v856
    %v1073 = vunpack.c.h.b16 %v856
    %v1074 = vunpack.c.l.b16 %v857
    %v1075 = vunpack.c.h.b16 %v857
    %v1076 = vunpack.c.l.b16 %v858
    %v1077 = vunpack.c.h.b16 %v858
    %v1078 = vunpack.c.l.b16 %v859
    %v1079 = vunpack.c.h.b16 %v859
    %v1080 = vunpack.c.l.b16 %v860
    %v1081 = vunpack.c.h.b16 %v860
    %v1082 = vunpack.c.l.b16 %v861
    %v1083 = vunpack.c.h.b16 %v861
    %v1084 = vunpack.c.l.b16 %v862
    %v1085 = vunpack.c.h.b16 %v862
    %v1086 = vunpack.c.l.b16 %v863
    %v1087 = vunpack.c.h.b16 %v863
    %v1088 = vunpack.c.l.b16 %v864
    %v1089 = vunpack.c.h.b16 %v864
    %v1090 = vunpack.c.l.b16 %v865
    %v1091 = vunpack.c.h.b16 %v865
    %v1092 = vunpack.c.l.b16 %v866
    %v1093 = vunpack.c.h.b16 %v866
    %v1094 = vunpack.c.l.b16 %v867
    %v1095 = vunpack.c.h.b16 %v867
    %v1096 = vunpack.c.l.b16 %v868
    %v1097 = vunpack.c.h.b16 %v868
    %v1098 = vunpack.c.l.b16 %v869
    %v1099 = vunpack.c.h.b16 %v869
    %v1100 = vunpack.c.l.b16 %v870
    %v1101 = vunpack.c.h.b16 %v870
    %v1102 = vunpack.c.l.b16 %v871
    %v1103 = vunpack.c.h.b16 %v871
    %v1104 = vunpack.c.l.b16 %v872
    %v1105 = vunpack.c.h.b16 %v872
    %v1106 = vunpack.c.l.b16 %v873
    %v1107 = vunpack.c.h.b16 %v873
    %v1108 = vpack.c.b16 %v988, %v980
    %v1109 = vpack.c.b16 %v989, %v981
    %v1110 = vpack.c.b16 %v990, %v982
    %v1111 = vpack.c.b16 %v991, %v983
    %v1112 = vpack.c.b16 %v992, %v984
    %v1113 = vpack.c.b16 %v993, %v985
    %v1114 = vpack.c.b16 %v994, %v986
    %v1115 = vpack.c.b16 %v995, %v987
    %v1116 = vpack.c.b16 %v1004, %v996
    %v1117 = vpack.c.b16 %v1005, %v997
    %v1118 = vpack.c.b16 %v1006, %v998
    %v1119 = vpack.c.b16 %v1007, %v999
    %v1120 = vpack.c.b16 %v1008, %v1000
    %v1121 = vpack.c.b16 %v1009, %v1001
    %v1122 = vpack.c.b16 %v1010, %v1002
    %v1123 = vpack.c.b16 %v1011, %v1003
    %v1124 = vpack.c.b16 %v1020, %v1012
    %v1125 = vpack.c.b16 %v1021, %v1013
    %v1126 = vpack.c.b16 %v1022, %v1014
    %v1127 = vpack.c.b16 %v1023, %v1015
    %v1128 = vpack.c.b16 %v1024, %v1016
    %v1129 = vpack.c.b16 %v1025, %v1017
    %v1130 = vpack.c.b16 %v1026, %v1018
    %v1131 = vpack.c.b16 %v1027, %v1019
    %v1132 = vpack.c.b16 %v1036, %v1028
    %v1133 = vpack.c.b16 %v1037, %v1029
    %v1134 = vpack.c.b16 %v1038, %v1030
    %v1135 = vpack.c.b16 %v1039, %v1031
    %v1136 = vpack.c.b16 %v1040, %v1032
    %v1137 = vpack.c.b16 %v1041, %v1033
    %v1138 = vpack.c.b16 %v1042, %v1034
    %v1139 = vpack.c.b16 %v1043, %v1035
    %v1140 = vpack.c.b16 %v1052, %v1044
    %v1141 = vpack.c.b16 %v1053, %v1045
    %v1142 = vpack.c.b16 %v1054, %v1046
    %v1143 = vpack.c.b16 %v1055, %v1047
    %v1144 = vpack.c.b16 %v1056, %v1048
    %v1145 = vpack.c.b16 %v1057, %v1049
    %v1146 = vpack.c.b16 %v1058, %v1050
    %v1147 = vpack.c.b16 %v1059, %v1051
    %v1148 = vpack.c.b16 %v1068, %v1060
    %v1149 = vpack.c.b16 %v1069, %v1061
    %v1150 = vpack.c.b16 %v1070, %v1062
    %v1151 = vpack.c.b16 %v1071, %v1063
    %v1152 = vpack.c.b16 %v1072, %v1064
    %v1153 = vpack.c.b16 %v1073, %v1065
    %v1154 = vpack.c.b16 %v1074, %v1066
    %v1155 = vpack.c.b16 %v1075, %v1067
    %v1156 = vpack.c.b16 %v1084, %v1076
    %v1157 = vpack.c.b16 %v1085, %v1077
    %v1158 = vpack.c.b16 %v1086, %v1078
    %v1159 = vpack.c.b16 %v1087, %v1079
    %v1160 = vpack.c.b16 %v1088, %v1080
    %v1161 = vpack.c.b16 %v1089, %v1081
    %v1162 = vpack.c.b16 %v1090, %v1082
    %v1163 = vpack.c.b16 %v1091, %v1083
    %v1164 = vpack.c.b16 %v1100, %v1092
    %v1165 = vpack.c.b16 %v1101, %v1093
    %v1166 = vpack.c.b16 %v1102, %v1094
    %v1167 = vpack.c.b16 %v1103, %v1095
    %v1168 = vpack.c.b16 %v1104, %v1096
    %v1169 = vpack.c.b16 %v1105, %v1097
    %v1170 = vpack.c.b16 %v1106, %v1098
    %v1171 = vpack.c.b16 %v1107, %v1099
    %1236 = vmatprep.subr.bf16.mxu0 %v1109
    %1237 = vmatpush1.bf16.msra.mxu0 %v1108
    %1238 = vmatprep.subr.bf16.mxu0 %v1117
    %1239 = vmatpush1.bf16.msra.mxu0 %v1116
    %1240 = vmatprep.subr.bf16.mxu0 %v1125
    %1241 = vmatpush1.bf16.msra.mxu0 %v1124
    %1242 = vmatprep.subr.bf16.mxu0 %v1133
    %1243 = vmatpush1.bf16.msra.mxu0 %v1132
    %1244 = vmatprep.subr.bf16.mxu0 %v1141
    %1245 = vmatpush1.bf16.msra.mxu0 %v1140
    %1246 = vmatprep.subr.bf16.mxu0 %v1149
    %1247 = vmatpush1.bf16.msra.mxu0 %v1148
    %1248 = vmatprep.subr.bf16.mxu0 %v1157
    %1249 = vmatpush1.bf16.msra.mxu0 %v1156
    %1250 = vmatprep.subr.bf16.mxu0 %v1165
    %1251 = vmatpush1.bf16.msra.mxu0 %v1164
    %1252 = vmatprep.subr.bf16.mxu0 0
    %1253 = vmatpush1.bf16.msra.mxu0 0
    %1254 = vmatprep.subr.bf16.mxu0 0
    %1255 = vmatpush1.bf16.msra.mxu0 0
    %1256 = vmatprep.subr.bf16.mxu0 0
    %1257 = vmatpush1.bf16.msra.mxu0 0
    %1258 = vmatprep.subr.bf16.mxu0 0
    %1259 = vmatpush1.bf16.msra.mxu0 0
    %1260 = vmatprep.subr.bf16.mxu0 0
    %1261 = vmatpush1.bf16.msra.mxu0 0
    %1262 = vmatprep.subr.bf16.mxu0 0
    %1263 = vmatpush1.bf16.msra.mxu0 0
    %1264 = vmatprep.subr.bf16.mxu0 0
    %1265 = vmatpush1.bf16.msra.mxu0 0
    %1266 = vmatprep.subr.bf16.mxu0 0
    %1267 = vmatpush1.bf16.msra.mxu0 0
    %1268 = vmatprep.mubr.bf16.mxu0 0
    %1269 = vmatmul.mubr.bf16.gmra.mrb[0].mxu0 %v809
    %v1270 = vpop.f32.mrb[0].mxu0
    %v1271 = vadd.f32 %v879, %v1270
    %v1272 = vpop.f32.mrb[0].mxu0
    %v1273 = vadd.f32 %v883, %v1272
    %v1274 = vpop.f32.mrb[0].mxu0
    %v1275 = vadd.f32 %v879, %v1274
    %v1276 = vpop.f32.mrb[0].mxu0
    %v1277 = vadd.f32 %v883, %v1276
    %1278 = vdwg.mxu0
    %1279 = vmatprep.subr.bf16.mxu0 %v1111
    %1280 = vmatpush1.bf16.msra.mxu0 %v1110
    %1281 = vmatprep.subr.bf16.mxu0 %v1119
    %1282 = vmatpush1.bf16.msra.mxu0 %v1118
    %1283 = vmatprep.subr.bf16.mxu0 %v1127
    %1284 = vmatpush1.bf16.msra.mxu0 %v1126
    %1285 = vmatprep.subr.bf16.mxu0 %v1135
    %1286 = vmatpush1.bf16.msra.mxu0 %v1134
    %1287 = vmatprep.subr.bf16.mxu0 %v1143
    %1288 = vmatpush1.bf16.msra.mxu0 %v1142
    %1289 = vmatprep.subr.bf16.mxu0 %v1151
    %1290 = vmatpush1.bf16.msra.mxu0 %v1150
    %1291 = vmatprep.subr.bf16.mxu0 %v1159
    %1292 = vmatpush1.bf16.msra.mxu0 %v1158
    %1293 = vmatprep.subr.bf16.mxu0 %v1167
    %1294 = vmatpush1.bf16.msra.mxu0 %v1166
    %1295 = vmatprep.subr.bf16.mxu0 0
    %1296 = vmatpush1.bf16.msra.mxu0 0
    %1297 = vmatprep.subr.bf16.mxu0 0
    %1298 = vmatpush1.bf16.msra.mxu0 0
    %1299 = vmatprep.subr.bf16.mxu0 0
    %1300 = vmatpush1.bf16.msra.mxu0 0
    %1301 = vmatprep.subr.bf16.mxu0 0
    %1302 = vmatpush1.bf16.msra.mxu0 0
    %1303 = vmatprep.subr.bf16.mxu0 0
    %1304 = vmatpush1.bf16.msra.mxu0 0
    %1305 = vmatprep.subr.bf16.mxu0 0
    %1306 = vmatpush1.bf16.msra.mxu0 0
    %1307 = vmatprep.subr.bf16.mxu0 0
    %1308 = vmatpush1.bf16.msra.mxu0 0
    %1309 = vmatprep.subr.bf16.mxu0 0
    %1310 = vmatpush1.bf16.msra.mxu0 0
    %1311 = vmatprep.mubr.bf16.mxu0 0
    %1312 = vmatmul.mubr.bf16.gmra.mrb[0].mxu0 %v809
    %v1313 = vpop.f32.mrb[0].mxu0
    %v1314 = vadd.f32 %v887, %v1313
    %v1315 = vpop.f32.mrb[0].mxu0
    %v1316 = vadd.f32 %v891, %v1315
    %v1317 = vpop.f32.mrb[0].mxu0
    %v1318 = vadd.f32 %v887, %v1317
    %v1319 = vpop.f32.mrb[0].mxu0
    %v1320 = vadd.f32 %v891, %v1319
    %1321 = vdwg.mxu0
    %1322 = vmatprep.subr.bf16.mxu0 %v1113
    %1323 = vmatpush1.bf16.msra.mxu0 %v1112
    %1324 = vmatprep.subr.bf16.mxu0 %v1121
    %1325 = vmatpush1.bf16.msra.mxu0 %v1120
    %1326 = vmatprep.subr.bf16.mxu0 %v1129
    %1327 = vmatpush1.bf16.msra.mxu0 %v1128
    %1328 = vmatprep.subr.bf16.mxu0 %v1137
    %1329 = vmatpush1.bf16.msra.mxu0 %v1136
    %1330 = vmatprep.subr.bf16.mxu0 %v1145
    %1331 = vmatpush1.bf16.msra.mxu0 %v1144
    %1332 = vmatprep.subr.bf16.mxu0 %v1153
    %1333 = vmatpush1.bf16.msra.mxu0 %v1152
    %1334 = vmatprep.subr.bf16.mxu0 %v1161
    %1335 = vmatpush1.bf16.msra.mxu0 %v1160
    %1336 = vmatprep.subr.bf16.mxu0 %v1169
    %1337 = vmatpush1.bf16.msra.mxu0 %v1168
    %1338 = vmatprep.subr.bf16.mxu0 0
    %1339 = vmatpush1.bf16.msra.mxu0 0
    %1340 = vmatprep.subr.bf16.mxu0 0
    %1341 = vmatpush1.bf16.msra.mxu0 0
    %1342 = vmatprep.subr.bf16.mxu0 0
    %1343 = vmatpush1.bf16.msra.mxu0 0
    %1344 = vmatprep.subr.bf16.mxu0 0
    %1345 = vmatpush1.bf16.msra.mxu0 0
    %1346 = vmatprep.subr.bf16.mxu0 0
    %1347 = vmatpush1.bf16.msra.mxu0 0
    %1348 = vmatprep.subr.bf16.mxu0 0
    %1349 = vmatpush1.bf16.msra.mxu0 0
    %1350 = vmatprep.subr.bf16.mxu0 0
    %1351 = vmatpush1.bf16.msra.mxu0 0
    %1352 = vmatprep.subr.bf16.mxu0 0
    %1353 = vmatpush1.bf16.msra.mxu0 0
    %1354 = vmatprep.mubr.bf16.mxu0 0
    %1355 = vmatmul.mubr.bf16.gmra.mrb[0].mxu0 %v809
    %v1356 = vpop.f32.mrb[0].mxu0
    %v1357 = vadd.f32 %v895, %v1356
    %v1358 = vpop.f32.mrb[0].mxu0
    %v1359 = vadd.f32 %v899, %v1358
    %v1360 = vpop.f32.mrb[0].mxu0
    %v1361 = vadd.f32 %v895, %v1360
    %v1362 = vpop.f32.mrb[0].mxu0
    %v1363 = vadd.f32 %v899, %v1362
    %1364 = vdwg.mxu0
    %1365 = vmatprep.subr.bf16.mxu0 %v1115
    %1366 = vmatpush1.bf16.msra.mxu0 %v1114
    %1367 = vmatprep.subr.bf16.mxu0 %v1123
    %1368 = vmatpush1.bf16.msra.mxu0 %v1122
    %1369 = vmatprep.subr.bf16.mxu0 %v1131
    %1370 = vmatpush1.bf16.msra.mxu0 %v1130
    %1371 = vmatprep.subr.bf16.mxu0 %v1139
    %1372 = vmatpush1.bf16.msra.mxu0 %v1138
    %1373 = vmatprep.subr.bf16.mxu0 %v1147
    %1374 = vmatpush1.bf16.msra.mxu0 %v1146
    %1375 = vmatprep.subr.bf16.mxu0 %v1155
    %1376 = vmatpush1.bf16.msra.mxu0 %v1154
    %1377 = vmatprep.subr.bf16.mxu0 %v1163
    %1378 = vmatpush1.bf16.msra.mxu0 %v1162
    %1379 = vmatprep.subr.bf16.mxu0 %v1171
    %1380 = vmatpush1.bf16.msra.mxu0 %v1170
    %1381 = vmatprep.subr.bf16.mxu0 0
    %1382 = vmatpush1.bf16.msra.mxu0 0
    %1383 = vmatprep.subr.bf16.mxu0 0
    %1384 = vmatpush1.bf16.msra.mxu0 0
    %1385 = vmatprep.subr.bf16.mxu0 0
    %1386 = vmatpush1.bf16.msra.mxu0 0
    %1387 = vmatprep.subr.bf16.mxu0 0
    %1388 = vmatpush1.bf16.msra.mxu0 0
    %1389 = vmatprep.subr.bf16.mxu0 0
    %1390 = vmatpush1.bf16.msra.mxu0 0
    %1391 = vmatprep.subr.bf16.mxu0 0
    %1392 = vmatpush1.bf16.msra.mxu0 0
    %1393 = vmatprep.subr.bf16.mxu0 0
    %1394 = vmatpush1.bf16.msra.mxu0 0
    %1395 = vmatprep.subr.bf16.mxu0 0
    %1396 = vmatpush1.bf16.msra.mxu0 0
    %1397 = vmatprep.mubr.bf16.mxu0 0
    %1398 = vmatmul.mubr.bf16.gmra.mrb[0].mxu0 %v809
    %v1399 = vpop.f32.mrb[0].mxu0
    %v1400 = vadd.f32 %v903, %v1399
    %v1401 = vpop.f32.mrb[0].mxu0
    %v1402 = vadd.f32 %v907, %v1401
    %v1403 = vpop.f32.mrb[0].mxu0
    %v1404 = vadd.f32 %v903, %v1403
    %v1405 = vpop.f32.mrb[0].mxu0
    %v1406 = vadd.f32 %v907, %v1405
    %1407 = vdwg.mxu0
    %v1408 = vmax.f32 %v1271, 0.0
    %v1409 = vmax.f32 %v1273, 0.0
    %v1410 = vmax.f32 %v1314, 0.0
    %v1411 = vmax.f32 %v1316, 0.0
    %v1412 = vmax.f32 %v1357, 0.0
    %v1413 = vmax.f32 %v1359, 0.0
    %v1414 = vmax.f32 %v1400, 0.0
    %v1415 = vmax.f32 %v1402, 0.0
    %v1416 = vmax.f32 %v1275, 0.0
    %v1417 = vmax.f32 %v1277, 0.0
    %v1418 = vmax.f32 %v1318, 0.0
    %v1419 = vmax.f32 %v1320, 0.0
    %v1420 = vmax.f32 %v1361, 0.0
    %v1421 = vmax.f32 %v1363, 0.0
    %v1422 = vmax.f32 %v1404, 0.0
    %v1423 = vmax.f32 %v1406, 0.0
    %v1424 = vpack.c.bf16 %v1416, %v1408
    %v1425 = vpack.c.bf16 %v1417, %v1409
    %v1426 = vpack.c.bf16 %v1418, %v1410
    %v1427 = vpack.c.bf16 %v1419, %v1411
    %v1428 = vpack.c.bf16 %v1420, %v1412
    %v1429 = vpack.c.bf16 %v1421, %v1413
    %v1430 = vpack.c.bf16 %v1422, %v1414
    %v1431 = vpack.c.bf16 %v1423, %v1415
    %v1432 = vld [vmem:[#allocation8] sm:$0xff]
    %v1433 = vld [vmem:[#allocation8 + $0x8] sm:$0xff]
    %v1434 = vld [vmem:[#allocation8 + $0x10] sm:$0xff]
    %v1435 = vld [vmem:[#allocation8 + $0x18] sm:$0xff]
    %v1436 = vld [vmem:[#allocation8 + $0x20] sm:$0xff]
    %v1437 = vld [vmem:[#allocation8 + $0x28] sm:$0xff]
    %v1438 = vld [vmem:[#allocation8 + $0x30] sm:$0xff]
    %v1439 = vld [vmem:[#allocation8 + $0x38] sm:$0xff]
    %v1440 = vld [vmem:[#allocation8 + $0x40] sm:$0xff]
    %v1441 = vld [vmem:[#allocation8 + $0x48] sm:$0xff]
    %v1442 = vld [vmem:[#allocation8 + $0x50] sm:$0xff]
    %v1443 = vld [vmem:[#allocation8 + $0x58] sm:$0xff]
    %v1444 = vld [vmem:[#allocation8 + $0x60] sm:$0xff]
    %v1445 = vld [vmem:[#allocation8 + $0x68] sm:$0xff]
    %v1446 = vld [vmem:[#allocation8 + $0x70] sm:$0xff]
    %v1447 = vld [vmem:[#allocation8 + $0x78] sm:$0xff]
    %v1448 = vld [vmem:[#allocation8 + $0x80] sm:$0xff]
    %v1449 = vld [vmem:[#allocation8 + $0x88] sm:$0xff]
    %v1450 = vld [vmem:[#allocation8 + $0x90] sm:$0xff]
    %v1451 = vld [vmem:[#allocation8 + $0x98] sm:$0xff]
    %v1452 = vld [vmem:[#allocation8 + $0xa0] sm:$0xff]
    %v1453 = vld [vmem:[#allocation8 + $0xa8] sm:$0xff]
    %v1454 = vld [vmem:[#allocation8 + $0xb0] sm:$0xff]
    %v1455 = vld [vmem:[#allocation8 + $0xb8] sm:$0xff]
    %v1456 = vld [vmem:[#allocation8 + $0xc0] sm:$0xff]
    %v1457 = vld [vmem:[#allocation8 + $0xc8] sm:$0xff]
    %v1458 = vld [vmem:[#allocation8 + $0xd0] sm:$0xff]
    %v1459 = vld [vmem:[#allocation8 + $0xd8] sm:$0xff]
    %v1460 = vld [vmem:[#allocation8 + $0xe0] sm:$0xff]
    %v1461 = vld [vmem:[#allocation8 + $0xe8] sm:$0xff]
    %v1462 = vld [vmem:[#allocation8 + $0xf0] sm:$0xff]
    %v1463 = vld [vmem:[#allocation8 + $0xf8] sm:$0xff]
    %v1464 = vld [vmem:[#allocation8 + $0x100] sm:$0xff]
    %v1465 = vld [vmem:[#allocation8 + $0x108] sm:$0xff]
    %v1466 = vld [vmem:[#allocation8 + $0x110] sm:$0xff]
    %v1467 = vld [vmem:[#allocation8 + $0x118] sm:$0xff]
    %v1468 = vld [vmem:[#allocation8 + $0x120] sm:$0xff]
    %v1469 = vld [vmem:[#allocation8 + $0x128] sm:$0xff]
    %v1470 = vld [vmem:[#allocation8 + $0x130] sm:$0xff]
    %v1471 = vld [vmem:[#allocation8 + $0x138] sm:$0xff]
    %v1472 = vld [vmem:[#allocation8 + $0x140] sm:$0xff]
    %v1473 = vld [vmem:[#allocation8 + $0x148] sm:$0xff]
    %v1474 = vld [vmem:[#allocation8 + $0x150] sm:$0xff]
    %v1475 = vld [vmem:[#allocation8 + $0x158] sm:$0xff]
    %v1476 = vld [vmem:[#allocation8 + $0x160] sm:$0xff]
    %v1477 = vld [vmem:[#allocation8 + $0x168] sm:$0xff]
    %v1478 = vld [vmem:[#allocation8 + $0x170] sm:$0xff]
    %v1479 = vld [vmem:[#allocation8 + $0x178] sm:$0xff]
    %v1480 = vld [vmem:[#allocation8 + $0x180] sm:$0xff]
    %v1481 = vld [vmem:[#allocation8 + $0x188] sm:$0xff]
    %v1482 = vld [vmem:[#allocation8 + $0x190] sm:$0xff]
    %v1483 = vld [vmem:[#allocation8 + $0x198] sm:$0xff]
    %v1484 = vld [vmem:[#allocation8 + $0x1a0] sm:$0xff]
    %v1485 = vld [vmem:[#allocation8 + $0x1a8] sm:$0xff]
    %v1486 = vld [vmem:[#allocation8 + $0x1b0] sm:$0xff]
    %v1487 = vld [vmem:[#allocation8 + $0x1b8] sm:$0xff]
    %v1488 = vld [vmem:[#allocation8 + $0x1c0] sm:$0xff]
    %v1489 = vld [vmem:[#allocation8 + $0x1c8] sm:$0xff]
    %v1490 = vld [vmem:[#allocation8 + $0x1d0] sm:$0xff]
    %v1491 = vld [vmem:[#allocation8 + $0x1d8] sm:$0xff]
    %v1492 = vld [vmem:[#allocation8 + $0x1e0] sm:$0xff]
    %v1493 = vld [vmem:[#allocation8 + $0x1e8] sm:$0xff]
    %v1494 = vld [vmem:[#allocation8 + $0x1f0] sm:$0xff]
    %v1495 = vld [vmem:[#allocation8 + $0x1f8] sm:$0xff]
    %v1496 = vld [vmem:[#allocation8 + $0x200] sm:$0xff]
    %v1497 = vld [vmem:[#allocation8 + $0x208] sm:$0xff]
    %v1498 = vld [vmem:[#allocation8 + $0x210] sm:$0xff]
    %v1499 = vld [vmem:[#allocation8 + $0x218] sm:$0xff]
    %v1500 = vld [vmem:[#allocation8 + $0x220] sm:$0xff]
    %v1501 = vld [vmem:[#allocation8 + $0x228] sm:$0xff]
    %v1502 = vld [vmem:[#allocation8 + $0x230] sm:$0xff]
    %v1503 = vld [vmem:[#allocation8 + $0x238] sm:$0xff]
    %v1504 = vld [vmem:[#allocation8 + $0x240] sm:$0xff]
    %v1505 = vld [vmem:[#allocation8 + $0x248] sm:$0xff]
    %v1506 = vld [vmem:[#allocation8 + $0x250] sm:$0xff]
    %v1507 = vld [vmem:[#allocation8 + $0x258] sm:$0xff]
    %v1508 = vld [vmem:[#allocation8 + $0x260] sm:$0xff]
    %v1509 = vld [vmem:[#allocation8 + $0x268] sm:$0xff]
    %v1510 = vld [vmem:[#allocation8 + $0x270] sm:$0xff]
    %v1511 = vld [vmem:[#allocation8 + $0x278] sm:$0xff]
    %v1512 = vld [vmem:[#allocation8 + $0x280] sm:$0xff]
    %v1513 = vld [vmem:[#allocation8 + $0x288] sm:$0xff]
    %v1514 = vld [vmem:[#allocation8 + $0x290] sm:$0xff]
    %v1515 = vld [vmem:[#allocation8 + $0x298] sm:$0xff]
    %v1516 = vld [vmem:[#allocation8 + $0x2a0] sm:$0xff]
    %v1517 = vld [vmem:[#allocation8 + $0x2a8] sm:$0xff]
    %v1518 = vld [vmem:[#allocation8 + $0x2b0] sm:$0xff]
    %v1519 = vld [vmem:[#allocation8 + $0x2b8] sm:$0xff]
    %v1520 = vld [vmem:[#allocation8 + $0x2c0] sm:$0xff]
    %v1521 = vld [vmem:[#allocation8 + $0x2c8] sm:$0xff]
    %v1522 = vld [vmem:[#allocation8 + $0x2d0] sm:$0xff]
    %v1523 = vld [vmem:[#allocation8 + $0x2d8] sm:$0xff]
    %v1524 = vld [vmem:[#allocation8 + $0x2e0] sm:$0xff]
    %v1525 = vld [vmem:[#allocation8 + $0x2e8] sm:$0xff]
    %v1526 = vld [vmem:[#allocation8 + $0x2f0] sm:$0xff]
    %v1527 = vld [vmem:[#allocation8 + $0x2f8] sm:$0xff]
    %v1528 = vld [vmem:[#allocation8 + $0x300] sm:$0xff]
    %v1529 = vld [vmem:[#allocation8 + $0x308] sm:$0xff]
    %v1530 = vld [vmem:[#allocation8 + $0x310] sm:$0xff]
    %v1531 = vld [vmem:[#allocation8 + $0x318] sm:$0xff]
    %v1532 = vld [vmem:[#allocation8 + $0x320] sm:$0xff]
    %v1533 = vld [vmem:[#allocation8 + $0x328] sm:$0xff]
    %v1534 = vld [vmem:[#allocation8 + $0x330] sm:$0xff]
    %v1535 = vld [vmem:[#allocation8 + $0x338] sm:$0xff]
    %v1536 = vld [vmem:[#allocation8 + $0x340] sm:$0xff]
    %v1537 = vld [vmem:[#allocation8 + $0x348] sm:$0xff]
    %v1538 = vld [vmem:[#allocation8 + $0x350] sm:$0xff]
    %v1539 = vld [vmem:[#allocation8 + $0x358] sm:$0xff]
    %v1540 = vld [vmem:[#allocation8 + $0x360] sm:$0xff]
    %v1541 = vld [vmem:[#allocation8 + $0x368] sm:$0xff]
    %v1542 = vld [vmem:[#allocation8 + $0x370] sm:$0xff]
    %v1543 = vld [vmem:[#allocation8 + $0x378] sm:$0xff]
    %v1544 = vld [vmem:[#allocation8 + $0x380] sm:$0xff]
    %v1545 = vld [vmem:[#allocation8 + $0x388] sm:$0xff]
    %v1546 = vld [vmem:[#allocation8 + $0x390] sm:$0xff]
    %v1547 = vld [vmem:[#allocation8 + $0x398] sm:$0xff]
    %v1548 = vld [vmem:[#allocation8 + $0x3a0] sm:$0xff]
    %v1549 = vld [vmem:[#allocation8 + $0x3a8] sm:$0xff]
    %v1550 = vld [vmem:[#allocation8 + $0x3b0] sm:$0xff]
    %v1551 = vld [vmem:[#allocation8 + $0x3b8] sm:$0xff]
    %v1552 = vld [vmem:[#allocation8 + $0x3c0] sm:$0xff]
    %v1553 = vld [vmem:[#allocation8 + $0x3c8] sm:$0xff]
    %v1554 = vld [vmem:[#allocation8 + $0x3d0] sm:$0xff]
    %v1555 = vld [vmem:[#allocation8 + $0x3d8] sm:$0xff]
    %v1556 = vld [vmem:[#allocation8 + $0x3e0] sm:$0xff]
    %v1557 = vld [vmem:[#allocation8 + $0x3e8] sm:$0xff]
    %v1558 = vld [vmem:[#allocation8 + $0x3f0] sm:$0xff]
    %v1559 = vld [vmem:[#allocation8 + $0x3f8] sm:$0xff]
    %v1560 = vld [vmem:[#allocation8 + $0x400] sm:$0xff]
    %v1561 = vld [vmem:[#allocation8 + $0x408] sm:$0xff]
    %v1562 = vld [vmem:[#allocation8 + $0x410] sm:$0xff]
    %v1563 = vld [vmem:[#allocation8 + $0x418] sm:$0xff]
    %v1564 = vld [vmem:[#allocation8 + $0x420] sm:$0xff]
    %v1565 = vld [vmem:[#allocation8 + $0x428] sm:$0xff]
    %v1566 = vld [vmem:[#allocation8 + $0x430] sm:$0xff]
    %v1567 = vld [vmem:[#allocation8 + $0x438] sm:$0xff]
    %v1568 = vld [vmem:[#allocation8 + $0x440] sm:$0xff]
    %v1569 = vld [vmem:[#allocation8 + $0x448] sm:$0xff]
    %v1570 = vld [vmem:[#allocation8 + $0x450] sm:$0xff]
    %v1571 = vld [vmem:[#allocation8 + $0x458] sm:$0xff]
    %v1572 = vld [vmem:[#allocation8 + $0x460] sm:$0xff]
    %v1573 = vld [vmem:[#allocation8 + $0x468] sm:$0xff]
    %v1574 = vld [vmem:[#allocation8 + $0x470] sm:$0xff]
    %v1575 = vld [vmem:[#allocation8 + $0x478] sm:$0xff]
    %v1576 = vld [vmem:[#allocation8 + $0x480] sm:$0xff]
    %v1577 = vld [vmem:[#allocation8 + $0x488] sm:$0xff]
    %v1578 = vld [vmem:[#allocation8 + $0x490] sm:$0xff]
    %v1579 = vld [vmem:[#allocation8 + $0x498] sm:$0xff]
    %v1580 = vld [vmem:[#allocation8 + $0x4a0] sm:$0xff]
    %v1581 = vld [vmem:[#allocation8 + $0x4a8] sm:$0xff]
    %v1582 = vld [vmem:[#allocation8 + $0x4b0] sm:$0xff]
    %v1583 = vld [vmem:[#allocation8 + $0x4b8] sm:$0xff]
    %v1584 = vld [vmem:[#allocation8 + $0x4c0] sm:$0xff]
    %v1585 = vld [vmem:[#allocation8 + $0x4c8] sm:$0xff]
    %v1586 = vld [vmem:[#allocation8 + $0x4d0] sm:$0xff]
    %v1587 = vld [vmem:[#allocation8 + $0x4d8] sm:$0xff]
    %v1588 = vld [vmem:[#allocation8 + $0x4e0] sm:$0xff]
    %v1589 = vld [vmem:[#allocation8 + $0x4e8] sm:$0xff]
    %v1590 = vld [vmem:[#allocation8 + $0x4f0] sm:$0xff]
    %v1591 = vld [vmem:[#allocation8 + $0x4f8] sm:$0xff]
    %v1592 = vld [vmem:[#allocation8 + $0x500] sm:$0xff]
    %v1593 = vld [vmem:[#allocation8 + $0x508] sm:$0xff]
    %v1594 = vld [vmem:[#allocation8 + $0x510] sm:$0xff]
    %v1595 = vld [vmem:[#allocation8 + $0x518] sm:$0xff]
    %v1596 = vld [vmem:[#allocation8 + $0x520] sm:$0xff]
    %v1597 = vld [vmem:[#allocation8 + $0x528] sm:$0xff]
    %v1598 = vld [vmem:[#allocation8 + $0x530] sm:$0xff]
    %v1599 = vld [vmem:[#allocation8 + $0x538] sm:$0xff]
    %v1600 = vld [vmem:[#allocation8 + $0x540] sm:$0xff]
    %v1601 = vld [vmem:[#allocation8 + $0x548] sm:$0xff]
    %v1602 = vld [vmem:[#allocation8 + $0x550] sm:$0xff]
    %v1603 = vld [vmem:[#allocation8 + $0x558] sm:$0xff]
    %v1604 = vld [vmem:[#allocation8 + $0x560] sm:$0xff]
    %v1605 = vld [vmem:[#allocation8 + $0x568] sm:$0xff]
    %v1606 = vld [vmem:[#allocation8 + $0x570] sm:$0xff]
    %v1607 = vld [vmem:[#allocation8 + $0x578] sm:$0xff]
    %v1608 = vld [vmem:[#allocation8 + $0x580] sm:$0xff]
    %v1609 = vld [vmem:[#allocation8 + $0x588] sm:$0xff]
    %v1610 = vld [vmem:[#allocation8 + $0x590] sm:$0xff]
    %v1611 = vld [vmem:[#allocation8 + $0x598] sm:$0xff]
    %v1612 = vld [vmem:[#allocation8 + $0x5a0] sm:$0xff]
    %v1613 = vld [vmem:[#allocation8 + $0x5a8] sm:$0xff]
    %v1614 = vld [vmem:[#allocation8 + $0x5b0] sm:$0xff]
    %v1615 = vld [vmem:[#allocation8 + $0x5b8] sm:$0xff]
    %v1616 = vld [vmem:[#allocation8 + $0x5c0] sm:$0xff]
    %v1617 = vld [vmem:[#allocation8 + $0x5c8] sm:$0xff]
    %v1618 = vld [vmem:[#allocation8 + $0x5d0] sm:$0xff]
    %v1619 = vld [vmem:[#allocation8 + $0x5d8] sm:$0xff]
    %v1620 = vld [vmem:[#allocation8 + $0x5e0] sm:$0xff]
    %v1621 = vld [vmem:[#allocation8 + $0x5e8] sm:$0xff]
    %v1622 = vld [vmem:[#allocation8 + $0x5f0] sm:$0xff]
    %v1623 = vld [vmem:[#allocation8 + $0x5f8] sm:$0xff]
    %v1624 = vld [vmem:[#allocation8 + $0x600] sm:$0xff]
    %v1625 = vld [vmem:[#allocation8 + $0x608] sm:$0xff]
    %v1626 = vld [vmem:[#allocation8 + $0x610] sm:$0xff]
    %v1627 = vld [vmem:[#allocation8 + $0x618] sm:$0xff]
    %v1628 = vld [vmem:[#allocation8 + $0x620] sm:$0xff]
    %v1629 = vld [vmem:[#allocation8 + $0x628] sm:$0xff]
    %v1630 = vld [vmem:[#allocation8 + $0x630] sm:$0xff]
    %v1631 = vld [vmem:[#allocation8 + $0x638] sm:$0xff]
    %v1632 = vld [vmem:[#allocation8 + $0x640] sm:$0xff]
    %v1633 = vld [vmem:[#allocation8 + $0x648] sm:$0xff]
    %v1634 = vld [vmem:[#allocation8 + $0x650] sm:$0xff]
    %v1635 = vld [vmem:[#allocation8 + $0x658] sm:$0xff]
    %v1636 = vld [vmem:[#allocation8 + $0x660] sm:$0xff]
    %v1637 = vld [vmem:[#allocation8 + $0x668] sm:$0xff]
    %v1638 = vld [vmem:[#allocation8 + $0x670] sm:$0xff]
    %v1639 = vld [vmem:[#allocation8 + $0x678] sm:$0xff]
    %v1640 = vld [vmem:[#allocation8 + $0x680] sm:$0xff]
    %v1641 = vld [vmem:[#allocation8 + $0x688] sm:$0xff]
    %v1642 = vld [vmem:[#allocation8 + $0x690] sm:$0xff]
    %v1643 = vld [vmem:[#allocation8 + $0x698] sm:$0xff]
    %v1644 = vld [vmem:[#allocation8 + $0x6a0] sm:$0xff]
    %v1645 = vld [vmem:[#allocation8 + $0x6a8] sm:$0xff]
    %v1646 = vld [vmem:[#allocation8 + $0x6b0] sm:$0xff]
    %v1647 = vld [vmem:[#allocation8 + $0x6b8] sm:$0xff]
    %v1648 = vld [vmem:[#allocation8 + $0x6c0] sm:$0xff]
    %v1649 = vld [vmem:[#allocation8 + $0x6c8] sm:$0xff]
    %v1650 = vld [vmem:[#allocation8 + $0x6d0] sm:$0xff]
    %v1651 = vld [vmem:[#allocation8 + $0x6d8] sm:$0xff]
    %v1652 = vld [vmem:[#allocation8 + $0x6e0] sm:$0xff]
    %v1653 = vld [vmem:[#allocation8 + $0x6e8] sm:$0xff]
    %v1654 = vld [vmem:[#allocation8 + $0x6f0] sm:$0xff]
    %v1655 = vld [vmem:[#allocation8 + $0x6f8] sm:$0xff]
    %v1656 = vld [vmem:[#allocation8 + $0x700] sm:$0xff]
    %v1657 = vld [vmem:[#allocation8 + $0x708] sm:$0xff]
    %v1658 = vld [vmem:[#allocation8 + $0x710] sm:$0xff]
    %v1659 = vld [vmem:[#allocation8 + $0x718] sm:$0xff]
    %v1660 = vld [vmem:[#allocation8 + $0x720] sm:$0xff]
    %v1661 = vld [vmem:[#allocation8 + $0x728] sm:$0xff]
    %v1662 = vld [vmem:[#allocation8 + $0x730] sm:$0xff]
    %v1663 = vld [vmem:[#allocation8 + $0x738] sm:$0xff]
    %v1664 = vld [vmem:[#allocation8 + $0x740] sm:$0xff]
    %v1665 = vld [vmem:[#allocation8 + $0x748] sm:$0xff]
    %v1666 = vld [vmem:[#allocation8 + $0x750] sm:$0xff]
    %v1667 = vld [vmem:[#allocation8 + $0x758] sm:$0xff]
    %v1668 = vld [vmem:[#allocation8 + $0x760] sm:$0xff]
    %v1669 = vld [vmem:[#allocation8 + $0x768] sm:$0xff]
    %v1670 = vld [vmem:[#allocation8 + $0x770] sm:$0xff]
    %v1671 = vld [vmem:[#allocation8 + $0x778] sm:$0xff]
    %v1672 = vld [vmem:[#allocation8 + $0x780] sm:$0xff]
    %v1673 = vld [vmem:[#allocation8 + $0x788] sm:$0xff]
    %v1674 = vld [vmem:[#allocation8 + $0x790] sm:$0xff]
    %v1675 = vld [vmem:[#allocation8 + $0x798] sm:$0xff]
    %v1676 = vld [vmem:[#allocation8 + $0x7a0] sm:$0xff]
    %v1677 = vld [vmem:[#allocation8 + $0x7a8] sm:$0xff]
    %v1678 = vld [vmem:[#allocation8 + $0x7b0] sm:$0xff]
    %v1679 = vld [vmem:[#allocation8 + $0x7b8] sm:$0xff]
    %v1680 = vld [vmem:[#allocation8 + $0x7c0] sm:$0xff]
    %v1681 = vld [vmem:[#allocation8 + $0x7c8] sm:$0xff]
    %v1682 = vld [vmem:[#allocation8 + $0x7d0] sm:$0xff]
    %v1683 = vld [vmem:[#allocation8 + $0x7d8] sm:$0xff]
    %v1684 = vld [vmem:[#allocation8 + $0x7e0] sm:$0xff]
    %v1685 = vld [vmem:[#allocation8 + $0x7e8] sm:$0xff]
    %v1686 = vld [vmem:[#allocation8 + $0x7f0] sm:$0xff]
    %v1687 = vld [vmem:[#allocation8 + $0x7f8] sm:$0xff]
    %v1688 = vld [vmem:[%s6] sm:$0xf]
    %v1690 = vlaneseq
    %v1691 = vshrl.u32 %v1690, 7
    %v1692 = vsub.s32 0, %v1691
    %v1693 = vrot.slane %v1688, %v1692
    %v1694 = vlaneseq
    %v1695 = vshrl.u32 %v1694, 7
    %v1696 = vsub.s32 1, %v1695
    %v1697 = vrot.slane %v1688, %v1696
    %v1698 = vlaneseq
    %v1699 = vshrl.u32 %v1698, 7
    %v1700 = vsub.s32 2, %v1699
    %v1701 = vrot.slane %v1688, %v1700
    %v1702 = vlaneseq
    %v1703 = vshrl.u32 %v1702, 7
    %v1704 = vsub.s32 3, %v1703
    %v1705 = vrot.slane %v1688, %v1704
    %v1966 = vunpack.c.l.b16 %v1432
    %v1967 = vunpack.c.h.b16 %v1432
    %v1968 = vunpack.c.l.b16 %v1433
    %v1969 = vunpack.c.h.b16 %v1433
    %v1970 = vunpack.c.l.b16 %v1434
    %v1971 = vunpack.c.h.b16 %v1434
    %v1972 = vunpack.c.l.b16 %v1435
    %v1973 = vunpack.c.h.b16 %v1435
    %v1974 = vunpack.c.l.b16 %v1436
    %v1975 = vunpack.c.h.b16 %v1436
    %v1976 = vunpack.c.l.b16 %v1437
    %v1977 = vunpack.c.h.b16 %v1437
    %v1978 = vunpack.c.l.b16 %v1438
    %v1979 = vunpack.c.h.b16 %v1438
    %v1980 = vunpack.c.l.b16 %v1439
    %v1981 = vunpack.c.h.b16 %v1439
    %v1982 = vunpack.c.l.b16 %v1440
    %v1983 = vunpack.c.h.b16 %v1440
    %v1984 = vunpack.c.l.b16 %v1441
    %v1985 = vunpack.c.h.b16 %v1441
    %v1986 = vunpack.c.l.b16 %v1442
    %v1987 = vunpack.c.h.b16 %v1442
    %v1988 = vunpack.c.l.b16 %v1443
    %v1989 = vunpack.c.h.b16 %v1443
    %v1990 = vunpack.c.l.b16 %v1444
    %v1991 = vunpack.c.h.b16 %v1444
    %v1992 = vunpack.c.l.b16 %v1445
    %v1993 = vunpack.c.h.b16 %v1445
    %v1994 = vunpack.c.l.b16 %v1446
    %v1995 = vunpack.c.h.b16 %v1446
    %v1996 = vunpack.c.l.b16 %v1447
    %v1997 = vunpack.c.h.b16 %v1447
    %v1998 = vunpack.c.l.b16 %v1448
    %v1999 = vunpack.c.h.b16 %v1448
    %v2000 = vunpack.c.l.b16 %v1449
    %v2001 = vunpack.c.h.b16 %v1449
    %v2002 = vunpack.c.l.b16 %v1450
    %v2003 = vunpack.c.h.b16 %v1450
    %v2004 = vunpack.c.l.b16 %v1451
    %v2005 = vunpack.c.h.b16 %v1451
    %v2006 = vunpack.c.l.b16 %v1452
    %v2007 = vunpack.c.h.b16 %v1452
    %v2008 = vunpack.c.l.b16 %v1453
    %v2009 = vunpack.c.h.b16 %v1453
    %v2010 = vunpack.c.l.b16 %v1454
    %v2011 = vunpack.c.h.b16 %v1454
    %v2012 = vunpack.c.l.b16 %v1455
    %v2013 = vunpack.c.h.b16 %v1455
    %v2014 = vunpack.c.l.b16 %v1456
    %v2015 = vunpack.c.h.b16 %v1456
    %v2016 = vunpack.c.l.b16 %v1457
    %v2017 = vunpack.c.h.b16 %v1457
    %v2018 = vunpack.c.l.b16 %v1458
    %v2019 = vunpack.c.h.b16 %v1458
    %v2020 = vunpack.c.l.b16 %v1459
    %v2021 = vunpack.c.h.b16 %v1459
    %v2022 = vunpack.c.l.b16 %v1460
    %v2023 = vunpack.c.h.b16 %v1460
    %v2024 = vunpack.c.l.b16 %v1461
    %v2025 = vunpack.c.h.b16 %v1461
    %v2026 = vunpack.c.l.b16 %v1462
    %v2027 = vunpack.c.h.b16 %v1462
    %v2028 = vunpack.c.l.b16 %v1463
    %v2029 = vunpack.c.h.b16 %v1463
    %v2030 = vunpack.c.l.b16 %v1464
    %v2031 = vunpack.c.h.b16 %v1464
    %v2032 = vunpack.c.l.b16 %v1465
    %v2033 = vunpack.c.h.b16 %v1465
    %v2034 = vunpack.c.l.b16 %v1466
    %v2035 = vunpack.c.h.b16 %v1466
    %v2036 = vunpack.c.l.b16 %v1467
    %v2037 = vunpack.c.h.b16 %v1467
    %v2038 = vunpack.c.l.b16 %v1468
    %v2039 = vunpack.c.h.b16 %v1468
    %v2040 = vunpack.c.l.b16 %v1469
    %v2041 = vunpack.c.h.b16 %v1469
    %v2042 = vunpack.c.l.b16 %v1470
    %v2043 = vunpack.c.h.b16 %v1470
    %v2044 = vunpack.c.l.b16 %v1471
    %v2045 = vunpack.c.h.b16 %v1471
    %v2046 = vunpack.c.l.b16 %v1472
    %v2047 = vunpack.c.h.b16 %v1472
    %v2048 = vunpack.c.l.b16 %v1473
    %v2049 = vunpack.c.h.b16 %v1473
    %v2050 = vunpack.c.l.b16 %v1474
    %v2051 = vunpack.c.h.b16 %v1474
    %v2052 = vunpack.c.l.b16 %v1475
    %v2053 = vunpack.c.h.b16 %v1475
    %v2054 = vunpack.c.l.b16 %v1476
    %v2055 = vunpack.c.h.b16 %v1476
    %v2056 = vunpack.c.l.b16 %v1477
    %v2057 = vunpack.c.h.b16 %v1477
    %v2058 = vunpack.c.l.b16 %v1478
    %v2059 = vunpack.c.h.b16 %v1478
    %v2060 = vunpack.c.l.b16 %v1479
    %v2061 = vunpack.c.h.b16 %v1479
    %v2062 = vunpack.c.l.b16 %v1480
    %v2063 = vunpack.c.h.b16 %v1480
    %v2064 = vunpack.c.l.b16 %v1481
    %v2065 = vunpack.c.h.b16 %v1481
    %v2066 = vunpack.c.l.b16 %v1482
    %v2067 = vunpack.c.h.b16 %v1482
    %v2068 = vunpack.c.l.b16 %v1483
    %v2069 = vunpack.c.h.b16 %v1483
    %v2070 = vunpack.c.l.b16 %v1484
    %v2071 = vunpack.c.h.b16 %v1484
    %v2072 = vunpack.c.l.b16 %v1485
    %v2073 = vunpack.c.h.b16 %v1485
    %v2074 = vunpack.c.l.b16 %v1486
    %v2075 = vunpack.c.h.b16 %v1486
    %v2076 = vunpack.c.l.b16 %v1487
    %v2077 = vunpack.c.h.b16 %v1487
    %v2078 = vunpack.c.l.b16 %v1488
    %v2079 = vunpack.c.h.b16 %v1488
    %v2080 = vunpack.c.l.b16 %v1489
    %v2081 = vunpack.c.h.b16 %v1489
    %v2082 = vunpack.c.l.b16 %v1490
    %v2083 = vunpack.c.h.b16 %v1490
    %v2084 = vunpack.c.l.b16 %v1491
    %v2085 = vunpack.c.h.b16 %v1491
    %v2086 = vunpack.c.l.b16 %v1492
    %v2087 = vunpack.c.h.b16 %v1492
    %v2088 = vunpack.c.l.b16 %v1493
    %v2089 = vunpack.c.h.b16 %v1493
    %v2090 = vunpack.c.l.b16 %v1494
    %v2091 = vunpack.c.h.b16 %v1494
    %v2092 = vunpack.c.l.b16 %v1495
    %v2093 = vunpack.c.h.b16 %v1495
    %v2094 = vunpack.c.l.b16 %v1496
    %v2095 = vunpack.c.h.b16 %v1496
    %v2096 = vunpack.c.l.b16 %v1497
    %v2097 = vunpack.c.h.b16 %v1497
    %v2098 = vunpack.c.l.b16 %v1498
    %v2099 = vunpack.c.h.b16 %v1498
    %v2100 = vunpack.c.l.b16 %v1499
    %v2101 = vunpack.c.h.b16 %v1499
    %v2102 = vunpack.c.l.b16 %v1500
    %v2103 = vunpack.c.h.b16 %v1500
    %v2104 = vunpack.c.l.b16 %v1501
    %v2105 = vunpack.c.h.b16 %v1501
    %v2106 = vunpack.c.l.b16 %v1502
    %v2107 = vunpack.c.h.b16 %v1502
    %v2108 = vunpack.c.l.b16 %v1503
    %v2109 = vunpack.c.h.b16 %v1503
    %v2110 = vunpack.c.l.b16 %v1504
    %v2111 = vunpack.c.h.b16 %v1504
    %v2112 = vunpack.c.l.b16 %v1505
    %v2113 = vunpack.c.h.b16 %v1505
    %v2114 = vunpack.c.l.b16 %v1506
    %v2115 = vunpack.c.h.b16 %v1506
    %v2116 = vunpack.c.l.b16 %v1507
    %v2117 = vunpack.c.h.b16 %v1507
    %v2118 = vunpack.c.l.b16 %v1508
    %v2119 = vunpack.c.h.b16 %v1508
    %v2120 = vunpack.c.l.b16 %v1509
    %v2121 = vunpack.c.h.b16 %v1509
    %v2122 = vunpack.c.l.b16 %v1510
    %v2123 = vunpack.c.h.b16 %v1510
    %v2124 = vunpack.c.l.b16 %v1511
    %v2125 = vunpack.c.h.b16 %v1511
    %v2126 = vunpack.c.l.b16 %v1512
    %v2127 = vunpack.c.h.b16 %v1512
    %v2128 = vunpack.c.l.b16 %v1513
    %v2129 = vunpack.c.h.b16 %v1513
    %v2130 = vunpack.c.l.b16 %v1514
    %v2131 = vunpack.c.h.b16 %v1514
    %v2132 = vunpack.c.l.b16 %v1515
    %v2133 = vunpack.c.h.b16 %v1515
    %v2134 = vunpack.c.l.b16 %v1516
    %v2135 = vunpack.c.h.b16 %v1516
    %v2136 = vunpack.c.l.b16 %v1517
    %v2137 = vunpack.c.h.b16 %v1517
    %v2138 = vunpack.c.l.b16 %v1518
    %v2139 = vunpack.c.h.b16 %v1518
    %v2140 = vunpack.c.l.b16 %v1519
    %v2141 = vunpack.c.h.b16 %v1519
    %v2142 = vunpack.c.l.b16 %v1520
    %v2143 = vunpack.c.h.b16 %v1520
    %v2144 = vunpack.c.l.b16 %v1521
    %v2145 = vunpack.c.h.b16 %v1521
    %v2146 = vunpack.c.l.b16 %v1522
    %v2147 = vunpack.c.h.b16 %v1522
    %v2148 = vunpack.c.l.b16 %v1523
    %v2149 = vunpack.c.h.b16 %v1523
    %v2150 = vunpack.c.l.b16 %v1524
    %v2151 = vunpack.c.h.b16 %v1524
    %v2152 = vunpack.c.l.b16 %v1525
    %v2153 = vunpack.c.h.b16 %v1525
    %v2154 = vunpack.c.l.b16 %v1526
    %v2155 = vunpack.c.h.b16 %v1526
    %v2156 = vunpack.c.l.b16 %v1527
    %v2157 = vunpack.c.h.b16 %v1527
    %v2158 = vunpack.c.l.b16 %v1528
    %v2159 = vunpack.c.h.b16 %v1528
    %v2160 = vunpack.c.l.b16 %v1529
    %v2161 = vunpack.c.h.b16 %v1529
    %v2162 = vunpack.c.l.b16 %v1530
    %v2163 = vunpack.c.h.b16 %v1530
    %v2164 = vunpack.c.l.b16 %v1531
    %v2165 = vunpack.c.h.b16 %v1531
    %v2166 = vunpack.c.l.b16 %v1532
    %v2167 = vunpack.c.h.b16 %v1532
    %v2168 = vunpack.c.l.b16 %v1533
    %v2169 = vunpack.c.h.b16 %v1533
    %v2170 = vunpack.c.l.b16 %v1534
    %v2171 = vunpack.c.h.b16 %v1534
    %v2172 = vunpack.c.l.b16 %v1535
    %v2173 = vunpack.c.h.b16 %v1535
    %v2174 = vunpack.c.l.b16 %v1536
    %v2175 = vunpack.c.h.b16 %v1536
    %v2176 = vunpack.c.l.b16 %v1537
    %v2177 = vunpack.c.h.b16 %v1537
    %v2178 = vunpack.c.l.b16 %v1538
    %v2179 = vunpack.c.h.b16 %v1538
    %v2180 = vunpack.c.l.b16 %v1539
    %v2181 = vunpack.c.h.b16 %v1539
    %v2182 = vunpack.c.l.b16 %v1540
    %v2183 = vunpack.c.h.b16 %v1540
    %v2184 = vunpack.c.l.b16 %v1541
    %v2185 = vunpack.c.h.b16 %v1541
    %v2186 = vunpack.c.l.b16 %v1542
    %v2187 = vunpack.c.h.b16 %v1542
    %v2188 = vunpack.c.l.b16 %v1543
    %v2189 = vunpack.c.h.b16 %v1543
    %v2190 = vunpack.c.l.b16 %v1544
    %v2191 = vunpack.c.h.b16 %v1544
    %v2192 = vunpack.c.l.b16 %v1545
    %v2193 = vunpack.c.h.b16 %v1545
    %v2194 = vunpack.c.l.b16 %v1546
    %v2195 = vunpack.c.h.b16 %v1546
    %v2196 = vunpack.c.l.b16 %v1547
    %v2197 = vunpack.c.h.b16 %v1547
    %v2198 = vunpack.c.l.b16 %v1548
    %v2199 = vunpack.c.h.b16 %v1548
    %v2200 = vunpack.c.l.b16 %v1549
    %v2201 = vunpack.c.h.b16 %v1549
    %v2202 = vunpack.c.l.b16 %v1550
    %v2203 = vunpack.c.h.b16 %v1550
    %v2204 = vunpack.c.l.b16 %v1551
    %v2205 = vunpack.c.h.b16 %v1551
    %v2206 = vunpack.c.l.b16 %v1552
    %v2207 = vunpack.c.h.b16 %v1552
    %v2208 = vunpack.c.l.b16 %v1553
    %v2209 = vunpack.c.h.b16 %v1553
    %v2210 = vunpack.c.l.b16 %v1554
    %v2211 = vunpack.c.h.b16 %v1554
    %v2212 = vunpack.c.l.b16 %v1555
    %v2213 = vunpack.c.h.b16 %v1555
    %v2214 = vunpack.c.l.b16 %v1556
    %v2215 = vunpack.c.h.b16 %v1556
    %v2216 = vunpack.c.l.b16 %v1557
    %v2217 = vunpack.c.h.b16 %v1557
    %v2218 = vunpack.c.l.b16 %v1558
    %v2219 = vunpack.c.h.b16 %v1558
    %v2220 = vunpack.c.l.b16 %v1559
    %v2221 = vunpack.c.h.b16 %v1559
    %v2222 = vunpack.c.l.b16 %v1560
    %v2223 = vunpack.c.h.b16 %v1560
    %v2224 = vunpack.c.l.b16 %v1561
    %v2225 = vunpack.c.h.b16 %v1561
    %v2226 = vunpack.c.l.b16 %v1562
    %v2227 = vunpack.c.h.b16 %v1562
    %v2228 = vunpack.c.l.b16 %v1563
    %v2229 = vunpack.c.h.b16 %v1563
    %v2230 = vunpack.c.l.b16 %v1564
    %v2231 = vunpack.c.h.b16 %v1564
    %v2232 = vunpack.c.l.b16 %v1565
    %v2233 = vunpack.c.h.b16 %v1565
    %v2234 = vunpack.c.l.b16 %v1566
    %v2235 = vunpack.c.h.b16 %v1566
    %v2236 = vunpack.c.l.b16 %v1567
    %v2237 = vunpack.c.h.b16 %v1567
    %v2238 = vunpack.c.l.b16 %v1568
    %v2239 = vunpack.c.h.b16 %v1568
    %v2240 = vunpack.c.l.b16 %v1569
    %v2241 = vunpack.c.h.b16 %v1569
    %v2242 = vunpack.c.l.b16 %v1570
    %v2243 = vunpack.c.h.b16 %v1570
    %v2244 = vunpack.c.l.b16 %v1571
    %v2245 = vunpack.c.h.b16 %v1571
    %v2246 = vunpack.c.l.b16 %v1572
    %v2247 = vunpack.c.h.b16 %v1572
    %v2248 = vunpack.c.l.b16 %v1573
    %v2249 = vunpack.c.h.b16 %v1573
    %v2250 = vunpack.c.l.b16 %v1574
    %v2251 = vunpack.c.h.b16 %v1574
    %v2252 = vunpack.c.l.b16 %v1575
    %v2253 = vunpack.c.h.b16 %v1575
    %v2254 = vunpack.c.l.b16 %v1576
    %v2255 = vunpack.c.h.b16 %v1576
    %v2256 = vunpack.c.l.b16 %v1577
    %v2257 = vunpack.c.h.b16 %v1577
    %v2258 = vunpack.c.l.b16 %v1578
    %v2259 = vunpack.c.h.b16 %v1578
    %v2260 = vunpack.c.l.b16 %v1579
    %v2261 = vunpack.c.h.b16 %v1579
    %v2262 = vunpack.c.l.b16 %v1580
    %v2263 = vunpack.c.h.b16 %v1580
    %v2264 = vunpack.c.l.b16 %v1581
    %v2265 = vunpack.c.h.b16 %v1581
    %v2266 = vunpack.c.l.b16 %v1582
    %v2267 = vunpack.c.h.b16 %v1582
    %v2268 = vunpack.c.l.b16 %v1583
    %v2269 = vunpack.c.h.b16 %v1583
    %v2270 = vunpack.c.l.b16 %v1584
    %v2271 = vunpack.c.h.b16 %v1584
    %v2272 = vunpack.c.l.b16 %v1585
    %v2273 = vunpack.c.h.b16 %v1585
    %v2274 = vunpack.c.l.b16 %v1586
    %v2275 = vunpack.c.h.b16 %v1586
    %v2276 = vunpack.c.l.b16 %v1587
    %v2277 = vunpack.c.h.b16 %v1587
    %v2278 = vunpack.c.l.b16 %v1588
    %v2279 = vunpack.c.h.b16 %v1588
    %v2280 = vunpack.c.l.b16 %v1589
    %v2281 = vunpack.c.h.b16 %v1589
    %v2282 = vunpack.c.l.b16 %v1590
    %v2283 = vunpack.c.h.b16 %v1590
    %v2284 = vunpack.c.l.b16 %v1591
    %v2285 = vunpack.c.h.b16 %v1591
    %v2286 = vunpack.c.l.b16 %v1592
    %v2287 = vunpack.c.h.b16 %v1592
    %v2288 = vunpack.c.l.b16 %v1593
    %v2289 = vunpack.c.h.b16 %v1593
    %v2290 = vunpack.c.l.b16 %v1594
    %v2291 = vunpack.c.h.b16 %v1594
    %v2292 = vunpack.c.l.b16 %v1595
    %v2293 = vunpack.c.h.b16 %v1595
    %v2294 = vunpack.c.l.b16 %v1596
    %v2295 = vunpack.c.h.b16 %v1596
    %v2296 = vunpack.c.l.b16 %v1597
    %v2297 = vunpack.c.h.b16 %v1597
    %v2298 = vunpack.c.l.b16 %v1598
    %v2299 = vunpack.c.h.b16 %v1598
    %v2300 = vunpack.c.l.b16 %v1599
    %v2301 = vunpack.c.h.b16 %v1599
    %v2302 = vunpack.c.l.b16 %v1600
    %v2303 = vunpack.c.h.b16 %v1600
    %v2304 = vunpack.c.l.b16 %v1601
    %v2305 = vunpack.c.h.b16 %v1601
    %v2306 = vunpack.c.l.b16 %v1602
    %v2307 = vunpack.c.h.b16 %v1602
    %v2308 = vunpack.c.l.b16 %v1603
    %v2309 = vunpack.c.h.b16 %v1603
    %v2310 = vunpack.c.l.b16 %v1604
    %v2311 = vunpack.c.h.b16 %v1604
    %v2312 = vunpack.c.l.b16 %v1605
    %v2313 = vunpack.c.h.b16 %v1605
    %v2314 = vunpack.c.l.b16 %v1606
    %v2315 = vunpack.c.h.b16 %v1606
    %v2316 = vunpack.c.l.b16 %v1607
    %v2317 = vunpack.c.h.b16 %v1607
    %v2318 = vunpack.c.l.b16 %v1608
    %v2319 = vunpack.c.h.b16 %v1608
    %v2320 = vunpack.c.l.b16 %v1609
    %v2321 = vunpack.c.h.b16 %v1609
    %v2322 = vunpack.c.l.b16 %v1610
    %v2323 = vunpack.c.h.b16 %v1610
    %v2324 = vunpack.c.l.b16 %v1611
    %v2325 = vunpack.c.h.b16 %v1611
    %v2326 = vunpack.c.l.b16 %v1612
    %v2327 = vunpack.c.h.b16 %v1612
    %v2328 = vunpack.c.l.b16 %v1613
    %v2329 = vunpack.c.h.b16 %v1613
    %v2330 = vunpack.c.l.b16 %v1614
    %v2331 = vunpack.c.h.b16 %v1614
    %v2332 = vunpack.c.l.b16 %v1615
    %v2333 = vunpack.c.h.b16 %v1615
    %v2334 = vunpack.c.l.b16 %v1616
    %v2335 = vunpack.c.h.b16 %v1616
    %v2336 = vunpack.c.l.b16 %v1617
    %v2337 = vunpack.c.h.b16 %v1617
    %v2338 = vunpack.c.l.b16 %v1618
    %v2339 = vunpack.c.h.b16 %v1618
    %v2340 = vunpack.c.l.b16 %v1619
    %v2341 = vunpack.c.h.b16 %v1619
    %v2342 = vunpack.c.l.b16 %v1620
    %v2343 = vunpack.c.h.b16 %v1620
    %v2344 = vunpack.c.l.b16 %v1621
    %v2345 = vunpack.c.h.b16 %v1621
    %v2346 = vunpack.c.l.b16 %v1622
    %v2347 = vunpack.c.h.b16 %v1622
    %v2348 = vunpack.c.l.b16 %v1623
    %v2349 = vunpack.c.h.b16 %v1623
    %v2350 = vunpack.c.l.b16 %v1624
    %v2351 = vunpack.c.h.b16 %v1624
    %v2352 = vunpack.c.l.b16 %v1625
    %v2353 = vunpack.c.h.b16 %v1625
    %v2354 = vunpack.c.l.b16 %v1626
    %v2355 = vunpack.c.h.b16 %v1626
    %v2356 = vunpack.c.l.b16 %v1627
    %v2357 = vunpack.c.h.b16 %v1627
    %v2358 = vunpack.c.l.b16 %v1628
    %v2359 = vunpack.c.h.b16 %v1628
    %v2360 = vunpack.c.l.b16 %v1629
    %v2361 = vunpack.c.h.b16 %v1629
    %v2362 = vunpack.c.l.b16 %v1630
    %v2363 = vunpack.c.h.b16 %v1630
    %v2364 = vunpack.c.l.b16 %v1631
    %v2365 = vunpack.c.h.b16 %v1631
    %v2366 = vunpack.c.l.b16 %v1632
    %v2367 = vunpack.c.h.b16 %v1632
    %v2368 = vunpack.c.l.b16 %v1633
    %v2369 = vunpack.c.h.b16 %v1633
    %v2370 = vunpack.c.l.b16 %v1634
    %v2371 = vunpack.c.h.b16 %v1634
    %v2372 = vunpack.c.l.b16 %v1635
    %v2373 = vunpack.c.h.b16 %v1635
    %v2374 = vunpack.c.l.b16 %v1636
    %v2375 = vunpack.c.h.b16 %v1636
    %v2376 = vunpack.c.l.b16 %v1637
    %v2377 = vunpack.c.h.b16 %v1637
    %v2378 = vunpack.c.l.b16 %v1638
    %v2379 = vunpack.c.h.b16 %v1638
    %v2380 = vunpack.c.l.b16 %v1639
    %v2381 = vunpack.c.h.b16 %v1639
    %v2382 = vunpack.c.l.b16 %v1640
    %v2383 = vunpack.c.h.b16 %v1640
    %v2384 = vunpack.c.l.b16 %v1641
    %v2385 = vunpack.c.h.b16 %v1641
    %v2386 = vunpack.c.l.b16 %v1642
    %v2387 = vunpack.c.h.b16 %v1642
    %v2388 = vunpack.c.l.b16 %v1643
    %v2389 = vunpack.c.h.b16 %v1643
    %v2390 = vunpack.c.l.b16 %v1644
    %v2391 = vunpack.c.h.b16 %v1644
    %v2392 = vunpack.c.l.b16 %v1645
    %v2393 = vunpack.c.h.b16 %v1645
    %v2394 = vunpack.c.l.b16 %v1646
    %v2395 = vunpack.c.h.b16 %v1646
    %v2396 = vunpack.c.l.b16 %v1647
    %v2397 = vunpack.c.h.b16 %v1647
    %v2398 = vunpack.c.l.b16 %v1648
    %v2399 = vunpack.c.h.b16 %v1648
    %v2400 = vunpack.c.l.b16 %v1649
    %v2401 = vunpack.c.h.b16 %v1649
    %v2402 = vunpack.c.l.b16 %v1650
    %v2403 = vunpack.c.h.b16 %v1650
    %v2404 = vunpack.c.l.b16 %v1651
    %v2405 = vunpack.c.h.b16 %v1651
    %v2406 = vunpack.c.l.b16 %v1652
    %v2407 = vunpack.c.h.b16 %v1652
    %v2408 = vunpack.c.l.b16 %v1653
    %v2409 = vunpack.c.h.b16 %v1653
    %v2410 = vunpack.c.l.b16 %v1654
    %v2411 = vunpack.c.h.b16 %v1654
    %v2412 = vunpack.c.l.b16 %v1655
    %v2413 = vunpack.c.h.b16 %v1655
    %v2414 = vunpack.c.l.b16 %v1656
    %v2415 = vunpack.c.h.b16 %v1656
    %v2416 = vunpack.c.l.b16 %v1657
    %v2417 = vunpack.c.h.b16 %v1657
    %v2418 = vunpack.c.l.b16 %v1658
    %v2419 = vunpack.c.h.b16 %v1658
    %v2420 = vunpack.c.l.b16 %v1659
    %v2421 = vunpack.c.h.b16 %v1659
    %v2422 = vunpack.c.l.b16 %v1660
    %v2423 = vunpack.c.h.b16 %v1660
    %v2424 = vunpack.c.l.b16 %v1661
    %v2425 = vunpack.c.h.b16 %v1661
    %v2426 = vunpack.c.l.b16 %v1662
    %v2427 = vunpack.c.h.b16 %v1662
    %v2428 = vunpack.c.l.b16 %v1663
    %v2429 = vunpack.c.h.b16 %v1663
    %v2430 = vunpack.c.l.b16 %v1664
    %v2431 = vunpack.c.h.b16 %v1664
    %v2432 = vunpack.c.l.b16 %v1665
    %v2433 = vunpack.c.h.b16 %v1665
    %v2434 = vunpack.c.l.b16 %v1666
    %v2435 = vunpack.c.h.b16 %v1666
    %v2436 = vunpack.c.l.b16 %v1667
    %v2437 = vunpack.c.h.b16 %v1667
    %v2438 = vunpack.c.l.b16 %v1668
    %v2439 = vunpack.c.h.b16 %v1668
    %v2440 = vunpack.c.l.b16 %v1669
    %v2441 = vunpack.c.h.b16 %v1669
    %v2442 = vunpack.c.l.b16 %v1670
    %v2443 = vunpack.c.h.b16 %v1670
    %v2444 = vunpack.c.l.b16 %v1671
    %v2445 = vunpack.c.h.b16 %v1671
    %v2446 = vunpack.c.l.b16 %v1672
    %v2447 = vunpack.c.h.b16 %v1672
    %v2448 = vunpack.c.l.b16 %v1673
    %v2449 = vunpack.c.h.b16 %v1673
    %v2450 = vunpack.c.l.b16 %v1674
    %v2451 = vunpack.c.h.b16 %v1674
    %v2452 = vunpack.c.l.b16 %v1675
    %v2453 = vunpack.c.h.b16 %v1675
    %v2454 = vunpack.c.l.b16 %v1676
    %v2455 = vunpack.c.h.b16 %v1676
    %v2456 = vunpack.c.l.b16 %v1677
    %v2457 = vunpack.c.h.b16 %v1677
    %v2458 = vunpack.c.l.b16 %v1678
    %v2459 = vunpack.c.h.b16 %v1678
    %v2460 = vunpack.c.l.b16 %v1679
    %v2461 = vunpack.c.h.b16 %v1679
    %v2462 = vunpack.c.l.b16 %v1680
    %v2463 = vunpack.c.h.b16 %v1680
    %v2464 = vunpack.c.l.b16 %v1681
    %v2465 = vunpack.c.h.b16 %v1681
    %v2466 = vunpack.c.l.b16 %v1682
    %v2467 = vunpack.c.h.b16 %v1682
    %v2468 = vunpack.c.l.b16 %v1683
    %v2469 = vunpack.c.h.b16 %v1683
    %v2470 = vunpack.c.l.b16 %v1684
    %v2471 = vunpack.c.h.b16 %v1684
    %v2472 = vunpack.c.l.b16 %v1685
    %v2473 = vunpack.c.h.b16 %v1685
    %v2474 = vunpack.c.l.b16 %v1686
    %v2475 = vunpack.c.h.b16 %v1686
    %v2476 = vunpack.c.l.b16 %v1687
    %v2477 = vunpack.c.h.b16 %v1687
    %v2478 = vpack.c.b16 %v1970, %v1966
    %v2479 = vpack.c.b16 %v1971, %v1967
    %v2480 = vpack.c.b16 %v1972, %v1968
    %v2481 = vpack.c.b16 %v1973, %v1969
    %v2482 = vpack.c.b16 %v1978, %v1974
    %v2483 = vpack.c.b16 %v1979, %v1975
    %v2484 = vpack.c.b16 %v1980, %v1976
    %v2485 = vpack.c.b16 %v1981, %v1977
    %v2486 = vpack.c.b16 %v1986, %v1982
    %v2487 = vpack.c.b16 %v1987, %v1983
    %v2488 = vpack.c.b16 %v1988, %v1984
    %v2489 = vpack.c.b16 %v1989, %v1985
    %v2490 = vpack.c.b16 %v1994, %v1990
    %v2491 = vpack.c.b16 %v1995, %v1991
    %v2492 = vpack.c.b16 %v1996, %v1992
    %v2493 = vpack.c.b16 %v1997, %v1993
    %v2494 = vpack.c.b16 %v2002, %v1998
    %v2495 = vpack.c.b16 %v2003, %v1999
    %v2496 = vpack.c.b16 %v2004, %v2000
    %v2497 = vpack.c.b16 %v2005, %v2001
    %v2498 = vpack.c.b16 %v2010, %v2006
    %v2499 = vpack.c.b16 %v2011, %v2007
    %v2500 = vpack.c.b16 %v2012, %v2008
    %v2501 = vpack.c.b16 %v2013, %v2009
    %v2502 = vpack.c.b16 %v2018, %v2014
    %v2503 = vpack.c.b16 %v2019, %v2015
    %v2504 = vpack.c.b16 %v2020, %v2016
    %v2505 = vpack.c.b16 %v2021, %v2017
    %v2506 = vpack.c.b16 %v2026, %v2022
    %v2507 = vpack.c.b16 %v2027, %v2023
    %v2508 = vpack.c.b16 %v2028, %v2024
    %v2509 = vpack.c.b16 %v2029, %v2025
    %v2510 = vpack.c.b16 %v2034, %v2030
    %v2511 = vpack.c.b16 %v2035, %v2031
    %v2512 = vpack.c.b16 %v2036, %v2032
    %v2513 = vpack.c.b16 %v2037, %v2033
    %v2514 = vpack.c.b16 %v2042, %v2038
    %v2515 = vpack.c.b16 %v2043, %v2039
    %v2516 = vpack.c.b16 %v2044, %v2040
    %v2517 = vpack.c.b16 %v2045, %v2041
    %v2518 = vpack.c.b16 %v2050, %v2046
    %v2519 = vpack.c.b16 %v2051, %v2047
    %v2520 = vpack.c.b16 %v2052, %v2048
    %v2521 = vpack.c.b16 %v2053, %v2049
    %v2522 = vpack.c.b16 %v2058, %v2054
    %v2523 = vpack.c.b16 %v2059, %v2055
    %v2524 = vpack.c.b16 %v2060, %v2056
    %v2525 = vpack.c.b16 %v2061, %v2057
    %v2526 = vpack.c.b16 %v2066, %v2062
    %v2527 = vpack.c.b16 %v2067, %v2063
    %v2528 = vpack.c.b16 %v2068, %v2064
    %v2529 = vpack.c.b16 %v2069, %v2065
    %v2530 = vpack.c.b16 %v2074, %v2070
    %v2531 = vpack.c.b16 %v2075, %v2071
    %v2532 = vpack.c.b16 %v2076, %v2072
    %v2533 = vpack.c.b16 %v2077, %v2073
    %v2534 = vpack.c.b16 %v2082, %v2078
    %v2535 = vpack.c.b16 %v2083, %v2079
    %v2536 = vpack.c.b16 %v2084, %v2080
    %v2537 = vpack.c.b16 %v2085, %v2081
    %v2538 = vpack.c.b16 %v2090, %v2086
    %v2539 = vpack.c.b16 %v2091, %v2087
    %v2540 = vpack.c.b16 %v2092, %v2088
    %v2541 = vpack.c.b16 %v2093, %v2089
    %v2542 = vpack.c.b16 %v2098, %v2094
    %v2543 = vpack.c.b16 %v2099, %v2095
    %v2544 = vpack.c.b16 %v2100, %v2096
    %v2545 = vpack.c.b16 %v2101, %v2097
    %v2546 = vpack.c.b16 %v2106, %v2102
    %v2547 = vpack.c.b16 %v2107, %v2103
    %v2548 = vpack.c.b16 %v2108, %v2104
    %v2549 = vpack.c.b16 %v2109, %v2105
    %v2550 = vpack.c.b16 %v2114, %v2110
    %v2551 = vpack.c.b16 %v2115, %v2111
    %v2552 = vpack.c.b16 %v2116, %v2112
    %v2553 = vpack.c.b16 %v2117, %v2113
    %v2554 = vpack.c.b16 %v2122, %v2118
    %v2555 = vpack.c.b16 %v2123, %v2119
    %v2556 = vpack.c.b16 %v2124, %v2120
    %v2557 = vpack.c.b16 %v2125, %v2121
    %v2558 = vpack.c.b16 %v2130, %v2126
    %v2559 = vpack.c.b16 %v2131, %v2127
    %v2560 = vpack.c.b16 %v2132, %v2128
    %v2561 = vpack.c.b16 %v2133, %v2129
    %v2562 = vpack.c.b16 %v2138, %v2134
    %v2563 = vpack.c.b16 %v2139, %v2135
    %v2564 = vpack.c.b16 %v2140, %v2136
    %v2565 = vpack.c.b16 %v2141, %v2137
    %v2566 = vpack.c.b16 %v2146, %v2142
    %v2567 = vpack.c.b16 %v2147, %v2143
    %v2568 = vpack.c.b16 %v2148, %v2144
    %v2569 = vpack.c.b16 %v2149, %v2145
    %v2570 = vpack.c.b16 %v2154, %v2150
    %v2571 = vpack.c.b16 %v2155, %v2151
    %v2572 = vpack.c.b16 %v2156, %v2152
    %v2573 = vpack.c.b16 %v2157, %v2153
    %v2574 = vpack.c.b16 %v2162, %v2158
    %v2575 = vpack.c.b16 %v2163, %v2159
    %v2576 = vpack.c.b16 %v2164, %v2160
    %v2577 = vpack.c.b16 %v2165, %v2161
    %v2578 = vpack.c.b16 %v2170, %v2166
    %v2579 = vpack.c.b16 %v2171, %v2167
    %v2580 = vpack.c.b16 %v2172, %v2168
    %v2581 = vpack.c.b16 %v2173, %v2169
    %v2582 = vpack.c.b16 %v2178, %v2174
    %v2583 = vpack.c.b16 %v2179, %v2175
    %v2584 = vpack.c.b16 %v2180, %v2176
    %v2585 = vpack.c.b16 %v2181, %v2177
    %v2586 = vpack.c.b16 %v2186, %v2182
    %v2587 = vpack.c.b16 %v2187, %v2183
    %v2588 = vpack.c.b16 %v2188, %v2184
    %v2589 = vpack.c.b16 %v2189, %v2185
    %v2590 = vpack.c.b16 %v2194, %v2190
    %v2591 = vpack.c.b16 %v2195, %v2191
    %v2592 = vpack.c.b16 %v2196, %v2192
    %v2593 = vpack.c.b16 %v2197, %v2193
    %v2594 = vpack.c.b16 %v2202, %v2198
    %v2595 = vpack.c.b16 %v2203, %v2199
    %v2596 = vpack.c.b16 %v2204, %v2200
    %v2597 = vpack.c.b16 %v2205, %v2201
    %v2598 = vpack.c.b16 %v2210, %v2206
    %v2599 = vpack.c.b16 %v2211, %v2207
    %v2600 = vpack.c.b16 %v2212, %v2208
    %v2601 = vpack.c.b16 %v2213, %v2209
    %v2602 = vpack.c.b16 %v2218, %v2214
    %v2603 = vpack.c.b16 %v2219, %v2215
    %v2604 = vpack.c.b16 %v2220, %v2216
    %v2605 = vpack.c.b16 %v2221, %v2217
    %v2606 = vpack.c.b16 %v2226, %v2222
    %v2607 = vpack.c.b16 %v2227, %v2223
    %v2608 = vpack.c.b16 %v2228, %v2224
    %v2609 = vpack.c.b16 %v2229, %v2225
    %v2610 = vpack.c.b16 %v2234, %v2230
    %v2611 = vpack.c.b16 %v2235, %v2231
    %v2612 = vpack.c.b16 %v2236, %v2232
    %v2613 = vpack.c.b16 %v2237, %v2233
    %v2614 = vpack.c.b16 %v2242, %v2238
    %v2615 = vpack.c.b16 %v2243, %v2239
    %v2616 = vpack.c.b16 %v2244, %v2240
    %v2617 = vpack.c.b16 %v2245, %v2241
    %v2618 = vpack.c.b16 %v2250, %v2246
    %v2619 = vpack.c.b16 %v2251, %v2247
    %v2620 = vpack.c.b16 %v2252, %v2248
    %v2621 = vpack.c.b16 %v2253, %v2249
    %v2622 = vpack.c.b16 %v2258, %v2254
    %v2623 = vpack.c.b16 %v2259, %v2255
    %v2624 = vpack.c.b16 %v2260, %v2256
    %v2625 = vpack.c.b16 %v2261, %v2257
    %v2626 = vpack.c.b16 %v2266, %v2262
    %v2627 = vpack.c.b16 %v2267, %v2263
    %v2628 = vpack.c.b16 %v2268, %v2264
    %v2629 = vpack.c.b16 %v2269, %v2265
    %v2630 = vpack.c.b16 %v2274, %v2270
    %v2631 = vpack.c.b16 %v2275, %v2271
    %v2632 = vpack.c.b16 %v2276, %v2272
    %v2633 = vpack.c.b16 %v2277, %v2273
    %v2634 = vpack.c.b16 %v2282, %v2278
    %v2635 = vpack.c.b16 %v2283, %v2279
    %v2636 = vpack.c.b16 %v2284, %v2280
    %v2637 = vpack.c.b16 %v2285, %v2281
    %v2638 = vpack.c.b16 %v2290, %v2286
    %v2639 = vpack.c.b16 %v2291, %v2287
    %v2640 = vpack.c.b16 %v2292, %v2288
    %v2641 = vpack.c.b16 %v2293, %v2289
    %v2642 = vpack.c.b16 %v2298, %v2294
    %v2643 = vpack.c.b16 %v2299, %v2295
    %v2644 = vpack.c.b16 %v2300, %v2296
    %v2645 = vpack.c.b16 %v2301, %v2297
    %v2646 = vpack.c.b16 %v2306, %v2302
    %v2647 = vpack.c.b16 %v2307, %v2303
    %v2648 = vpack.c.b16 %v2308, %v2304
    %v2649 = vpack.c.b16 %v2309, %v2305
    %v2650 = vpack.c.b16 %v2314, %v2310
    %v2651 = vpack.c.b16 %v2315, %v2311
    %v2652 = vpack.c.b16 %v2316, %v2312
    %v2653 = vpack.c.b16 %v2317, %v2313
    %v2654 = vpack.c.b16 %v2322, %v2318
    %v2655 = vpack.c.b16 %v2323, %v2319
    %v2656 = vpack.c.b16 %v2324, %v2320
    %v2657 = vpack.c.b16 %v2325, %v2321
    %v2658 = vpack.c.b16 %v2330, %v2326
    %v2659 = vpack.c.b16 %v2331, %v2327
    %v2660 = vpack.c.b16 %v2332, %v2328
    %v2661 = vpack.c.b16 %v2333, %v2329
    %v2662 = vpack.c.b16 %v2338, %v2334
    %v2663 = vpack.c.b16 %v2339, %v2335
    %v2664 = vpack.c.b16 %v2340, %v2336
    %v2665 = vpack.c.b16 %v2341, %v2337
    %v2666 = vpack.c.b16 %v2346, %v2342
    %v2667 = vpack.c.b16 %v2347, %v2343
    %v2668 = vpack.c.b16 %v2348, %v2344
    %v2669 = vpack.c.b16 %v2349, %v2345
    %v2670 = vpack.c.b16 %v2354, %v2350
    %v2671 = vpack.c.b16 %v2355, %v2351
    %v2672 = vpack.c.b16 %v2356, %v2352
    %v2673 = vpack.c.b16 %v2357, %v2353
    %v2674 = vpack.c.b16 %v2362, %v2358
    %v2675 = vpack.c.b16 %v2363, %v2359
    %v2676 = vpack.c.b16 %v2364, %v2360
    %v2677 = vpack.c.b16 %v2365, %v2361
    %v2678 = vpack.c.b16 %v2370, %v2366
    %v2679 = vpack.c.b16 %v2371, %v2367
    %v2680 = vpack.c.b16 %v2372, %v2368
    %v2681 = vpack.c.b16 %v2373, %v2369
    %v2682 = vpack.c.b16 %v2378, %v2374
    %v2683 = vpack.c.b16 %v2379, %v2375
    %v2684 = vpack.c.b16 %v2380, %v2376
    %v2685 = vpack.c.b16 %v2381, %v2377
    %v2686 = vpack.c.b16 %v2386, %v2382
    %v2687 = vpack.c.b16 %v2387, %v2383
    %v2688 = vpack.c.b16 %v2388, %v2384
    %v2689 = vpack.c.b16 %v2389, %v2385
    %v2690 = vpack.c.b16 %v2394, %v2390
    %v2691 = vpack.c.b16 %v2395, %v2391
    %v2692 = vpack.c.b16 %v2396, %v2392
    %v2693 = vpack.c.b16 %v2397, %v2393
    %v2694 = vpack.c.b16 %v2402, %v2398
    %v2695 = vpack.c.b16 %v2403, %v2399
    %v2696 = vpack.c.b16 %v2404, %v2400
    %v2697 = vpack.c.b16 %v2405, %v2401
    %v2698 = vpack.c.b16 %v2410, %v2406
    %v2699 = vpack.c.b16 %v2411, %v2407
    %v2700 = vpack.c.b16 %v2412, %v2408
    %v2701 = vpack.c.b16 %v2413, %v2409
    %v2702 = vpack.c.b16 %v2418, %v2414
    %v2703 = vpack.c.b16 %v2419, %v2415
    %v2704 = vpack.c.b16 %v2420, %v2416
    %v2705 = vpack.c.b16 %v2421, %v2417
    %v2706 = vpack.c.b16 %v2426, %v2422
    %v2707 = vpack.c.b16 %v2427, %v2423
    %v2708 = vpack.c.b16 %v2428, %v2424
    %v2709 = vpack.c.b16 %v2429, %v2425
    %v2710 = vpack.c.b16 %v2434, %v2430
    %v2711 = vpack.c.b16 %v2435, %v2431
    %v2712 = vpack.c.b16 %v2436, %v2432
    %v2713 = vpack.c.b16 %v2437, %v2433
    %v2714 = vpack.c.b16 %v2442, %v2438
    %v2715 = vpack.c.b16 %v2443, %v2439
    %v2716 = vpack.c.b16 %v2444, %v2440
    %v2717 = vpack.c.b16 %v2445, %v2441
    %v2718 = vpack.c.b16 %v2450, %v2446
    %v2719 = vpack.c.b16 %v2451, %v2447
    %v2720 = vpack.c.b16 %v2452, %v2448
    %v2721 = vpack.c.b16 %v2453, %v2449
    %v2722 = vpack.c.b16 %v2458, %v2454
    %v2723 = vpack.c.b16 %v2459, %v2455
    %v2724 = vpack.c.b16 %v2460, %v2456
    %v2725 = vpack.c.b16 %v2461, %v2457
    %v2726 = vpack.c.b16 %v2466, %v2462
    %v2727 = vpack.c.b16 %v2467, %v2463
    %v2728 = vpack.c.b16 %v2468, %v2464
    %v2729 = vpack.c.b16 %v2469, %v2465
    %v2730 = vpack.c.b16 %v2474, %v2470
    %v2731 = vpack.c.b16 %v2475, %v2471
    %v2732 = vpack.c.b16 %v2476, %v2472
    %v2733 = vpack.c.b16 %v2477, %v2473
    %2990 = vmatprep.subr.bf16.mxu0 %v2479
    %2991 = vmatpush1.bf16.msra.mxu0 %v2478
    %2992 = vmatprep.subr.bf16.mxu0 %v2483
    %2993 = vmatpush1.bf16.msra.mxu0 %v2482
    %2994 = vmatprep.subr.bf16.mxu0 %v2487
    %2995 = vmatpush1.bf16.msra.mxu0 %v2486
    %2996 = vmatprep.subr.bf16.mxu0 %v2491
    %2997 = vmatpush1.bf16.msra.mxu0 %v2490
    %2998 = vmatprep.subr.bf16.mxu0 %v2495
    %2999 = vmatpush1.bf16.msra.mxu0 %v2494
    %3000 = vmatprep.subr.bf16.mxu0 %v2499
    %3001 = vmatpush1.bf16.msra.mxu0 %v2498
    %3002 = vmatprep.subr.bf16.mxu0 %v2503
    %3003 = vmatpush1.bf16.msra.mxu0 %v2502
    %3004 = vmatprep.subr.bf16.mxu0 %v2507
    %3005 = vmatpush1.bf16.msra.mxu0 %v2506
    %3006 = vmatprep.subr.bf16.mxu0 %v2511
    %3007 = vmatpush1.bf16.msra.mxu0 %v2510
    %3008 = vmatprep.subr.bf16.mxu0 %v2515
    %3009 = vmatpush1.bf16.msra.mxu0 %v2514
    %3010 = vmatprep.subr.bf16.mxu0 %v2519
    %3011 = vmatpush1.bf16.msra.mxu0 %v2518
    %3012 = vmatprep.subr.bf16.mxu0 %v2523
    %3013 = vmatpush1.bf16.msra.mxu0 %v2522
    %3014 = vmatprep.subr.bf16.mxu0 %v2527
    %3015 = vmatpush1.bf16.msra.mxu0 %v2526
    %3016 = vmatprep.subr.bf16.mxu0 %v2531
    %3017 = vmatpush1.bf16.msra.mxu0 %v2530
    %3018 = vmatprep.subr.bf16.mxu0 %v2535
    %3019 = vmatpush1.bf16.msra.mxu0 %v2534
    %3020 = vmatprep.subr.bf16.mxu0 %v2539
    %3021 = vmatpush1.bf16.msra.mxu0 %v2538
    %3022 = vmatprep.mubr.bf16.mxu0 %v1425
    %3023 = vmatmul.mubr.bf16.gmra.mrb[0].mxu0 %v1424
    %v3024 = vpop.f32.mrb[0].mxu0
    %v3025 = vadd.f32 %v1693, %v3024
    %v3026 = vpop.f32.mrb[0].mxu0
    %v3027 = vadd.f32 %v1697, %v3026
    %v3028 = vpop.f32.mrb[0].mxu0
    %v3029 = vadd.f32 %v1693, %v3028
    %v3030 = vpop.f32.mrb[0].mxu0
    %v3031 = vadd.f32 %v1697, %v3030
    %3032 = vdwg.mxu0
    %3033 = vmatprep.subr.bf16.mxu0 %v2543
    %3034 = vmatpush1.bf16.msra.mxu0 %v2542
    %3035 = vmatprep.subr.bf16.mxu0 %v2547
    %3036 = vmatpush1.bf16.msra.mxu0 %v2546
    %3037 = vmatprep.subr.bf16.mxu0 %v2551
    %3038 = vmatpush1.bf16.msra.mxu0 %v2550
    %3039 = vmatprep.subr.bf16.mxu0 %v2555
    %3040 = vmatpush1.bf16.msra.mxu0 %v2554
    %3041 = vmatprep.subr.bf16.mxu0 %v2559
    %3042 = vmatpush1.bf16.msra.mxu0 %v2558
    %3043 = vmatprep.subr.bf16.mxu0 %v2563
    %3044 = vmatpush1.bf16.msra.mxu0 %v2562
    %3045 = vmatprep.subr.bf16.mxu0 %v2567
    %3046 = vmatpush1.bf16.msra.mxu0 %v2566
    %3047 = vmatprep.subr.bf16.mxu0 %v2571
    %3048 = vmatpush1.bf16.msra.mxu0 %v2570
    %3049 = vmatprep.subr.bf16.mxu0 %v2575
    %3050 = vmatpush1.bf16.msra.mxu0 %v2574
    %3051 = vmatprep.subr.bf16.mxu0 %v2579
    %3052 = vmatpush1.bf16.msra.mxu0 %v2578
    %3053 = vmatprep.subr.bf16.mxu0 %v2583
    %3054 = vmatpush1.bf16.msra.mxu0 %v2582
    %3055 = vmatprep.subr.bf16.mxu0 %v2587
    %3056 = vmatpush1.bf16.msra.mxu0 %v2586
    %3057 = vmatprep.subr.bf16.mxu0 %v2591
    %3058 = vmatpush1.bf16.msra.mxu0 %v2590
    %3059 = vmatprep.subr.bf16.mxu0 %v2595
    %3060 = vmatpush1.bf16.msra.mxu0 %v2594
    %3061 = vmatprep.subr.bf16.mxu0 %v2599
    %3062 = vmatpush1.bf16.msra.mxu0 %v2598
    %3063 = vmatprep.subr.bf16.mxu0 %v2603
    %3064 = vmatpush1.bf16.msra.mxu0 %v2602
    %3065 = vmatprep.mubr.bf16.mxu0 %v1427
    %3066 = vmatmul.mubr.bf16.gmra.mrb[0].mxu0 %v1426
    %v3067 = vpop.f32.mrb[0].mxu0
    %v3068 = vadd.f32 %v3025, %v3067
    %v3069 = vpop.f32.mrb[0].mxu0
    %v3070 = vadd.f32 %v3027, %v3069
    %v3071 = vpop.f32.mrb[0].mxu0
    %v3072 = vadd.f32 %v3029, %v3071
    %v3073 = vpop.f32.mrb[0].mxu0
    %v3074 = vadd.f32 %v3031, %v3073
    %3075 = vdwg.mxu0
    %3076 = vmatprep.subr.bf16.mxu0 %v2607
    %3077 = vmatpush1.bf16.msra.mxu0 %v2606
    %3078 = vmatprep.subr.bf16.mxu0 %v2611
    %3079 = vmatpush1.bf16.msra.mxu0 %v2610
    %3080 = vmatprep.subr.bf16.mxu0 %v2615
    %3081 = vmatpush1.bf16.msra.mxu0 %v2614
    %3082 = vmatprep.subr.bf16.mxu0 %v2619
    %3083 = vmatpush1.bf16.msra.mxu0 %v2618
    %3084 = vmatprep.subr.bf16.mxu0 %v2623
    %3085 = vmatpush1.bf16.msra.mxu0 %v2622
    %3086 = vmatprep.subr.bf16.mxu0 %v2627
    %3087 = vmatpush1.bf16.msra.mxu0 %v2626
    %3088 = vmatprep.subr.bf16.mxu0 %v2631
    %3089 = vmatpush1.bf16.msra.mxu0 %v2630
    %3090 = vmatprep.subr.bf16.mxu0 %v2635
    %3091 = vmatpush1.bf16.msra.mxu0 %v2634
    %3092 = vmatprep.subr.bf16.mxu0 %v2639
    %3093 = vmatpush1.bf16.msra.mxu0 %v2638
    %3094 = vmatprep.subr.bf16.mxu0 %v2643
    %3095 = vmatpush1.bf16.msra.mxu0 %v2642
    %3096 = vmatprep.subr.bf16.mxu0 %v2647
    %3097 = vmatpush1.bf16.msra.mxu0 %v2646
    %3098 = vmatprep.subr.bf16.mxu0 %v2651
    %3099 = vmatpush1.bf16.msra.mxu0 %v2650
    %3100 = vmatprep.subr.bf16.mxu0 %v2655
    %3101 = vmatpush1.bf16.msra.mxu0 %v2654
    %3102 = vmatprep.subr.bf16.mxu0 %v2659
    %3103 = vmatpush1.bf16.msra.mxu0 %v2658
    %3104 = vmatprep.subr.bf16.mxu0 %v2663
    %3105 = vmatpush1.bf16.msra.mxu0 %v2662
    %3106 = vmatprep.subr.bf16.mxu0 %v2667
    %3107 = vmatpush1.bf16.msra.mxu0 %v2666
    %3108 = vmatprep.mubr.bf16.mxu0 %v1429
    %3109 = vmatmul.mubr.bf16.gmra.mrb[0].mxu0 %v1428
    %v3110 = vpop.f32.mrb[0].mxu0
    %v3111 = vadd.f32 %v3068, %v3110
    %v3112 = vpop.f32.mrb[0].mxu0
    %v3113 = vadd.f32 %v3070, %v3112
    %v3114 = vpop.f32.mrb[0].mxu0
    %v3115 = vadd.f32 %v3072, %v3114
    %v3116 = vpop.f32.mrb[0].mxu0
    %v3117 = vadd.f32 %v3074, %v3116
    %3118 = vdwg.mxu0
    %3119 = vmatprep.subr.bf16.mxu0 %v2671
    %3120 = vmatpush1.bf16.msra.mxu0 %v2670
    %3121 = vmatprep.subr.bf16.mxu0 %v2675
    %3122 = vmatpush1.bf16.msra.mxu0 %v2674
    %3123 = vmatprep.subr.bf16.mxu0 %v2679
    %3124 = vmatpush1.bf16.msra.mxu0 %v2678
    %3125 = vmatprep.subr.bf16.mxu0 %v2683
    %3126 = vmatpush1.bf16.msra.mxu0 %v2682
    %3127 = vmatprep.subr.bf16.mxu0 %v2687
    %3128 = vmatpush1.bf16.msra.mxu0 %v2686
    %3129 = vmatprep.subr.bf16.mxu0 %v2691
    %3130 = vmatpush1.bf16.msra.mxu0 %v2690
    %3131 = vmatprep.subr.bf16.mxu0 %v2695
    %3132 = vmatpush1.bf16.msra.mxu0 %v2694
    %3133 = vmatprep.subr.bf16.mxu0 %v2699
    %3134 = vmatpush1.bf16.msra.mxu0 %v2698
    %3135 = vmatprep.subr.bf16.mxu0 %v2703
    %3136 = vmatpush1.bf16.msra.mxu0 %v2702
    %3137 = vmatprep.subr.bf16.mxu0 %v2707
    %3138 = vmatpush1.bf16.msra.mxu0 %v2706
    %3139 = vmatprep.subr.bf16.mxu0 %v2711
    %3140 = vmatpush1.bf16.msra.mxu0 %v2710
    %3141 = vmatprep.subr.bf16.mxu0 %v2715
    %3142 = vmatpush1.bf16.msra.mxu0 %v2714
    %3143 = vmatprep.subr.bf16.mxu0 %v2719
    %3144 = vmatpush1.bf16.msra.mxu0 %v2718
    %3145 = vmatprep.subr.bf16.mxu0 %v2723
    %3146 = vmatpush1.bf16.msra.mxu0 %v2722
    %3147 = vmatprep.subr.bf16.mxu0 %v2727
    %3148 = vmatpush1.bf16.msra.mxu0 %v2726
    %3149 = vmatprep.subr.bf16.mxu0 %v2731
    %3150 = vmatpush1.bf16.msra.mxu0 %v2730
    %3151 = vmatprep.mubr.bf16.mxu0 %v1431
    %3152 = vmatmul.mubr.bf16.gmra.mrb[0].mxu0 %v1430
    %v3153 = vpop.f32.mrb[0].mxu0
    %v3154 = vadd.f32 %v3111, %v3153
    %v3155 = vpop.f32.mrb[0].mxu0
    %v3156 = vadd.f32 %v3113, %v3155
    %v3157 = vpop.f32.mrb[0].mxu0
    %v3158 = vadd.f32 %v3115, %v3157
    %v3159 = vpop.f32.mrb[0].mxu0
    %v3160 = vadd.f32 %v3117, %v3159
    %3161 = vdwg.mxu0
    %3162 = vmatprep.subr.bf16.mxu0 %v2481
    %3163 = vmatpush1.bf16.msra.mxu0 %v2480
    %3164 = vmatprep.subr.bf16.mxu0 %v2485
    %3165 = vmatpush1.bf16.msra.mxu0 %v2484
    %3166 = vmatprep.subr.bf16.mxu0 %v2489
    %3167 = vmatpush1.bf16.msra.mxu0 %v2488
    %3168 = vmatprep.subr.bf16.mxu0 %v2493
    %3169 = vmatpush1.bf16.msra.mxu0 %v2492
    %3170 = vmatprep.subr.bf16.mxu0 %v2497
    %3171 = vmatpush1.bf16.msra.mxu0 %v2496
    %3172 = vmatprep.subr.bf16.mxu0 %v2501
    %3173 = vmatpush1.bf16.msra.mxu0 %v2500
    %3174 = vmatprep.subr.bf16.mxu0 %v2505
    %3175 = vmatpush1.bf16.msra.mxu0 %v2504
    %3176 = vmatprep.subr.bf16.mxu0 %v2509
    %3177 = vmatpush1.bf16.msra.mxu0 %v2508
    %3178 = vmatprep.subr.bf16.mxu0 %v2513
    %3179 = vmatpush1.bf16.msra.mxu0 %v2512
    %3180 = vmatprep.subr.bf16.mxu0 %v2517
    %3181 = vmatpush1.bf16.msra.mxu0 %v2516
    %3182 = vmatprep.subr.bf16.mxu0 %v2521
    %3183 = vmatpush1.bf16.msra.mxu0 %v2520
    %3184 = vmatprep.subr.bf16.mxu0 %v2525
    %3185 = vmatpush1.bf16.msra.mxu0 %v2524
    %3186 = vmatprep.subr.bf16.mxu0 %v2529
    %3187 = vmatpush1.bf16.msra.mxu0 %v2528
    %3188 = vmatprep.subr.bf16.mxu0 %v2533
    %3189 = vmatpush1.bf16.msra.mxu0 %v2532
    %3190 = vmatprep.subr.bf16.mxu0 %v2537
    %3191 = vmatpush1.bf16.msra.mxu0 %v2536
    %3192 = vmatprep.subr.bf16.mxu0 %v2541
    %3193 = vmatpush1.bf16.msra.mxu0 %v2540
    %3194 = vmatprep.mubr.bf16.mxu0 %v1425
    %3195 = vmatmul.mubr.bf16.gmra.mrb[0].mxu0 %v1424
    %v3196 = vpop.f32.mrb[0].mxu0
    %v3197 = vadd.f32 %v1701, %v3196
    %v3198 = vpop.f32.mrb[0].mxu0
    %v3199 = vadd.f32 %v1705, %v3198
    %v3200 = vpop.f32.mrb[0].mxu0
    %v3201 = vadd.f32 %v1701, %v3200
    %v3202 = vpop.f32.mrb[0].mxu0
    %v3203 = vadd.f32 %v1705, %v3202
    %3204 = vdwg.mxu0
    %3205 = vmatprep.subr.bf16.mxu0 %v2545
    %3206 = vmatpush1.bf16.msra.mxu0 %v2544
    %3207 = vmatprep.subr.bf16.mxu0 %v2549
    %3208 = vmatpush1.bf16.msra.mxu0 %v2548
    %3209 = vmatprep.subr.bf16.mxu0 %v2553
    %3210 = vmatpush1.bf16.msra.mxu0 %v2552
    %3211 = vmatprep.subr.bf16.mxu0 %v2557
    %3212 = vmatpush1.bf16.msra.mxu0 %v2556
    %3213 = vmatprep.subr.bf16.mxu0 %v2561
    %3214 = vmatpush1.bf16.msra.mxu0 %v2560
    %3215 = vmatprep.subr.bf16.mxu0 %v2565
    %3216 = vmatpush1.bf16.msra.mxu0 %v2564
    %3217 = vmatprep.subr.bf16.mxu0 %v2569
    %3218 = vmatpush1.bf16.msra.mxu0 %v2568
    %3219 = vmatprep.subr.bf16.mxu0 %v2573
    %3220 = vmatpush1.bf16.msra.mxu0 %v2572
    %3221 = vmatprep.subr.bf16.mxu0 %v2577
    %3222 = vmatpush1.bf16.msra.mxu0 %v2576
    %3223 = vmatprep.subr.bf16.mxu0 %v2581
    %3224 = vmatpush1.bf16.msra.mxu0 %v2580
    %3225 = vmatprep.subr.bf16.mxu0 %v2585
    %3226 = vmatpush1.bf16.msra.mxu0 %v2584
    %3227 = vmatprep.subr.bf16.mxu0 %v2589
    %3228 = vmatpush1.bf16.msra.mxu0 %v2588
    %3229 = vmatprep.subr.bf16.mxu0 %v2593
    %3230 = vmatpush1.bf16.msra.mxu0 %v2592
    %3231 = vmatprep.subr.bf16.mxu0 %v2597
    %3232 = vmatpush1.bf16.msra.mxu0 %v2596
    %3233 = vmatprep.subr.bf16.mxu0 %v2601
    %3234 = vmatpush1.bf16.msra.mxu0 %v2600
    %3235 = vmatprep.subr.bf16.mxu0 %v2605
    %3236 = vmatpush1.bf16.msra.mxu0 %v2604
    %3237 = vmatprep.mubr.bf16.mxu0 %v1427
    %3238 = vmatmul.mubr.bf16.gmra.mrb[0].mxu0 %v1426
    %v3239 = vpop.f32.mrb[0].mxu0
    %v3240 = vadd.f32 %v3197, %v3239
    %v3241 = vpop.f32.mrb[0].mxu0
    %v3242 = vadd.f32 %v3199, %v3241
    %v3243 = vpop.f32.mrb[0].mxu0
    %v3244 = vadd.f32 %v3201, %v3243
    %v3245 = vpop.f32.mrb[0].mxu0
    %v3246 = vadd.f32 %v3203, %v3245
    %3247 = vdwg.mxu0
    %3248 = vmatprep.subr.bf16.mxu0 %v2609
    %3249 = vmatpush1.bf16.msra.mxu0 %v2608
    %3250 = vmatprep.subr.bf16.mxu0 %v2613
    %3251 = vmatpush1.bf16.msra.mxu0 %v2612
    %3252 = vmatprep.subr.bf16.mxu0 %v2617
    %3253 = vmatpush1.bf16.msra.mxu0 %v2616
    %3254 = vmatprep.subr.bf16.mxu0 %v2621
    %3255 = vmatpush1.bf16.msra.mxu0 %v2620
    %3256 = vmatprep.subr.bf16.mxu0 %v2625
    %3257 = vmatpush1.bf16.msra.mxu0 %v2624
    %3258 = vmatprep.subr.bf16.mxu0 %v2629
    %3259 = vmatpush1.bf16.msra.mxu0 %v2628
    %3260 = vmatprep.subr.bf16.mxu0 %v2633
    %3261 = vmatpush1.bf16.msra.mxu0 %v2632
    %3262 = vmatprep.subr.bf16.mxu0 %v2637
    %3263 = vmatpush1.bf16.msra.mxu0 %v2636
    %3264 = vmatprep.subr.bf16.mxu0 %v2641
    %3265 = vmatpush1.bf16.msra.mxu0 %v2640
    %3266 = vmatprep.subr.bf16.mxu0 %v2645
    %3267 = vmatpush1.bf16.msra.mxu0 %v2644
    %3268 = vmatprep.subr.bf16.mxu0 %v2649
    %3269 = vmatpush1.bf16.msra.mxu0 %v2648
    %3270 = vmatprep.subr.bf16.mxu0 %v2653
    %3271 = vmatpush1.bf16.msra.mxu0 %v2652
    %3272 = vmatprep.subr.bf16.mxu0 %v2657
    %3273 = vmatpush1.bf16.msra.mxu0 %v2656
    %3274 = vmatprep.subr.bf16.mxu0 %v2661
    %3275 = vmatpush1.bf16.msra.mxu0 %v2660
    %3276 = vmatprep.subr.bf16.mxu0 %v2665
    %3277 = vmatpush1.bf16.msra.mxu0 %v2664
    %3278 = vmatprep.subr.bf16.mxu0 %v2669
    %3279 = vmatpush1.bf16.msra.mxu0 %v2668
    %3280 = vmatprep.mubr.bf16.mxu0 %v1429
    %3281 = vmatmul.mubr.bf16.gmra.mrb[0].mxu0 %v1428
    %v3282 = vpop.f32.mrb[0].mxu0
    %v3283 = vadd.f32 %v3240, %v3282
    %v3284 = vpop.f32.mrb[0].mxu0
    %v3285 = vadd.f32 %v3242, %v3284
    %v3286 = vpop.f32.mrb[0].mxu0
    %v3287 = vadd.f32 %v3244, %v3286
    %v3288 = vpop.f32.mrb[0].mxu0
    %v3289 = vadd.f32 %v3246, %v3288
    %3290 = vdwg.mxu0
    %3291 = vmatprep.subr.bf16.mxu0 %v2673
    %3292 = vmatpush1.bf16.msra.mxu0 %v2672
    %3293 = vmatprep.subr.bf16.mxu0 %v2677
    %3294 = vmatpush1.bf16.msra.mxu0 %v2676
    %3295 = vmatprep.subr.bf16.mxu0 %v2681
    %3296 = vmatpush1.bf16.msra.mxu0 %v2680
    %3297 = vmatprep.subr.bf16.mxu0 %v2685
    %3298 = vmatpush1.bf16.msra.mxu0 %v2684
    %3299 = vmatprep.subr.bf16.mxu0 %v2689
    %3300 = vmatpush1.bf16.msra.mxu0 %v2688
    %3301 = vmatprep.subr.bf16.mxu0 %v2693
    %3302 = vmatpush1.bf16.msra.mxu0 %v2692
    %3303 = vmatprep.subr.bf16.mxu0 %v2697
    %3304 = vmatpush1.bf16.msra.mxu0 %v2696
    %3305 = vmatprep.subr.bf16.mxu0 %v2701
    %3306 = vmatpush1.bf16.msra.mxu0 %v2700
    %3307 = vmatprep.subr.bf16.mxu0 %v2705
    %3308 = vmatpush1.bf16.msra.mxu0 %v2704
    %3309 = vmatprep.subr.bf16.mxu0 %v2709
    %3310 = vmatpush1.bf16.msra.mxu0 %v2708
    %3311 = vmatprep.subr.bf16.mxu0 %v2713
    %3312 = vmatpush1.bf16.msra.mxu0 %v2712
    %3313 = vmatprep.subr.bf16.mxu0 %v2717
    %3314 = vmatpush1.bf16.msra.mxu0 %v2716
    %3315 = vmatprep.subr.bf16.mxu0 %v2721
    %3316 = vmatpush1.bf16.msra.mxu0 %v2720
    %3317 = vmatprep.subr.bf16.mxu0 %v2725
    %3318 = vmatpush1.bf16.msra.mxu0 %v2724
    %3319 = vmatprep.subr.bf16.mxu0 %v2729
    %3320 = vmatpush1.bf16.msra.mxu0 %v2728
    %3321 = vmatprep.subr.bf16.mxu0 %v2733
    %3322 = vmatpush1.bf16.msra.mxu0 %v2732
    %3323 = vmatprep.mubr.bf16.mxu0 %v1431
    %3324 = vmatmul.mubr.bf16.gmra.mrb[0].mxu0 %v1430
    %v3325 = vpop.f32.mrb[0].mxu0
    %v3326 = vadd.f32 %v3283, %v3325
    %v3327 = vpop.f32.mrb[0].mxu0
    %v3328 = vadd.f32 %v3285, %v3327
    %v3329 = vpop.f32.mrb[0].mxu0
    %v3330 = vadd.f32 %v3287, %v3329
    %v3331 = vpop.f32.mrb[0].mxu0
    %v3332 = vadd.f32 %v3289, %v3331
    %3333 = vdwg.mxu0
    %v3334 = vmax.f32 %v3154, 0.0
    %v3335 = vmax.f32 %v3156, 0.0
    %v3336 = vmax.f32 %v3326, 0.0
    %v3337 = vmax.f32 %v3328, 0.0
    %v3338 = vmax.f32 %v3158, 0.0
    %v3339 = vmax.f32 %v3160, 0.0
    %v3340 = vmax.f32 %v3330, 0.0
    %v3341 = vmax.f32 %v3332, 0.0
    %v3342 = vpack.c.bf16 %v3338, %v3334
    %v3343 = vpack.c.bf16 %v3339, %v3335
    %v3344 = vpack.c.bf16 %v3340, %v3336
    %v3345 = vpack.c.bf16 %v3341, %v3337
    %v3346 = vld [vmem:[#allocation10] sm:$0xf]
    %v3347 = vld [vmem:[#allocation10 + $0x4] sm:$0xf]
    %v3348 = vld [vmem:[#allocation10 + $0x8] sm:$0xf]
    %v3349 = vld [vmem:[#allocation10 + $0xc] sm:$0xf]
    %v3350 = vld [vmem:[#allocation10 + $0x10] sm:$0xf]
    %v3351 = vld [vmem:[#allocation10 + $0x14] sm:$0xf]
    %v3352 = vld [vmem:[#allocation10 + $0x18] sm:$0xf]
    %v3353 = vld [vmem:[#allocation10 + $0x1c] sm:$0xf]
    %v3354 = vld [vmem:[#allocation10 + $0x20] sm:$0xf]
    %v3355 = vld [vmem:[#allocation10 + $0x24] sm:$0xf]
    %v3356 = vld [vmem:[#allocation10 + $0x28] sm:$0xf]
    %v3357 = vld [vmem:[#allocation10 + $0x2c] sm:$0xf]
    %v3358 = vld [vmem:[#allocation10 + $0x30] sm:$0xf]
    %v3359 = vld [vmem:[#allocation10 + $0x34] sm:$0xf]
    %v3360 = vld [vmem:[#allocation10 + $0x38] sm:$0xf]
    %v3361 = vld [vmem:[#allocation10 + $0x3c] sm:$0xf]
    %v3362 = vld [vmem:[#allocation10 + $0x40] sm:$0xf]
    %v3363 = vld [vmem:[#allocation10 + $0x44] sm:$0xf]
    %v3364 = vld [vmem:[#allocation10 + $0x48] sm:$0xf]
    %v3365 = vld [vmem:[#allocation10 + $0x4c] sm:$0xf]
    %v3366 = vld [vmem:[#allocation10 + $0x50] sm:$0xf]
    %v3367 = vld [vmem:[#allocation10 + $0x54] sm:$0xf]
    %v3368 = vld [vmem:[#allocation10 + $0x58] sm:$0xf]
    %v3369 = vld [vmem:[#allocation10 + $0x5c] sm:$0xf]
    %v3370 = vld [vmem:[#allocation10 + $0x60] sm:$0xf]
    %v3371 = vld [vmem:[#allocation10 + $0x64] sm:$0xf]
    %v3372 = vld [vmem:[#allocation10 + $0x68] sm:$0xf]
    %v3373 = vld [vmem:[#allocation10 + $0x6c] sm:$0xf]
    %v3374 = vld [vmem:[#allocation10 + $0x70] sm:$0xf]
    %v3375 = vld [vmem:[#allocation10 + $0x74] sm:$0xf]
    %v3376 = vld [vmem:[#allocation10 + $0x78] sm:$0xf]
    %v3377 = vld [vmem:[#allocation10 + $0x7c] sm:$0xf]
    %v3378 = vld [vmem:[#allocation10 + $0x80] sm:$0xf]
    %v3379 = vld [vmem:[#allocation10 + $0x84] sm:$0xf]
    %v3380 = vld [vmem:[#allocation10 + $0x88] sm:$0xf]
    %v3381 = vld [vmem:[#allocation10 + $0x8c] sm:$0xf]
    %v3382 = vld [vmem:[#allocation10 + $0x90] sm:$0xf]
    %v3383 = vld [vmem:[#allocation10 + $0x94] sm:$0xf]
    %v3384 = vld [vmem:[#allocation10 + $0x98] sm:$0xf]
    %v3385 = vld [vmem:[#allocation10 + $0x9c] sm:$0xf]
    %v3386 = vld [vmem:[#allocation10 + $0xa0] sm:$0xf]
    %v3387 = vld [vmem:[#allocation10 + $0xa4] sm:$0xf]
    %v3388 = vld [vmem:[#allocation10 + $0xa8] sm:$0xf]
    %v3389 = vld [vmem:[#allocation10 + $0xac] sm:$0xf]
    %v3390 = vld [vmem:[#allocation10 + $0xb0] sm:$0xf]
    %v3391 = vld [vmem:[#allocation10 + $0xb4] sm:$0xf]
    %v3392 = vld [vmem:[#allocation10 + $0xb8] sm:$0xf]
    %v3393 = vld [vmem:[#allocation10 + $0xbc] sm:$0xf]
    %v3394 = vld [vmem:[#allocation10 + $0xc0] sm:$0xf]
    %v3395 = vld [vmem:[#allocation10 + $0xc4] sm:$0xf]
    %v3396 = vld [vmem:[#allocation10 + $0xc8] sm:$0xf]
    %v3397 = vld [vmem:[#allocation10 + $0xcc] sm:$0xf]
    %v3398 = vld [vmem:[#allocation10 + $0xd0] sm:$0xf]
    %v3399 = vld [vmem:[#allocation10 + $0xd4] sm:$0xf]
    %v3400 = vld [vmem:[#allocation10 + $0xd8] sm:$0xf]
    %v3401 = vld [vmem:[#allocation10 + $0xdc] sm:$0xf]
    %v3402 = vld [vmem:[#allocation10 + $0xe0] sm:$0xf]
    %v3403 = vld [vmem:[#allocation10 + $0xe4] sm:$0xf]
    %v3404 = vld [vmem:[#allocation10 + $0xe8] sm:$0xf]
    %v3405 = vld [vmem:[#allocation10 + $0xec] sm:$0xf]
    %v3406 = vld [vmem:[#allocation10 + $0xf0] sm:$0xf]
    %v3407 = vld [vmem:[#allocation10 + $0xf4] sm:$0xf]
    %v3408 = vld [vmem:[#allocation10 + $0xf8] sm:$0xf]
    %v3409 = vld [vmem:[#allocation10 + $0xfc] sm:$0xf]
    %v3410 = vld [vmem:[%s8] sm:$0x1]
    %v3412 = vlaneseq
    %v3413 = vshrl.u32 %v3412, 7
    %v3414 = vsub.s32 0, %v3413
    %v3415 = vrot.slane %v3410, %v3414
    %v3481 = vunpack.c.l.b16 %v3346
    %v3482 = vunpack.c.l.b16 %v3347
    %v3483 = vunpack.c.l.b16 %v3348
    %v3484 = vunpack.c.l.b16 %v3349
    %v3485 = vunpack.c.l.b16 %v3350
    %v3486 = vunpack.c.l.b16 %v3351
    %v3487 = vunpack.c.l.b16 %v3352
    %v3488 = vunpack.c.l.b16 %v3353
    %v3489 = vunpack.c.l.b16 %v3354
    %v3490 = vunpack.c.l.b16 %v3355
    %v3491 = vunpack.c.l.b16 %v3356
    %v3492 = vunpack.c.l.b16 %v3357
    %v3493 = vunpack.c.l.b16 %v3358
    %v3494 = vunpack.c.l.b16 %v3359
    %v3495 = vunpack.c.l.b16 %v3360
    %v3496 = vunpack.c.l.b16 %v3361
    %v3497 = vunpack.c.l.b16 %v3362
    %v3498 = vunpack.c.l.b16 %v3363
    %v3499 = vunpack.c.l.b16 %v3364
    %v3500 = vunpack.c.l.b16 %v3365
    %v3501 = vunpack.c.l.b16 %v3366
    %v3502 = vunpack.c.l.b16 %v3367
    %v3503 = vunpack.c.l.b16 %v3368
    %v3504 = vunpack.c.l.b16 %v3369
    %v3505 = vunpack.c.l.b16 %v3370
    %v3506 = vunpack.c.l.b16 %v3371
    %v3507 = vunpack.c.l.b16 %v3372
    %v3508 = vunpack.c.l.b16 %v3373
    %v3509 = vunpack.c.l.b16 %v3374
    %v3510 = vunpack.c.l.b16 %v3375
    %v3511 = vunpack.c.l.b16 %v3376
    %v3512 = vunpack.c.l.b16 %v3377
    %v3513 = vunpack.c.l.b16 %v3378
    %v3514 = vunpack.c.l.b16 %v3379
    %v3515 = vunpack.c.l.b16 %v3380
    %v3516 = vunpack.c.l.b16 %v3381
    %v3517 = vunpack.c.l.b16 %v3382
    %v3518 = vunpack.c.l.b16 %v3383
    %v3519 = vunpack.c.l.b16 %v3384
    %v3520 = vunpack.c.l.b16 %v3385
    %v3521 = vunpack.c.l.b16 %v3386
    %v3522 = vunpack.c.l.b16 %v3387
    %v3523 = vunpack.c.l.b16 %v3388
    %v3524 = vunpack.c.l.b16 %v3389
    %v3525 = vunpack.c.l.b16 %v3390
    %v3526 = vunpack.c.l.b16 %v3391
    %v3527 = vunpack.c.l.b16 %v3392
    %v3528 = vunpack.c.l.b16 %v3393
    %v3529 = vunpack.c.l.b16 %v3394
    %v3530 = vunpack.c.l.b16 %v3395
    %v3531 = vunpack.c.l.b16 %v3396
    %v3532 = vunpack.c.l.b16 %v3397
    %v3533 = vunpack.c.l.b16 %v3398
    %v3534 = vunpack.c.l.b16 %v3399
    %v3535 = vunpack.c.l.b16 %v3400
    %v3536 = vunpack.c.l.b16 %v3401
    %v3537 = vunpack.c.l.b16 %v3402
    %v3538 = vunpack.c.l.b16 %v3403
    %v3539 = vunpack.c.l.b16 %v3404
    %v3540 = vunpack.c.l.b16 %v3405
    %v3541 = vunpack.c.l.b16 %v3406
    %v3542 = vunpack.c.l.b16 %v3407
    %v3543 = vunpack.c.l.b16 %v3408
    %v3544 = vunpack.c.l.b16 %v3409
    %v3545 = vpack.c.b16 %v3482, %v3481
    %v3546 = vpack.c.b16 %v3484, %v3483
    %v3547 = vpack.c.b16 %v3486, %v3485
    %v3548 = vpack.c.b16 %v3488, %v3487
    %v3549 = vpack.c.b16 %v3490, %v3489
    %v3550 = vpack.c.b16 %v3492, %v3491
    %v3551 = vpack.c.b16 %v3494, %v3493
    %v3552 = vpack.c.b16 %v3496, %v3495
    %v3553 = vpack.c.b16 %v3498, %v3497
    %v3554 = vpack.c.b16 %v3500, %v3499
    %v3555 = vpack.c.b16 %v3502, %v3501
    %v3556 = vpack.c.b16 %v3504, %v3503
    %v3557 = vpack.c.b16 %v3506, %v3505
    %v3558 = vpack.c.b16 %v3508, %v3507
    %v3559 = vpack.c.b16 %v3510, %v3509
    %v3560 = vpack.c.b16 %v3512, %v3511
    %v3561 = vpack.c.b16 %v3514, %v3513
    %v3562 = vpack.c.b16 %v3516, %v3515
    %v3563 = vpack.c.b16 %v3518, %v3517
    %v3564 = vpack.c.b16 %v3520, %v3519
    %v3565 = vpack.c.b16 %v3522, %v3521
    %v3566 = vpack.c.b16 %v3524, %v3523
    %v3567 = vpack.c.b16 %v3526, %v3525
    %v3568 = vpack.c.b16 %v3528, %v3527
    %v3569 = vpack.c.b16 %v3530, %v3529
    %v3570 = vpack.c.b16 %v3532, %v3531
    %v3571 = vpack.c.b16 %v3534, %v3533
    %v3572 = vpack.c.b16 %v3536, %v3535
    %v3573 = vpack.c.b16 %v3538, %v3537
    %v3574 = vpack.c.b16 %v3540, %v3539
    %v3575 = vpack.c.b16 %v3542, %v3541
    %v3576 = vpack.c.b16 %v3544, %v3543
    %3609 = vmatprep.subr.bf16.mxu0 0
    %3610 = vmatpush1.bf16.msra.mxu0 %v3545
    %3611 = vmatprep.subr.bf16.mxu0 0
    %3612 = vmatpush1.bf16.msra.mxu0 %v3546
    %3613 = vmatprep.subr.bf16.mxu0 0
    %3614 = vmatpush1.bf16.msra.mxu0 %v3547
    %3615 = vmatprep.subr.bf16.mxu0 0
    %3616 = vmatpush1.bf16.msra.mxu0 %v3548
    %3617 = vmatprep.subr.bf16.mxu0 0
    %3618 = vmatpush1.bf16.msra.mxu0 %v3549
    %3619 = vmatprep.subr.bf16.mxu0 0
    %3620 = vmatpush1.bf16.msra.mxu0 %v3550
    %3621 = vmatprep.subr.bf16.mxu0 0
    %3622 = vmatpush1.bf16.msra.mxu0 %v3551
    %3623 = vmatprep.subr.bf16.mxu0 0
    %3624 = vmatpush1.bf16.msra.mxu0 %v3552
    %3625 = vmatprep.subr.bf16.mxu0 0
    %3626 = vmatpush1.bf16.msra.mxu0 %v3553
    %3627 = vmatprep.subr.bf16.mxu0 0
    %3628 = vmatpush1.bf16.msra.mxu0 %v3554
    %3629 = vmatprep.subr.bf16.mxu0 0
    %3630 = vmatpush1.bf16.msra.mxu0 %v3555
    %3631 = vmatprep.subr.bf16.mxu0 0
    %3632 = vmatpush1.bf16.msra.mxu0 %v3556
    %3633 = vmatprep.subr.bf16.mxu0 0
    %3634 = vmatpush1.bf16.msra.mxu0 %v3557
    %3635 = vmatprep.subr.bf16.mxu0 0
    %3636 = vmatpush1.bf16.msra.mxu0 %v3558
    %3637 = vmatprep.subr.bf16.mxu0 0
    %3638 = vmatpush1.bf16.msra.mxu0 %v3559
    %3639 = vmatprep.subr.bf16.mxu0 0
    %3640 = vmatpush1.bf16.msra.mxu0 %v3560
    %3641 = vmatprep.mubr.bf16.mxu0 %v3343
    %3642 = vmatmul.mubr.bf16.gmra.mrb[0].mxu0 %v3342
    %v3643 = vpop.f32.mrb[0].mxu0
    %v3644 = vadd.f32 %v3415, %v3643
    %v3645 = vpop.f32.mrb[0].mxu0
    %v3646 = vpop.f32.mrb[0].mxu0
    %v3647 = vadd.f32 %v3415, %v3646
    %v3648 = vpop.f32.mrb[0].mxu0
    %3649 = vdwg.mxu0
    %3650 = vmatprep.subr.bf16.mxu0 0
    %3651 = vmatpush1.bf16.msra.mxu0 %v3561
    %3652 = vmatprep.subr.bf16.mxu0 0
    %3653 = vmatpush1.bf16.msra.mxu0 %v3562
    %3654 = vmatprep.subr.bf16.mxu0 0
    %3655 = vmatpush1.bf16.msra.mxu0 %v3563
    %3656 = vmatprep.subr.bf16.mxu0 0
    %3657 = vmatpush1.bf16.msra.mxu0 %v3564
    %3658 = vmatprep.subr.bf16.mxu0 0
    %3659 = vmatpush1.bf16.msra.mxu0 %v3565
    %3660 = vmatprep.subr.bf16.mxu0 0
    %3661 = vmatpush1.bf16.msra.mxu0 %v3566
    %3662 = vmatprep.subr.bf16.mxu0 0
    %3663 = vmatpush1.bf16.msra.mxu0 %v3567
    %3664 = vmatprep.subr.bf16.mxu0 0
    %3665 = vmatpush1.bf16.msra.mxu0 %v3568
    %3666 = vmatprep.subr.bf16.mxu0 0
    %3667 = vmatpush1.bf16.msra.mxu0 %v3569
    %3668 = vmatprep.subr.bf16.mxu0 0
    %3669 = vmatpush1.bf16.msra.mxu0 %v3570
    %3670 = vmatprep.subr.bf16.mxu0 0
    %3671 = vmatpush1.bf16.msra.mxu0 %v3571
    %3672 = vmatprep.subr.bf16.mxu0 0
    %3673 = vmatpush1.bf16.msra.mxu0 %v3572
    %3674 = vmatprep.subr.bf16.mxu0 0
    %3675 = vmatpush1.bf16.msra.mxu0 %v3573
    %3676 = vmatprep.subr.bf16.mxu0 0
    %3677 = vmatpush1.bf16.msra.mxu0 %v3574
    %3678 = vmatprep.subr.bf16.mxu0 0
    %3679 = vmatpush1.bf16.msra.mxu0 %v3575
    %3680 = vmatprep.subr.bf16.mxu0 0
    %3681 = vmatpush1.bf16.msra.mxu0 %v3576
    %3682 = vmatprep.mubr.bf16.mxu0 %v3345
    %3683 = vmatmul.mubr.bf16.gmra.mrb[0].mxu0 %v3344
    %v3684 = vpop.f32.mrb[0].mxu0
    %v3685 = vadd.f32 %v3644, %v3684
    %v3686 = vpop.f32.mrb[0].mxu0
    %v3687 = vpop.f32.mrb[0].mxu0
    %v3688 = vadd.f32 %v3647, %v3687
    %v3689 = vpop.f32.mrb[0].mxu0
    %3690 = vdwg.mxu0
    %3691 = vst [vmem:[#allocation11] sm:$0xff] %v3685
    %3692 = vst [vmem:[#allocation11 + $0x8] sm:$0xff] %v3688
    // Predicated region
    $region58: #{tpu_custom_call.1} parent=1 // pred_check
      _
    $region59: #{tpu_custom_call.1} parent=1 // pred_check_branch
      %3694 = sbr.rel (0) target = $region61
    $region60: #{tpu_custom_call.1} parent=1 // pred_region
      %s3696 = ssub.s32 256, 256
      %3697 = vsyncadd [#allocation4], %s3696
      %s3698 = sshll.u32 [#allocation11], 4
      %s3699 = int_to_ptr.vmem [resolvable:$true] %s3698
      %3704 = dma.vmem_to_hbm [thread:$0]  %s3699, 256, %s9, [#allocation4], 128, 128, 8
    $region61: #{tpu_custom_call.1} parent=1 // pred_fallthru
      _
    // Predicated region
    $region62: #{tpu_custom_call.1} parent=1 // pred_check
      _
    $region63: #{tpu_custom_call.1} parent=1 // pred_check_branch
      %3706 = sbr.rel (0) target = $region65
    $region64: #{tpu_custom_call.1} parent=1 // pred_region
      %3707 = dma.done [#allocation4], 256
    $region65: #{tpu_custom_call.1} parent=1 // pred_fallthru
      _
    %3708 = vsyncpa [#allocation3], 1
    %3709 = vsyncpa [#allocation6], 1
    %3710 = vsyncpa [#allocation9], 1
    %3711 = vsyncpa [#allocation4], 1

</llo_original>
